<compile_context>
chip_gen: v7x
topology: tpu7x:2x2x1
jax: 0.10.0
libtpu: 0.0.40
codegen_flags: <defaults>
</compile_context>

<pallas_src>
import functools

import jax
import jax.numpy as jnp
from jax.experimental import pallas as pl
from jax.experimental.pallas import tpu as pltpu


def _fused_kernel(x1_ref, x2_ref, w_ref, gb_ref, o_ref, *, inv_p):
    # x1_ref, x2_ref: (Cin, P) f32
    # w_ref:          (Cout, Cin) bf16  (pre-cast in the wrapper)
    # gb_ref:         (Cout, 2) f32, col 0 = gamma, col 1 = beta
    # o_ref:          (Cout, P) f32
    eps = 1e-5

    # add + relu (VPU, f32)
    y = jnp.maximum(x1_ref[...] + x2_ref[...], 0.0)

    # 1x1 conv == matmul on the MXU; bf16 operands, f32 accumulation.
    z = jnp.dot(
        w_ref[...],
        y.astype(jnp.bfloat16),
        preferred_element_type=jnp.float32,
    )  # (Cout, P) f32

    # BatchNorm2d (training mode): batch stats per output channel == per row.
    # Two-pass variance (z already resident in VMEM -> essentially free) to
    # avoid cancellation in E[z^2] - mean^2.
    mean = jnp.sum(z, axis=-1, keepdims=True) * inv_p        # (Cout, 1)
    centered = z - mean                                      # (Cout, P)
    var = jnp.sum(centered * centered, axis=-1, keepdims=True) * inv_p
    gamma = gb_ref[:, 0:1]                                   # (Cout, 1)
    beta = gb_ref[:, 1:2]                                    # (Cout, 1)
    a = gamma * jax.lax.rsqrt(var + eps)                     # (Cout, 1)

    # (z - mean) * a + beta  ==  gamma * (z - mean) / sqrt(var + eps) + beta
    o_ref[...] = centered * a + beta


@jax.jit
def _fused_impl(x179, x187, conv_weight, bn_gamma, bn_beta):
    N, C_in, H, W = x179.shape
    C_out = conv_weight.shape[0]
    P = N * H * W

    # NCHW -> (C, P).  For N == 1 this is a pure (free) reshape; for N > 1 we
    # fall back to a channel-major transpose (not the benchmark case).
    def to_cp(x):
        if N == 1:
            return x.reshape(C_in, H * W)
        return jnp.transpose(x, (1, 0, 2, 3)).reshape(C_in, P)

    x1 = to_cp(x179)
    x2 = to_cp(x187)

    # (Cout, Cin, 1, 1) -> (Cout, Cin) bf16: cast ONCE here so the kernel's
    # weight DMA is half-sized and the MXU gets bf16 operands directly.
    w = conv_weight.reshape(C_out, C_in).astype(jnp.bfloat16)

    # Pack gamma/beta into one (Cout, 2) f32 tile (one DMA, less lane padding).
    gb = jnp.stack(
        [bn_gamma.astype(jnp.float32), bn_beta.astype(jnp.float32)], axis=-1
    )  # (Cout, 2)

    kernel = functools.partial(_fused_kernel, inv_p=1.0 / P)
    cost = pl.CostEstimate(
        flops=2 * P * C_in * C_out,
        transcendentals=C_out,
        bytes_accessed=(
            4 * (2 * C_in * P)        # x1, x2 reads (f32)
            + 2 * (C_out * C_in)      # weight read (bf16)
            + 4 * (2 * C_out)         # gamma/beta read (f32)
            + 4 * (C_out * P)         # output write (f32)
        ),
    )
    out_shape = jax.ShapeDtypeStruct((C_out, P), jnp.float32)

    # Single block, no grid: whole problem (< 2 MiB of VMEM-resident tiles)
    # fits comfortably in VMEM on every chip, and this kernel is HBM-bound so
    # splitting only adds per-step overhead / duplicated DMA.
    vmem = pl.BlockSpec(memory_space=pltpu.MemorySpace.VMEM)
    out_flat = pl.pallas_call(
        kernel,
        out_shape=out_shape,
        in_specs=[vmem, vmem, vmem, vmem],
        out_specs=vmem,
        cost_estimate=cost,
    )(x1, x2, w, gb)

    # (Cout, P) -> NCHW.  Free reshape for N == 1.
    if N == 1:
        return out_flat.reshape(1, C_out, H, W)
    return jnp.transpose(out_flat.reshape(C_out, N, H, W), (1, 0, 2, 3))


def fused_add_relu_conv1x1_bn(x179, x187, conv_weight, bn_gamma, bn_beta):
    """x179, x187: NCHW f32.  conv_weight: (Cout, Cin, 1, 1).  Returns NCHW f32."""
    return _fused_impl(x179, x187, conv_weight, bn_gamma, bn_beta)


def _reference(x179, x187, conv_weight, bn_gamma, bn_beta,
               matmul_dtype=jnp.float32):
    """Pure-JAX reference (same math as the PyTorch module in training mode)."""
    y = jnp.maximum(x179 + x187, 0.0)                           # NCHW f32
    C_out, C_in = conv_weight.shape[:2]
    w = conv_weight.reshape(C_out, C_in)
    z = jnp.einsum("nchw,oc->nohw",
                   y.astype(matmul_dtype), w.astype(matmul_dtype),
                   preferred_element_type=jnp.float32)
    mean = jnp.mean(z, axis=(0, 2, 3), keepdims=True)
    var = jnp.mean((z - mean) ** 2, axis=(0, 2, 3), keepdims=True)
    zhat = (z - mean) * jax.lax.rsqrt(var + 1e-5)
    return zhat * bn_gamma.reshape(1, -1, 1, 1) + bn_beta.reshape(1, -1, 1, 1)


if __name__ == "__main__":
    key = jax.random.PRNGKey(0)
    k1, k2, k3, k4, k5 = jax.random.split(key, 5)

    N, C, H, W = 1, 720, 14, 14   # shapes implied by the module

    x179 = jax.random.normal(k1, (N, C, H, W), dtype=jnp.float32)
    x187 = jax.random.normal(k2, (N, C, H, W), dtype=jnp.float32)

    # Deterministic synthetic parameters (Conv2d(720,720,1,bias=False), BN(720))
    conv_weight = jax.random.normal(k3, (C, C, 1, 1), dtype=jnp.float32) * 0.05
    bn_gamma = 1.0 + 0.1 * jax.random.normal(k4, (C,), dtype=jnp.float32)
    bn_beta = 0.1 * jax.random.normal(k5, (C,), dtype=jnp.float32)

    out = fused_add_relu_conv1x1_bn(x179, x187, conv_weight, bn_gamma, bn_beta)
    out = jax.block_until_ready(out)
    assert out.shape == (N, C, H, W)

    # Tight check against a reference using the same bf16-matmul / f32-accum
    # precision as the kernel.
    ref_bf16 = _reference(x179, x187, conv_weight, bn_gamma, bn_beta,
                          matmul_dtype=jnp.bfloat16)
    assert jnp.allclose(out, ref_bf16, atol=5e-3, rtol=5e-3), \
        "mismatch vs bf16-precision reference"

    # Looser check against the exact f32 module math (bf16 MXU drift budget).
    ref_f32 = _reference(x179, x187, conv_weight, bn_gamma, bn_beta)
    assert jnp.allclose(out, ref_f32, atol=5e-2, rtol=5e-2), \
        "mismatch vs f32 reference"

    print("KERNEL_OK")
</pallas_src>

<mosaic_0001>
module attributes {stable_mosaic.version = 11 : i64} {
  func.func @_fused_kernel(%arg0: memref<720x196xf32, #tpu.memory_space<vmem>>, %arg1: memref<720x196xf32, #tpu.memory_space<vmem>>, %arg2: memref<720x720xbf16, #tpu.memory_space<vmem>>, %arg3: memref<720x2xf32, #tpu.memory_space<vmem>>, %arg4: memref<720x196xf32, #tpu.memory_space<vmem>>) attributes {dimension_semantics = [], scalar_prefetch = 0 : i64, scratch_operands = 0 : i64, tpu.core_type = #tpu.core_type<tc>} {
    %c0 = arith.constant 0 : index
    %c0_0 = arith.constant 0 : index
    %0 = vector.load %arg0[%c0, %c0_0] : memref<720x196xf32, #tpu.memory_space<vmem>>, vector<720x196xf32>
    %c0_1 = arith.constant 0 : index
    %c0_2 = arith.constant 0 : index
    %1 = vector.load %arg1[%c0_1, %c0_2] : memref<720x196xf32, #tpu.memory_space<vmem>>, vector<720x196xf32>
    %2 = arith.addf %0, %1 : vector<720x196xf32>
    %cst = arith.constant 0.000000e+00 : f32
    %3 = vector.broadcast %cst : f32 to vector<720x196xf32>
    %4 = arith.maximumf %2, %3 : vector<720x196xf32>
    %c0_3 = arith.constant 0 : index
    %c0_4 = arith.constant 0 : index
    %5 = vector.load %arg2[%c0_3, %c0_4] : memref<720x720xbf16, #tpu.memory_space<vmem>>, vector<720x720xbf16>
    %6 = arith.truncf %4 : vector<720x196xf32> to vector<720x196xbf16>
    %cst_5 = arith.constant dense<0.000000e+00> : vector<720x196xf32>
    %7 = tpu.matmul %5, %6, %cst_5 {dimension_numbers = #tpu.dot_dimension_numbers<[1], [0], [0], [1], [0, 0, 1, 1], [], []>} : vector<720x720xbf16>, vector<720x196xbf16>, vector<720x196xf32> -> vector<720x196xf32>
    %cst_6 = arith.constant dense<0.000000e+00> : vector<720xf32>
    %8 = vector.multi_reduction <add>, %7, %cst_6 [1] : vector<720x196xf32> to vector<720xf32>
    %9 = vector.shape_cast %8 : vector<720xf32> to vector<720x1xf32>
    %cst_7 = arith.constant 0.00510204071 : f32
    %10 = vector.broadcast %cst_7 : f32 to vector<720x1xf32>
    %11 = arith.mulf %9, %10 : vector<720x1xf32>
    %12 = vector.broadcast %11 : vector<720x1xf32> to vector<720x196xf32>
    %13 = arith.subf %7, %12 : vector<720x196xf32>
    %14 = arith.mulf %13, %13 : vector<720x196xf32>
    %cst_8 = arith.constant dense<0.000000e+00> : vector<720xf32>
    %15 = vector.multi_reduction <add>, %14, %cst_8 [1] : vector<720x196xf32> to vector<720xf32>
    %16 = vector.shape_cast %15 : vector<720xf32> to vector<720x1xf32>
    %cst_9 = arith.constant 0.00510204071 : f32
    %17 = vector.broadcast %cst_9 : f32 to vector<720x1xf32>
    %18 = arith.mulf %16, %17 : vector<720x1xf32>
    %c0_10 = arith.constant 0 : index
    %c0_11 = arith.constant 0 : index
    %19 = vector.load %arg3[%c0_10, %c0_11] : memref<720x2xf32, #tpu.memory_space<vmem>>, vector<720x1xf32>
    %c0_12 = arith.constant 0 : index
    %c1 = arith.constant 1 : index
    %20 = vector.load %arg3[%c0_12, %c1] : memref<720x2xf32, #tpu.memory_space<vmem>>, vector<720x1xf32>
    %cst_13 = arith.constant 9.99999974E-6 : f32
    %21 = vector.broadcast %cst_13 : f32 to vector<720x1xf32>
    %22 = arith.addf %18, %21 : vector<720x1xf32>
    %23 = math.rsqrt %22 : vector<720x1xf32>
    %24 = arith.mulf %19, %23 : vector<720x1xf32>
    %25 = vector.broadcast %24 : vector<720x1xf32> to vector<720x196xf32>
    %26 = arith.mulf %13, %25 : vector<720x196xf32>
    %27 = vector.broadcast %20 : vector<720x1xf32> to vector<720x196xf32>
    %28 = arith.addf %26, %27 : vector<720x196xf32>
    %c0_14 = arith.constant 0 : index
    %c0_15 = arith.constant 0 : index
    %29 = vector.load %arg4[%c0_14, %c0_15] : memref<720x196xf32, #tpu.memory_space<vmem>>, vector<720x196xf32>
    tpu.vector_store %arg4[%c0_14, %c0_15], %28 {strides = array<i32>} : memref<720x196xf32, #tpu.memory_space<vmem>>, vector<720x196xf32>,
    return
  }
}

</mosaic_0001>

<llo_original>
// kernel: _fused_impl.1
$region0: #{_fused_impl.1}
  #allocation0 [shape = 'u32[]', space=smem, size = 0x4, offset = 0x4, fixed_abs, tag = 'smem constant byte address 0x4 - core index']
  #allocation1 [shape = 'u32[144,128]{1,0:T(1,128)}', space=vmem, size = 0x12000, scoped, tag = 'internal scratch']
  %s0 = inlined_call_operand.vmem [shape: f32[720,196], index: 0, kind: input, shape index: {}]
  %s1 = inlined_call_operand.vmem [shape: f32[720,196], index: 1, kind: input, shape index: {}]
  %s2 = inlined_call_operand.vmem [shape: bf16[720,720], index: 2, kind: input, shape index: {}]
  %s3 = inlined_call_operand.vmem [shape: f32[720,2], index: 3, kind: input, shape index: {}]
  %s4 = inlined_call_operand.vmem [shape: f32[720,196], index: 4, kind: output, shape index: {}]
  %s5 = sld [smem:[#allocation0]]
  $region26: #{_fused_impl.1} parent=0
    _
  %s7 = ssub.s32 1, %s5
  %s8 = scalar_select 0, %s7, %s5
  // Predicated region
  $region2: #{_fused_impl.1} parent=0 // pred_check
    _
  $region3: #{_fused_impl.1} parent=0 // pred_check_branch
    %10 = sbr.rel (0) target = $region5
  $region4: #{_fused_impl.1} parent=0 // pred_region
    _
  $region5: #{_fused_impl.1} parent=0 // pred_fallthru
    _
  // Predicated region
  $region6: #{_fused_impl.1} parent=0 // pred_check
    _
  $region7: #{_fused_impl.1} parent=0 // pred_check_branch
    %12 = sbr.rel (0) target = $region9
  $region8: #{_fused_impl.1} parent=0 // pred_region
    _
  $region9: #{_fused_impl.1} parent=0 // pred_fallthru
    _
  // Predicated region
  $region10: #{_fused_impl.1} parent=0 // pred_check
    _
  $region11: #{_fused_impl.1} parent=0 // pred_check_branch
    %14 = sbr.rel (0) target = $region13
  $region12: #{_fused_impl.1} parent=0 // pred_region
    _
  $region13: #{_fused_impl.1} parent=0 // pred_fallthru
    _
  // Predicated region
  $region14: #{_fused_impl.1} parent=0 // pred_check
    _
  $region15: #{_fused_impl.1} parent=0 // pred_check_branch
    %16 = sbr.rel (0) target = $region17
  $region16: #{_fused_impl.1} parent=0 // pred_region
    _
  $region17: #{_fused_impl.1} parent=0 // pred_fallthru
    _
  %v18 = vld [vmem:[%s0] sm:$0xff]
  %v19 = vld [vmem:[%s0 + $0x8] sm:$0xff]
  %v20 = vld [vmem:[%s0 + $0x10] sm:$0xff]
  %v21 = vld [vmem:[%s0 + $0x18] sm:$0xff]
  %v22 = vld [vmem:[%s0 + $0x20] sm:$0xff]
  %v23 = vld [vmem:[%s0 + $0x28] sm:$0xff]
  %v24 = vld [vmem:[%s0 + $0x30] sm:$0xff]
  %v25 = vld [vmem:[%s0 + $0x38] sm:$0xff]
  %v26 = vld [vmem:[%s0 + $0x40] sm:$0xff]
  %v27 = vld [vmem:[%s0 + $0x48] sm:$0xff]
  %v28 = vld [vmem:[%s0 + $0x50] sm:$0xff]
  %v29 = vld [vmem:[%s0 + $0x58] sm:$0xff]
  %v30 = vld [vmem:[%s0 + $0x60] sm:$0xff]
  %v31 = vld [vmem:[%s0 + $0x68] sm:$0xff]
  %v32 = vld [vmem:[%s0 + $0x70] sm:$0xff]
  %v33 = vld [vmem:[%s0 + $0x78] sm:$0xff]
  %v34 = vld [vmem:[%s0 + $0x80] sm:$0xff]
  %v35 = vld [vmem:[%s0 + $0x88] sm:$0xff]
  %v36 = vld [vmem:[%s0 + $0x90] sm:$0xff]
  %v37 = vld [vmem:[%s0 + $0x98] sm:$0xff]
  %v38 = vld [vmem:[%s0 + $0xa0] sm:$0xff]
  %v39 = vld [vmem:[%s0 + $0xa8] sm:$0xff]
  %v40 = vld [vmem:[%s0 + $0xb0] sm:$0xff]
  %v41 = vld [vmem:[%s0 + $0xb8] sm:$0xff]
  %v42 = vld [vmem:[%s0 + $0xc0] sm:$0xff]
  %v43 = vld [vmem:[%s0 + $0xc8] sm:$0xff]
  %v44 = vld [vmem:[%s0 + $0xd0] sm:$0xff]
  %v45 = vld [vmem:[%s0 + $0xd8] sm:$0xff]
  %v46 = vld [vmem:[%s0 + $0xe0] sm:$0xff]
  %v47 = vld [vmem:[%s0 + $0xe8] sm:$0xff]
  %v48 = vld [vmem:[%s0 + $0xf0] sm:$0xff]
  %v49 = vld [vmem:[%s0 + $0xf8] sm:$0xff]
  %v50 = vld [vmem:[%s0 + $0x100] sm:$0xff]
  %v51 = vld [vmem:[%s0 + $0x108] sm:$0xff]
  %v52 = vld [vmem:[%s0 + $0x110] sm:$0xff]
  %v53 = vld [vmem:[%s0 + $0x118] sm:$0xff]
  %v54 = vld [vmem:[%s0 + $0x120] sm:$0xff]
  %v55 = vld [vmem:[%s0 + $0x128] sm:$0xff]
  %v56 = vld [vmem:[%s0 + $0x130] sm:$0xff]
  %v57 = vld [vmem:[%s0 + $0x138] sm:$0xff]
  %v58 = vld [vmem:[%s0 + $0x140] sm:$0xff]
  %v59 = vld [vmem:[%s0 + $0x148] sm:$0xff]
  %v60 = vld [vmem:[%s0 + $0x150] sm:$0xff]
  %v61 = vld [vmem:[%s0 + $0x158] sm:$0xff]
  %v62 = vld [vmem:[%s0 + $0x160] sm:$0xff]
  %v63 = vld [vmem:[%s0 + $0x168] sm:$0xff]
  %v64 = vld [vmem:[%s0 + $0x170] sm:$0xff]
  %v65 = vld [vmem:[%s0 + $0x178] sm:$0xff]
  %v66 = vld [vmem:[%s0 + $0x180] sm:$0xff]
  %v67 = vld [vmem:[%s0 + $0x188] sm:$0xff]
  %v68 = vld [vmem:[%s0 + $0x190] sm:$0xff]
  %v69 = vld [vmem:[%s0 + $0x198] sm:$0xff]
  %v70 = vld [vmem:[%s0 + $0x1a0] sm:$0xff]
  %v71 = vld [vmem:[%s0 + $0x1a8] sm:$0xff]
  %v72 = vld [vmem:[%s0 + $0x1b0] sm:$0xff]
  %v73 = vld [vmem:[%s0 + $0x1b8] sm:$0xff]
  %v74 = vld [vmem:[%s0 + $0x1c0] sm:$0xff]
  %v75 = vld [vmem:[%s0 + $0x1c8] sm:$0xff]
  %v76 = vld [vmem:[%s0 + $0x1d0] sm:$0xff]
  %v77 = vld [vmem:[%s0 + $0x1d8] sm:$0xff]
  %v78 = vld [vmem:[%s0 + $0x1e0] sm:$0xff]
  %v79 = vld [vmem:[%s0 + $0x1e8] sm:$0xff]
  %v80 = vld [vmem:[%s0 + $0x1f0] sm:$0xff]
  %v81 = vld [vmem:[%s0 + $0x1f8] sm:$0xff]
  %v82 = vld [vmem:[%s0 + $0x200] sm:$0xff]
  %v83 = vld [vmem:[%s0 + $0x208] sm:$0xff]
  %v84 = vld [vmem:[%s0 + $0x210] sm:$0xff]
  %v85 = vld [vmem:[%s0 + $0x218] sm:$0xff]
  %v86 = vld [vmem:[%s0 + $0x220] sm:$0xff]
  %v87 = vld [vmem:[%s0 + $0x228] sm:$0xff]
  %v88 = vld [vmem:[%s0 + $0x230] sm:$0xff]
  %v89 = vld [vmem:[%s0 + $0x238] sm:$0xff]
  %v90 = vld [vmem:[%s0 + $0x240] sm:$0xff]
  %v91 = vld [vmem:[%s0 + $0x248] sm:$0xff]
  %v92 = vld [vmem:[%s0 + $0x250] sm:$0xff]
  %v93 = vld [vmem:[%s0 + $0x258] sm:$0xff]
  %v94 = vld [vmem:[%s0 + $0x260] sm:$0xff]
  %v95 = vld [vmem:[%s0 + $0x268] sm:$0xff]
  %v96 = vld [vmem:[%s0 + $0x270] sm:$0xff]
  %v97 = vld [vmem:[%s0 + $0x278] sm:$0xff]
  %v98 = vld [vmem:[%s0 + $0x280] sm:$0xff]
  %v99 = vld [vmem:[%s0 + $0x288] sm:$0xff]
  %v100 = vld [vmem:[%s0 + $0x290] sm:$0xff]
  %v101 = vld [vmem:[%s0 + $0x298] sm:$0xff]
  %v102 = vld [vmem:[%s0 + $0x2a0] sm:$0xff]
  %v103 = vld [vmem:[%s0 + $0x2a8] sm:$0xff]
  %v104 = vld [vmem:[%s0 + $0x2b0] sm:$0xff]
  %v105 = vld [vmem:[%s0 + $0x2b8] sm:$0xff]
  %v106 = vld [vmem:[%s0 + $0x2c0] sm:$0xff]
  %v107 = vld [vmem:[%s0 + $0x2c8] sm:$0xff]
  %v108 = vld [vmem:[%s0 + $0x2d0] sm:$0xff]
  %v109 = vld [vmem:[%s0 + $0x2d8] sm:$0xff]
  %v110 = vld [vmem:[%s0 + $0x2e0] sm:$0xff]
  %v111 = vld [vmem:[%s0 + $0x2e8] sm:$0xff]
  %v112 = vld [vmem:[%s0 + $0x2f0] sm:$0xff]
  %v113 = vld [vmem:[%s0 + $0x2f8] sm:$0xff]
  %v114 = vld [vmem:[%s0 + $0x300] sm:$0xff]
  %v115 = vld [vmem:[%s0 + $0x308] sm:$0xff]
  %v116 = vld [vmem:[%s0 + $0x310] sm:$0xff]
  %v117 = vld [vmem:[%s0 + $0x318] sm:$0xff]
  %v118 = vld [vmem:[%s0 + $0x320] sm:$0xff]
  %v119 = vld [vmem:[%s0 + $0x328] sm:$0xff]
  %v120 = vld [vmem:[%s0 + $0x330] sm:$0xff]
  %v121 = vld [vmem:[%s0 + $0x338] sm:$0xff]
  %v122 = vld [vmem:[%s0 + $0x340] sm:$0xff]
  %v123 = vld [vmem:[%s0 + $0x348] sm:$0xff]
  %v124 = vld [vmem:[%s0 + $0x350] sm:$0xff]
  %v125 = vld [vmem:[%s0 + $0x358] sm:$0xff]
  %v126 = vld [vmem:[%s0 + $0x360] sm:$0xff]
  %v127 = vld [vmem:[%s0 + $0x368] sm:$0xff]
  %v128 = vld [vmem:[%s0 + $0x370] sm:$0xff]
  %v129 = vld [vmem:[%s0 + $0x378] sm:$0xff]
  %v130 = vld [vmem:[%s0 + $0x380] sm:$0xff]
  %v131 = vld [vmem:[%s0 + $0x388] sm:$0xff]
  %v132 = vld [vmem:[%s0 + $0x390] sm:$0xff]
  %v133 = vld [vmem:[%s0 + $0x398] sm:$0xff]
  %v134 = vld [vmem:[%s0 + $0x3a0] sm:$0xff]
  %v135 = vld [vmem:[%s0 + $0x3a8] sm:$0xff]
  %v136 = vld [vmem:[%s0 + $0x3b0] sm:$0xff]
  %v137 = vld [vmem:[%s0 + $0x3b8] sm:$0xff]
  %v138 = vld [vmem:[%s0 + $0x3c0] sm:$0xff]
  %v139 = vld [vmem:[%s0 + $0x3c8] sm:$0xff]
  %v140 = vld [vmem:[%s0 + $0x3d0] sm:$0xff]
  %v141 = vld [vmem:[%s0 + $0x3d8] sm:$0xff]
  %v142 = vld [vmem:[%s0 + $0x3e0] sm:$0xff]
  %v143 = vld [vmem:[%s0 + $0x3e8] sm:$0xff]
  %v144 = vld [vmem:[%s0 + $0x3f0] sm:$0xff]
  %v145 = vld [vmem:[%s0 + $0x3f8] sm:$0xff]
  %v146 = vld [vmem:[%s0 + $0x400] sm:$0xff]
  %v147 = vld [vmem:[%s0 + $0x408] sm:$0xff]
  %v148 = vld [vmem:[%s0 + $0x410] sm:$0xff]
  %v149 = vld [vmem:[%s0 + $0x418] sm:$0xff]
  %v150 = vld [vmem:[%s0 + $0x420] sm:$0xff]
  %v151 = vld [vmem:[%s0 + $0x428] sm:$0xff]
  %v152 = vld [vmem:[%s0 + $0x430] sm:$0xff]
  %v153 = vld [vmem:[%s0 + $0x438] sm:$0xff]
  %v154 = vld [vmem:[%s0 + $0x440] sm:$0xff]
  %v155 = vld [vmem:[%s0 + $0x448] sm:$0xff]
  %v156 = vld [vmem:[%s0 + $0x450] sm:$0xff]
  %v157 = vld [vmem:[%s0 + $0x458] sm:$0xff]
  %v158 = vld [vmem:[%s0 + $0x460] sm:$0xff]
  %v159 = vld [vmem:[%s0 + $0x468] sm:$0xff]
  %v160 = vld [vmem:[%s0 + $0x470] sm:$0xff]
  %v161 = vld [vmem:[%s0 + $0x478] sm:$0xff]
  %v162 = vld [vmem:[%s0 + $0x480] sm:$0xff]
  %v163 = vld [vmem:[%s0 + $0x488] sm:$0xff]
  %v164 = vld [vmem:[%s0 + $0x490] sm:$0xff]
  %v165 = vld [vmem:[%s0 + $0x498] sm:$0xff]
  %v166 = vld [vmem:[%s0 + $0x4a0] sm:$0xff]
  %v167 = vld [vmem:[%s0 + $0x4a8] sm:$0xff]
  %v168 = vld [vmem:[%s0 + $0x4b0] sm:$0xff]
  %v169 = vld [vmem:[%s0 + $0x4b8] sm:$0xff]
  %v170 = vld [vmem:[%s0 + $0x4c0] sm:$0xff]
  %v171 = vld [vmem:[%s0 + $0x4c8] sm:$0xff]
  %v172 = vld [vmem:[%s0 + $0x4d0] sm:$0xff]
  %v173 = vld [vmem:[%s0 + $0x4d8] sm:$0xff]
  %v174 = vld [vmem:[%s0 + $0x4e0] sm:$0xff]
  %v175 = vld [vmem:[%s0 + $0x4e8] sm:$0xff]
  %v176 = vld [vmem:[%s0 + $0x4f0] sm:$0xff]
  %v177 = vld [vmem:[%s0 + $0x4f8] sm:$0xff]
  %v178 = vld [vmem:[%s0 + $0x500] sm:$0xff]
  %v179 = vld [vmem:[%s0 + $0x508] sm:$0xff]
  %v180 = vld [vmem:[%s0 + $0x510] sm:$0xff]
  %v181 = vld [vmem:[%s0 + $0x518] sm:$0xff]
  %v182 = vld [vmem:[%s0 + $0x520] sm:$0xff]
  %v183 = vld [vmem:[%s0 + $0x528] sm:$0xff]
  %v184 = vld [vmem:[%s0 + $0x530] sm:$0xff]
  %v185 = vld [vmem:[%s0 + $0x538] sm:$0xff]
  %v186 = vld [vmem:[%s0 + $0x540] sm:$0xff]
  %v187 = vld [vmem:[%s0 + $0x548] sm:$0xff]
  %v188 = vld [vmem:[%s0 + $0x550] sm:$0xff]
  %v189 = vld [vmem:[%s0 + $0x558] sm:$0xff]
  %v190 = vld [vmem:[%s0 + $0x560] sm:$0xff]
  %v191 = vld [vmem:[%s0 + $0x568] sm:$0xff]
  %v192 = vld [vmem:[%s0 + $0x570] sm:$0xff]
  %v193 = vld [vmem:[%s0 + $0x578] sm:$0xff]
  %v194 = vld [vmem:[%s0 + $0x580] sm:$0xff]
  %v195 = vld [vmem:[%s0 + $0x588] sm:$0xff]
  %v196 = vld [vmem:[%s0 + $0x590] sm:$0xff]
  %v197 = vld [vmem:[%s0 + $0x598] sm:$0xff]
  %v198 = vld [vmem:[%s1] sm:$0xff]
  %v199 = vld [vmem:[%s1 + $0x8] sm:$0xff]
  %v200 = vld [vmem:[%s1 + $0x10] sm:$0xff]
  %v201 = vld [vmem:[%s1 + $0x18] sm:$0xff]
  %v202 = vld [vmem:[%s1 + $0x20] sm:$0xff]
  %v203 = vld [vmem:[%s1 + $0x28] sm:$0xff]
  %v204 = vld [vmem:[%s1 + $0x30] sm:$0xff]
  %v205 = vld [vmem:[%s1 + $0x38] sm:$0xff]
  %v206 = vld [vmem:[%s1 + $0x40] sm:$0xff]
  %v207 = vld [vmem:[%s1 + $0x48] sm:$0xff]
  %v208 = vld [vmem:[%s1 + $0x50] sm:$0xff]
  %v209 = vld [vmem:[%s1 + $0x58] sm:$0xff]
  %v210 = vld [vmem:[%s1 + $0x60] sm:$0xff]
  %v211 = vld [vmem:[%s1 + $0x68] sm:$0xff]
  %v212 = vld [vmem:[%s1 + $0x70] sm:$0xff]
  %v213 = vld [vmem:[%s1 + $0x78] sm:$0xff]
  %v214 = vld [vmem:[%s1 + $0x80] sm:$0xff]
  %v215 = vld [vmem:[%s1 + $0x88] sm:$0xff]
  %v216 = vld [vmem:[%s1 + $0x90] sm:$0xff]
  %v217 = vld [vmem:[%s1 + $0x98] sm:$0xff]
  %v218 = vld [vmem:[%s1 + $0xa0] sm:$0xff]
  %v219 = vld [vmem:[%s1 + $0xa8] sm:$0xff]
  %v220 = vld [vmem:[%s1 + $0xb0] sm:$0xff]
  %v221 = vld [vmem:[%s1 + $0xb8] sm:$0xff]
  %v222 = vld [vmem:[%s1 + $0xc0] sm:$0xff]
  %v223 = vld [vmem:[%s1 + $0xc8] sm:$0xff]
  %v224 = vld [vmem:[%s1 + $0xd0] sm:$0xff]
  %v225 = vld [vmem:[%s1 + $0xd8] sm:$0xff]
  %v226 = vld [vmem:[%s1 + $0xe0] sm:$0xff]
  %v227 = vld [vmem:[%s1 + $0xe8] sm:$0xff]
  %v228 = vld [vmem:[%s1 + $0xf0] sm:$0xff]
  %v229 = vld [vmem:[%s1 + $0xf8] sm:$0xff]
  %v230 = vld [vmem:[%s1 + $0x100] sm:$0xff]
  %v231 = vld [vmem:[%s1 + $0x108] sm:$0xff]
  %v232 = vld [vmem:[%s1 + $0x110] sm:$0xff]
  %v233 = vld [vmem:[%s1 + $0x118] sm:$0xff]
  %v234 = vld [vmem:[%s1 + $0x120] sm:$0xff]
  %v235 = vld [vmem:[%s1 + $0x128] sm:$0xff]
  %v236 = vld [vmem:[%s1 + $0x130] sm:$0xff]
  %v237 = vld [vmem:[%s1 + $0x138] sm:$0xff]
  %v238 = vld [vmem:[%s1 + $0x140] sm:$0xff]
  %v239 = vld [vmem:[%s1 + $0x148] sm:$0xff]
  %v240 = vld [vmem:[%s1 + $0x150] sm:$0xff]
  %v241 = vld [vmem:[%s1 + $0x158] sm:$0xff]
  %v242 = vld [vmem:[%s1 + $0x160] sm:$0xff]
  %v243 = vld [vmem:[%s1 + $0x168] sm:$0xff]
  %v244 = vld [vmem:[%s1 + $0x170] sm:$0xff]
  %v245 = vld [vmem:[%s1 + $0x178] sm:$0xff]
  %v246 = vld [vmem:[%s1 + $0x180] sm:$0xff]
  %v247 = vld [vmem:[%s1 + $0x188] sm:$0xff]
  %v248 = vld [vmem:[%s1 + $0x190] sm:$0xff]
  %v249 = vld [vmem:[%s1 + $0x198] sm:$0xff]
  %v250 = vld [vmem:[%s1 + $0x1a0] sm:$0xff]
  %v251 = vld [vmem:[%s1 + $0x1a8] sm:$0xff]
  %v252 = vld [vmem:[%s1 + $0x1b0] sm:$0xff]
  %v253 = vld [vmem:[%s1 + $0x1b8] sm:$0xff]
  %v254 = vld [vmem:[%s1 + $0x1c0] sm:$0xff]
  %v255 = vld [vmem:[%s1 + $0x1c8] sm:$0xff]
  %v256 = vld [vmem:[%s1 + $0x1d0] sm:$0xff]
  %v257 = vld [vmem:[%s1 + $0x1d8] sm:$0xff]
  %v258 = vld [vmem:[%s1 + $0x1e0] sm:$0xff]
  %v259 = vld [vmem:[%s1 + $0x1e8] sm:$0xff]
  %v260 = vld [vmem:[%s1 + $0x1f0] sm:$0xff]
  %v261 = vld [vmem:[%s1 + $0x1f8] sm:$0xff]
  %v262 = vld [vmem:[%s1 + $0x200] sm:$0xff]
  %v263 = vld [vmem:[%s1 + $0x208] sm:$0xff]
  %v264 = vld [vmem:[%s1 + $0x210] sm:$0xff]
  %v265 = vld [vmem:[%s1 + $0x218] sm:$0xff]
  %v266 = vld [vmem:[%s1 + $0x220] sm:$0xff]
  %v267 = vld [vmem:[%s1 + $0x228] sm:$0xff]
  %v268 = vld [vmem:[%s1 + $0x230] sm:$0xff]
  %v269 = vld [vmem:[%s1 + $0x238] sm:$0xff]
  %v270 = vld [vmem:[%s1 + $0x240] sm:$0xff]
  %v271 = vld [vmem:[%s1 + $0x248] sm:$0xff]
  %v272 = vld [vmem:[%s1 + $0x250] sm:$0xff]
  %v273 = vld [vmem:[%s1 + $0x258] sm:$0xff]
  %v274 = vld [vmem:[%s1 + $0x260] sm:$0xff]
  %v275 = vld [vmem:[%s1 + $0x268] sm:$0xff]
  %v276 = vld [vmem:[%s1 + $0x270] sm:$0xff]
  %v277 = vld [vmem:[%s1 + $0x278] sm:$0xff]
  %v278 = vld [vmem:[%s1 + $0x280] sm:$0xff]
  %v279 = vld [vmem:[%s1 + $0x288] sm:$0xff]
  %v280 = vld [vmem:[%s1 + $0x290] sm:$0xff]
  %v281 = vld [vmem:[%s1 + $0x298] sm:$0xff]
  %v282 = vld [vmem:[%s1 + $0x2a0] sm:$0xff]
  %v283 = vld [vmem:[%s1 + $0x2a8] sm:$0xff]
  %v284 = vld [vmem:[%s1 + $0x2b0] sm:$0xff]
  %v285 = vld [vmem:[%s1 + $0x2b8] sm:$0xff]
  %v286 = vld [vmem:[%s1 + $0x2c0] sm:$0xff]
  %v287 = vld [vmem:[%s1 + $0x2c8] sm:$0xff]
  %v288 = vld [vmem:[%s1 + $0x2d0] sm:$0xff]
  %v289 = vld [vmem:[%s1 + $0x2d8] sm:$0xff]
  %v290 = vld [vmem:[%s1 + $0x2e0] sm:$0xff]
  %v291 = vld [vmem:[%s1 + $0x2e8] sm:$0xff]
  %v292 = vld [vmem:[%s1 + $0x2f0] sm:$0xff]
  %v293 = vld [vmem:[%s1 + $0x2f8] sm:$0xff]
  %v294 = vld [vmem:[%s1 + $0x300] sm:$0xff]
  %v295 = vld [vmem:[%s1 + $0x308] sm:$0xff]
  %v296 = vld [vmem:[%s1 + $0x310] sm:$0xff]
  %v297 = vld [vmem:[%s1 + $0x318] sm:$0xff]
  %v298 = vld [vmem:[%s1 + $0x320] sm:$0xff]
  %v299 = vld [vmem:[%s1 + $0x328] sm:$0xff]
  %v300 = vld [vmem:[%s1 + $0x330] sm:$0xff]
  %v301 = vld [vmem:[%s1 + $0x338] sm:$0xff]
  %v302 = vld [vmem:[%s1 + $0x340] sm:$0xff]
  %v303 = vld [vmem:[%s1 + $0x348] sm:$0xff]
  %v304 = vld [vmem:[%s1 + $0x350] sm:$0xff]
  %v305 = vld [vmem:[%s1 + $0x358] sm:$0xff]
  %v306 = vld [vmem:[%s1 + $0x360] sm:$0xff]
  %v307 = vld [vmem:[%s1 + $0x368] sm:$0xff]
  %v308 = vld [vmem:[%s1 + $0x370] sm:$0xff]
  %v309 = vld [vmem:[%s1 + $0x378] sm:$0xff]
  %v310 = vld [vmem:[%s1 + $0x380] sm:$0xff]
  %v311 = vld [vmem:[%s1 + $0x388] sm:$0xff]
  %v312 = vld [vmem:[%s1 + $0x390] sm:$0xff]
  %v313 = vld [vmem:[%s1 + $0x398] sm:$0xff]
  %v314 = vld [vmem:[%s1 + $0x3a0] sm:$0xff]
  %v315 = vld [vmem:[%s1 + $0x3a8] sm:$0xff]
  %v316 = vld [vmem:[%s1 + $0x3b0] sm:$0xff]
  %v317 = vld [vmem:[%s1 + $0x3b8] sm:$0xff]
  %v318 = vld [vmem:[%s1 + $0x3c0] sm:$0xff]
  %v319 = vld [vmem:[%s1 + $0x3c8] sm:$0xff]
  %v320 = vld [vmem:[%s1 + $0x3d0] sm:$0xff]
  %v321 = vld [vmem:[%s1 + $0x3d8] sm:$0xff]
  %v322 = vld [vmem:[%s1 + $0x3e0] sm:$0xff]
  %v323 = vld [vmem:[%s1 + $0x3e8] sm:$0xff]
  %v324 = vld [vmem:[%s1 + $0x3f0] sm:$0xff]
  %v325 = vld [vmem:[%s1 + $0x3f8] sm:$0xff]
  %v326 = vld [vmem:[%s1 + $0x400] sm:$0xff]
  %v327 = vld [vmem:[%s1 + $0x408] sm:$0xff]
  %v328 = vld [vmem:[%s1 + $0x410] sm:$0xff]
  %v329 = vld [vmem:[%s1 + $0x418] sm:$0xff]
  %v330 = vld [vmem:[%s1 + $0x420] sm:$0xff]
  %v331 = vld [vmem:[%s1 + $0x428] sm:$0xff]
  %v332 = vld [vmem:[%s1 + $0x430] sm:$0xff]
  %v333 = vld [vmem:[%s1 + $0x438] sm:$0xff]
  %v334 = vld [vmem:[%s1 + $0x440] sm:$0xff]
  %v335 = vld [vmem:[%s1 + $0x448] sm:$0xff]
  %v336 = vld [vmem:[%s1 + $0x450] sm:$0xff]
  %v337 = vld [vmem:[%s1 + $0x458] sm:$0xff]
  %v338 = vld [vmem:[%s1 + $0x460] sm:$0xff]
  %v339 = vld [vmem:[%s1 + $0x468] sm:$0xff]
  %v340 = vld [vmem:[%s1 + $0x470] sm:$0xff]
  %v341 = vld [vmem:[%s1 + $0x478] sm:$0xff]
  %v342 = vld [vmem:[%s1 + $0x480] sm:$0xff]
  %v343 = vld [vmem:[%s1 + $0x488] sm:$0xff]
  %v344 = vld [vmem:[%s1 + $0x490] sm:$0xff]
  %v345 = vld [vmem:[%s1 + $0x498] sm:$0xff]
  %v346 = vld [vmem:[%s1 + $0x4a0] sm:$0xff]
  %v347 = vld [vmem:[%s1 + $0x4a8] sm:$0xff]
  %v348 = vld [vmem:[%s1 + $0x4b0] sm:$0xff]
  %v349 = vld [vmem:[%s1 + $0x4b8] sm:$0xff]
  %v350 = vld [vmem:[%s1 + $0x4c0] sm:$0xff]
  %v351 = vld [vmem:[%s1 + $0x4c8] sm:$0xff]
  %v352 = vld [vmem:[%s1 + $0x4d0] sm:$0xff]
  %v353 = vld [vmem:[%s1 + $0x4d8] sm:$0xff]
  %v354 = vld [vmem:[%s1 + $0x4e0] sm:$0xff]
  %v355 = vld [vmem:[%s1 + $0x4e8] sm:$0xff]
  %v356 = vld [vmem:[%s1 + $0x4f0] sm:$0xff]
  %v357 = vld [vmem:[%s1 + $0x4f8] sm:$0xff]
  %v358 = vld [vmem:[%s1 + $0x500] sm:$0xff]
  %v359 = vld [vmem:[%s1 + $0x508] sm:$0xff]
  %v360 = vld [vmem:[%s1 + $0x510] sm:$0xff]
  %v361 = vld [vmem:[%s1 + $0x518] sm:$0xff]
  %v362 = vld [vmem:[%s1 + $0x520] sm:$0xff]
  %v363 = vld [vmem:[%s1 + $0x528] sm:$0xff]
  %v364 = vld [vmem:[%s1 + $0x530] sm:$0xff]
  %v365 = vld [vmem:[%s1 + $0x538] sm:$0xff]
  %v366 = vld [vmem:[%s1 + $0x540] sm:$0xff]
  %v367 = vld [vmem:[%s1 + $0x548] sm:$0xff]
  %v368 = vld [vmem:[%s1 + $0x550] sm:$0xff]
  %v369 = vld [vmem:[%s1 + $0x558] sm:$0xff]
  %v370 = vld [vmem:[%s1 + $0x560] sm:$0xff]
  %v371 = vld [vmem:[%s1 + $0x568] sm:$0xff]
  %v372 = vld [vmem:[%s1 + $0x570] sm:$0xff]
  %v373 = vld [vmem:[%s1 + $0x578] sm:$0xff]
  %v374 = vld [vmem:[%s1 + $0x580] sm:$0xff]
  %v375 = vld [vmem:[%s1 + $0x588] sm:$0xff]
  %v376 = vld [vmem:[%s1 + $0x590] sm:$0xff]
  %v377 = vld [vmem:[%s1 + $0x598] sm:$0xff]
  %v378 = vadd.f32 %v18, %v198
  %v379 = vadd.f32 %v19, %v199
  %v380 = vadd.f32 %v20, %v200
  %v381 = vadd.f32 %v21, %v201
  %v382 = vadd.f32 %v22, %v202
  %v383 = vadd.f32 %v23, %v203
  %v384 = vadd.f32 %v24, %v204
  %v385 = vadd.f32 %v25, %v205
  %v386 = vadd.f32 %v26, %v206
  %v387 = vadd.f32 %v27, %v207
  %v388 = vadd.f32 %v28, %v208
  %v389 = vadd.f32 %v29, %v209
  %v390 = vadd.f32 %v30, %v210
  %v391 = vadd.f32 %v31, %v211
  %v392 = vadd.f32 %v32, %v212
  %v393 = vadd.f32 %v33, %v213
  %v394 = vadd.f32 %v34, %v214
  %v395 = vadd.f32 %v35, %v215
  %v396 = vadd.f32 %v36, %v216
  %v397 = vadd.f32 %v37, %v217
  %v398 = vadd.f32 %v38, %v218
  %v399 = vadd.f32 %v39, %v219
  %v400 = vadd.f32 %v40, %v220
  %v401 = vadd.f32 %v41, %v221
  %v402 = vadd.f32 %v42, %v222
  %v403 = vadd.f32 %v43, %v223
  %v404 = vadd.f32 %v44, %v224
  %v405 = vadd.f32 %v45, %v225
  %v406 = vadd.f32 %v46, %v226
  %v407 = vadd.f32 %v47, %v227
  %v408 = vadd.f32 %v48, %v228
  %v409 = vadd.f32 %v49, %v229
  %v410 = vadd.f32 %v50, %v230
  %v411 = vadd.f32 %v51, %v231
  %v412 = vadd.f32 %v52, %v232
  %v413 = vadd.f32 %v53, %v233
  %v414 = vadd.f32 %v54, %v234
  %v415 = vadd.f32 %v55, %v235
  %v416 = vadd.f32 %v56, %v236
  %v417 = vadd.f32 %v57, %v237
  %v418 = vadd.f32 %v58, %v238
  %v419 = vadd.f32 %v59, %v239
  %v420 = vadd.f32 %v60, %v240
  %v421 = vadd.f32 %v61, %v241
  %v422 = vadd.f32 %v62, %v242
  %v423 = vadd.f32 %v63, %v243
  %v424 = vadd.f32 %v64, %v244
  %v425 = vadd.f32 %v65, %v245
  %v426 = vadd.f32 %v66, %v246
  %v427 = vadd.f32 %v67, %v247
  %v428 = vadd.f32 %v68, %v248
  %v429 = vadd.f32 %v69, %v249
  %v430 = vadd.f32 %v70, %v250
  %v431 = vadd.f32 %v71, %v251
  %v432 = vadd.f32 %v72, %v252
  %v433 = vadd.f32 %v73, %v253
  %v434 = vadd.f32 %v74, %v254
  %v435 = vadd.f32 %v75, %v255
  %v436 = vadd.f32 %v76, %v256
  %v437 = vadd.f32 %v77, %v257
  %v438 = vadd.f32 %v78, %v258
  %v439 = vadd.f32 %v79, %v259
  %v440 = vadd.f32 %v80, %v260
  %v441 = vadd.f32 %v81, %v261
  %v442 = vadd.f32 %v82, %v262
  %v443 = vadd.f32 %v83, %v263
  %v444 = vadd.f32 %v84, %v264
  %v445 = vadd.f32 %v85, %v265
  %v446 = vadd.f32 %v86, %v266
  %v447 = vadd.f32 %v87, %v267
  %v448 = vadd.f32 %v88, %v268
  %v449 = vadd.f32 %v89, %v269
  %v450 = vadd.f32 %v90, %v270
  %v451 = vadd.f32 %v91, %v271
  %v452 = vadd.f32 %v92, %v272
  %v453 = vadd.f32 %v93, %v273
  %v454 = vadd.f32 %v94, %v274
  %v455 = vadd.f32 %v95, %v275
  %v456 = vadd.f32 %v96, %v276
  %v457 = vadd.f32 %v97, %v277
  %v458 = vadd.f32 %v98, %v278
  %v459 = vadd.f32 %v99, %v279
  %v460 = vadd.f32 %v100, %v280
  %v461 = vadd.f32 %v101, %v281
  %v462 = vadd.f32 %v102, %v282
  %v463 = vadd.f32 %v103, %v283
  %v464 = vadd.f32 %v104, %v284
  %v465 = vadd.f32 %v105, %v285
  %v466 = vadd.f32 %v106, %v286
  %v467 = vadd.f32 %v107, %v287
  %v468 = vadd.f32 %v108, %v288
  %v469 = vadd.f32 %v109, %v289
  %v470 = vadd.f32 %v110, %v290
  %v471 = vadd.f32 %v111, %v291
  %v472 = vadd.f32 %v112, %v292
  %v473 = vadd.f32 %v113, %v293
  %v474 = vadd.f32 %v114, %v294
  %v475 = vadd.f32 %v115, %v295
  %v476 = vadd.f32 %v116, %v296
  %v477 = vadd.f32 %v117, %v297
  %v478 = vadd.f32 %v118, %v298
  %v479 = vadd.f32 %v119, %v299
  %v480 = vadd.f32 %v120, %v300
  %v481 = vadd.f32 %v121, %v301
  %v482 = vadd.f32 %v122, %v302
  %v483 = vadd.f32 %v123, %v303
  %v484 = vadd.f32 %v124, %v304
  %v485 = vadd.f32 %v125, %v305
  %v486 = vadd.f32 %v126, %v306
  %v487 = vadd.f32 %v127, %v307
  %v488 = vadd.f32 %v128, %v308
  %v489 = vadd.f32 %v129, %v309
  %v490 = vadd.f32 %v130, %v310
  %v491 = vadd.f32 %v131, %v311
  %v492 = vadd.f32 %v132, %v312
  %v493 = vadd.f32 %v133, %v313
  %v494 = vadd.f32 %v134, %v314
  %v495 = vadd.f32 %v135, %v315
  %v496 = vadd.f32 %v136, %v316
  %v497 = vadd.f32 %v137, %v317
  %v498 = vadd.f32 %v138, %v318
  %v499 = vadd.f32 %v139, %v319
  %v500 = vadd.f32 %v140, %v320
  %v501 = vadd.f32 %v141, %v321
  %v502 = vadd.f32 %v142, %v322
  %v503 = vadd.f32 %v143, %v323
  %v504 = vadd.f32 %v144, %v324
  %v505 = vadd.f32 %v145, %v325
  %v506 = vadd.f32 %v146, %v326
  %v507 = vadd.f32 %v147, %v327
  %v508 = vadd.f32 %v148, %v328
  %v509 = vadd.f32 %v149, %v329
  %v510 = vadd.f32 %v150, %v330
  %v511 = vadd.f32 %v151, %v331
  %v512 = vadd.f32 %v152, %v332
  %v513 = vadd.f32 %v153, %v333
  %v514 = vadd.f32 %v154, %v334
  %v515 = vadd.f32 %v155, %v335
  %v516 = vadd.f32 %v156, %v336
  %v517 = vadd.f32 %v157, %v337
  %v518 = vadd.f32 %v158, %v338
  %v519 = vadd.f32 %v159, %v339
  %v520 = vadd.f32 %v160, %v340
  %v521 = vadd.f32 %v161, %v341
  %v522 = vadd.f32 %v162, %v342
  %v523 = vadd.f32 %v163, %v343
  %v524 = vadd.f32 %v164, %v344
  %v525 = vadd.f32 %v165, %v345
  %v526 = vadd.f32 %v166, %v346
  %v527 = vadd.f32 %v167, %v347
  %v528 = vadd.f32 %v168, %v348
  %v529 = vadd.f32 %v169, %v349
  %v530 = vadd.f32 %v170, %v350
  %v531 = vadd.f32 %v171, %v351
  %v532 = vadd.f32 %v172, %v352
  %v533 = vadd.f32 %v173, %v353
  %v534 = vadd.f32 %v174, %v354
  %v535 = vadd.f32 %v175, %v355
  %v536 = vadd.f32 %v176, %v356
  %v537 = vadd.f32 %v177, %v357
  %v538 = vadd.f32 %v178, %v358
  %v539 = vadd.f32 %v179, %v359
  %v540 = vadd.f32 %v180, %v360
  %v541 = vadd.f32 %v181, %v361
  %v542 = vadd.f32 %v182, %v362
  %v543 = vadd.f32 %v183, %v363
  %v544 = vadd.f32 %v184, %v364
  %v545 = vadd.f32 %v185, %v365
  %v546 = vadd.f32 %v186, %v366
  %v547 = vadd.f32 %v187, %v367
  %v548 = vadd.f32 %v188, %v368
  %v549 = vadd.f32 %v189, %v369
  %v550 = vadd.f32 %v190, %v370
  %v551 = vadd.f32 %v191, %v371
  %v552 = vadd.f32 %v192, %v372
  %v553 = vadd.f32 %v193, %v373
  %v554 = vadd.f32 %v194, %v374
  %v555 = vadd.f32 %v195, %v375
  %v556 = vadd.f32 %v196, %v376
  %v557 = vadd.f32 %v197, %v377
  %v558 = vmax.f32 %v378, 0.0
  %v559 = vmax.f32 %v379, 0.0
  %v560 = vmax.f32 %v380, 0.0
  %v561 = vmax.f32 %v381, 0.0
  %v562 = vmax.f32 %v382, 0.0
  %v563 = vmax.f32 %v383, 0.0
  %v564 = vmax.f32 %v384, 0.0
  %v565 = vmax.f32 %v385, 0.0
  %v566 = vmax.f32 %v386, 0.0
  %v567 = vmax.f32 %v387, 0.0
  %v568 = vmax.f32 %v388, 0.0
  %v569 = vmax.f32 %v389, 0.0
  %v570 = vmax.f32 %v390, 0.0
  %v571 = vmax.f32 %v391, 0.0
  %v572 = vmax.f32 %v392, 0.0
  %v573 = vmax.f32 %v393, 0.0
  %v574 = vmax.f32 %v394, 0.0
  %v575 = vmax.f32 %v395, 0.0
  %v576 = vmax.f32 %v396, 0.0
  %v577 = vmax.f32 %v397, 0.0
  %v578 = vmax.f32 %v398, 0.0
  %v579 = vmax.f32 %v399, 0.0
  %v580 = vmax.f32 %v400, 0.0
  %v581 = vmax.f32 %v401, 0.0
  %v582 = vmax.f32 %v402, 0.0
  %v583 = vmax.f32 %v403, 0.0
  %v584 = vmax.f32 %v404, 0.0
  %v585 = vmax.f32 %v405, 0.0
  %v586 = vmax.f32 %v406, 0.0
  %v587 = vmax.f32 %v407, 0.0
  %v588 = vmax.f32 %v408, 0.0
  %v589 = vmax.f32 %v409, 0.0
  %v590 = vmax.f32 %v410, 0.0
  %v591 = vmax.f32 %v411, 0.0
  %v592 = vmax.f32 %v412, 0.0
  %v593 = vmax.f32 %v413, 0.0
  %v594 = vmax.f32 %v414, 0.0
  %v595 = vmax.f32 %v415, 0.0
  %v596 = vmax.f32 %v416, 0.0
  %v597 = vmax.f32 %v417, 0.0
  %v598 = vmax.f32 %v418, 0.0
  %v599 = vmax.f32 %v419, 0.0
  %v600 = vmax.f32 %v420, 0.0
  %v601 = vmax.f32 %v421, 0.0
  %v602 = vmax.f32 %v422, 0.0
  %v603 = vmax.f32 %v423, 0.0
  %v604 = vmax.f32 %v424, 0.0
  %v605 = vmax.f32 %v425, 0.0
  %v606 = vmax.f32 %v426, 0.0
  %v607 = vmax.f32 %v427, 0.0
  %v608 = vmax.f32 %v428, 0.0
  %v609 = vmax.f32 %v429, 0.0
  %v610 = vmax.f32 %v430, 0.0
  %v611 = vmax.f32 %v431, 0.0
  %v612 = vmax.f32 %v432, 0.0
  %v613 = vmax.f32 %v433, 0.0
  %v614 = vmax.f32 %v434, 0.0
  %v615 = vmax.f32 %v435, 0.0
  %v616 = vmax.f32 %v436, 0.0
  %v617 = vmax.f32 %v437, 0.0
  %v618 = vmax.f32 %v438, 0.0
  %v619 = vmax.f32 %v439, 0.0
  %v620 = vmax.f32 %v440, 0.0
  %v621 = vmax.f32 %v441, 0.0
  %v622 = vmax.f32 %v442, 0.0
  %v623 = vmax.f32 %v443, 0.0
  %v624 = vmax.f32 %v444, 0.0
  %v625 = vmax.f32 %v445, 0.0
  %v626 = vmax.f32 %v446, 0.0
  %v627 = vmax.f32 %v447, 0.0
  %v628 = vmax.f32 %v448, 0.0
  %v629 = vmax.f32 %v449, 0.0
  %v630 = vmax.f32 %v450, 0.0
  %v631 = vmax.f32 %v451, 0.0
  %v632 = vmax.f32 %v452, 0.0
  %v633 = vmax.f32 %v453, 0.0
  %v634 = vmax.f32 %v454, 0.0
  %v635 = vmax.f32 %v455, 0.0
  %v636 = vmax.f32 %v456, 0.0
  %v637 = vmax.f32 %v457, 0.0
  %v638 = vmax.f32 %v458, 0.0
  %v639 = vmax.f32 %v459, 0.0
  %v640 = vmax.f32 %v460, 0.0
  %v641 = vmax.f32 %v461, 0.0
  %v642 = vmax.f32 %v462, 0.0
  %v643 = vmax.f32 %v463, 0.0
  %v644 = vmax.f32 %v464, 0.0
  %v645 = vmax.f32 %v465, 0.0
  %v646 = vmax.f32 %v466, 0.0
  %v647 = vmax.f32 %v467, 0.0
  %v648 = vmax.f32 %v468, 0.0
  %v649 = vmax.f32 %v469, 0.0
  %v650 = vmax.f32 %v470, 0.0
  %v651 = vmax.f32 %v471, 0.0
  %v652 = vmax.f32 %v472, 0.0
  %v653 = vmax.f32 %v473, 0.0
  %v654 = vmax.f32 %v474, 0.0
  %v655 = vmax.f32 %v475, 0.0
  %v656 = vmax.f32 %v476, 0.0
  %v657 = vmax.f32 %v477, 0.0
  %v658 = vmax.f32 %v478, 0.0
  %v659 = vmax.f32 %v479, 0.0
  %v660 = vmax.f32 %v480, 0.0
  %v661 = vmax.f32 %v481, 0.0
  %v662 = vmax.f32 %v482, 0.0
  %v663 = vmax.f32 %v483, 0.0
  %v664 = vmax.f32 %v484, 0.0
  %v665 = vmax.f32 %v485, 0.0
  %v666 = vmax.f32 %v486, 0.0
  %v667 = vmax.f32 %v487, 0.0
  %v668 = vmax.f32 %v488, 0.0
  %v669 = vmax.f32 %v489, 0.0
  %v670 = vmax.f32 %v490, 0.0
  %v671 = vmax.f32 %v491, 0.0
  %v672 = vmax.f32 %v492, 0.0
  %v673 = vmax.f32 %v493, 0.0
  %v674 = vmax.f32 %v494, 0.0
  %v675 = vmax.f32 %v495, 0.0
  %v676 = vmax.f32 %v496, 0.0
  %v677 = vmax.f32 %v497, 0.0
  %v678 = vmax.f32 %v498, 0.0
  %v679 = vmax.f32 %v499, 0.0
  %v680 = vmax.f32 %v500, 0.0
  %v681 = vmax.f32 %v501, 0.0
  %v682 = vmax.f32 %v502, 0.0
  %v683 = vmax.f32 %v503, 0.0
  %v684 = vmax.f32 %v504, 0.0
  %v685 = vmax.f32 %v505, 0.0
  %v686 = vmax.f32 %v506, 0.0
  %v687 = vmax.f32 %v507, 0.0
  %v688 = vmax.f32 %v508, 0.0
  %v689 = vmax.f32 %v509, 0.0
  %v690 = vmax.f32 %v510, 0.0
  %v691 = vmax.f32 %v511, 0.0
  %v692 = vmax.f32 %v512, 0.0
  %v693 = vmax.f32 %v513, 0.0
  %v694 = vmax.f32 %v514, 0.0
  %v695 = vmax.f32 %v515, 0.0
  %v696 = vmax.f32 %v516, 0.0
  %v697 = vmax.f32 %v517, 0.0
  %v698 = vmax.f32 %v518, 0.0
  %v699 = vmax.f32 %v519, 0.0
  %v700 = vmax.f32 %v520, 0.0
  %v701 = vmax.f32 %v521, 0.0
  %v702 = vmax.f32 %v522, 0.0
  %v703 = vmax.f32 %v523, 0.0
  %v704 = vmax.f32 %v524, 0.0
  %v705 = vmax.f32 %v525, 0.0
  %v706 = vmax.f32 %v526, 0.0
  %v707 = vmax.f32 %v527, 0.0
  %v708 = vmax.f32 %v528, 0.0
  %v709 = vmax.f32 %v529, 0.0
  %v710 = vmax.f32 %v530, 0.0
  %v711 = vmax.f32 %v531, 0.0
  %v712 = vmax.f32 %v532, 0.0
  %v713 = vmax.f32 %v533, 0.0
  %v714 = vmax.f32 %v534, 0.0
  %v715 = vmax.f32 %v535, 0.0
  %v716 = vmax.f32 %v536, 0.0
  %v717 = vmax.f32 %v537, 0.0
  %v718 = vmax.f32 %v538, 0.0
  %v719 = vmax.f32 %v539, 0.0
  %v720 = vmax.f32 %v540, 0.0
  %v721 = vmax.f32 %v541, 0.0
  %v722 = vmax.f32 %v542, 0.0
  %v723 = vmax.f32 %v543, 0.0
  %v724 = vmax.f32 %v544, 0.0
  %v725 = vmax.f32 %v545, 0.0
  %v726 = vmax.f32 %v546, 0.0
  %v727 = vmax.f32 %v547, 0.0
  %v728 = vmax.f32 %v548, 0.0
  %v729 = vmax.f32 %v549, 0.0
  %v730 = vmax.f32 %v550, 0.0
  %v731 = vmax.f32 %v551, 0.0
  %v732 = vmax.f32 %v552, 0.0
  %v733 = vmax.f32 %v553, 0.0
  %v734 = vmax.f32 %v554, 0.0
  %v735 = vmax.f32 %v555, 0.0
  %v736 = vmax.f32 %v556, 0.0
  %v737 = vmax.f32 %v557, 0.0
  %v738 = vld [vmem:[%s2] sm:$0xff]
  %v739 = vld [vmem:[%s2 + $0x8] sm:$0xff]
  %v740 = vld [vmem:[%s2 + $0x10] sm:$0xff]
  %v741 = vld [vmem:[%s2 + $0x18] sm:$0xff]
  %v742 = vld [vmem:[%s2 + $0x20] sm:$0xff]
  %v743 = vld [vmem:[%s2 + $0x28] sm:$0xff]
  %v744 = vld [vmem:[%s2 + $0x30] sm:$0xff]
  %v745 = vld [vmem:[%s2 + $0x38] sm:$0xff]
  %v746 = vld [vmem:[%s2 + $0x40] sm:$0xff]
  %v747 = vld [vmem:[%s2 + $0x48] sm:$0xff]
  %v748 = vld [vmem:[%s2 + $0x50] sm:$0xff]
  %v749 = vld [vmem:[%s2 + $0x58] sm:$0xff]
  %v750 = vld [vmem:[%s2 + $0x60] sm:$0xff]
  %v751 = vld [vmem:[%s2 + $0x68] sm:$0xff]
  %v752 = vld [vmem:[%s2 + $0x70] sm:$0xff]
  %v753 = vld [vmem:[%s2 + $0x78] sm:$0xff]
  %v754 = vld [vmem:[%s2 + $0x80] sm:$0xff]
  %v755 = vld [vmem:[%s2 + $0x88] sm:$0xff]
  %v756 = vld [vmem:[%s2 + $0x90] sm:$0xff]
  %v757 = vld [vmem:[%s2 + $0x98] sm:$0xff]
  %v758 = vld [vmem:[%s2 + $0xa0] sm:$0xff]
  %v759 = vld [vmem:[%s2 + $0xa8] sm:$0xff]
  %v760 = vld [vmem:[%s2 + $0xb0] sm:$0xff]
  %v761 = vld [vmem:[%s2 + $0xb8] sm:$0xff]
  %v762 = vld [vmem:[%s2 + $0xc0] sm:$0xff]
  %v763 = vld [vmem:[%s2 + $0xc8] sm:$0xff]
  %v764 = vld [vmem:[%s2 + $0xd0] sm:$0xff]
  %v765 = vld [vmem:[%s2 + $0xd8] sm:$0xff]
  %v766 = vld [vmem:[%s2 + $0xe0] sm:$0xff]
  %v767 = vld [vmem:[%s2 + $0xe8] sm:$0xff]
  %v768 = vld [vmem:[%s2 + $0xf0] sm:$0xff]
  %v769 = vld [vmem:[%s2 + $0xf8] sm:$0xff]
  %v770 = vld [vmem:[%s2 + $0x100] sm:$0xff]
  %v771 = vld [vmem:[%s2 + $0x108] sm:$0xff]
  %v772 = vld [vmem:[%s2 + $0x110] sm:$0xff]
  %v773 = vld [vmem:[%s2 + $0x118] sm:$0xff]
  %v774 = vld [vmem:[%s2 + $0x120] sm:$0xff]
  %v775 = vld [vmem:[%s2 + $0x128] sm:$0xff]
  %v776 = vld [vmem:[%s2 + $0x130] sm:$0xff]
  %v777 = vld [vmem:[%s2 + $0x138] sm:$0xff]
  %v778 = vld [vmem:[%s2 + $0x140] sm:$0xff]
  %v779 = vld [vmem:[%s2 + $0x148] sm:$0xff]
  %v780 = vld [vmem:[%s2 + $0x150] sm:$0xff]
  %v781 = vld [vmem:[%s2 + $0x158] sm:$0xff]
  %v782 = vld [vmem:[%s2 + $0x160] sm:$0xff]
  %v783 = vld [vmem:[%s2 + $0x168] sm:$0xff]
  %v784 = vld [vmem:[%s2 + $0x170] sm:$0xff]
  %v785 = vld [vmem:[%s2 + $0x178] sm:$0xff]
  %v786 = vld [vmem:[%s2 + $0x180] sm:$0xff]
  %v787 = vld [vmem:[%s2 + $0x188] sm:$0xff]
  %v788 = vld [vmem:[%s2 + $0x190] sm:$0xff]
  %v789 = vld [vmem:[%s2 + $0x198] sm:$0xff]
  %v790 = vld [vmem:[%s2 + $0x1a0] sm:$0xff]
  %v791 = vld [vmem:[%s2 + $0x1a8] sm:$0xff]
  %v792 = vld [vmem:[%s2 + $0x1b0] sm:$0xff]
  %v793 = vld [vmem:[%s2 + $0x1b8] sm:$0xff]
  %v794 = vld [vmem:[%s2 + $0x1c0] sm:$0xff]
  %v795 = vld [vmem:[%s2 + $0x1c8] sm:$0xff]
  %v796 = vld [vmem:[%s2 + $0x1d0] sm:$0xff]
  %v797 = vld [vmem:[%s2 + $0x1d8] sm:$0xff]
  %v798 = vld [vmem:[%s2 + $0x1e0] sm:$0xff]
  %v799 = vld [vmem:[%s2 + $0x1e8] sm:$0xff]
  %v800 = vld [vmem:[%s2 + $0x1f0] sm:$0xff]
  %v801 = vld [vmem:[%s2 + $0x1f8] sm:$0xff]
  %v802 = vld [vmem:[%s2 + $0x200] sm:$0xff]
  %v803 = vld [vmem:[%s2 + $0x208] sm:$0xff]
  %v804 = vld [vmem:[%s2 + $0x210] sm:$0xff]
  %v805 = vld [vmem:[%s2 + $0x218] sm:$0xff]
  %v806 = vld [vmem:[%s2 + $0x220] sm:$0xff]
  %v807 = vld [vmem:[%s2 + $0x228] sm:$0xff]
  %v808 = vld [vmem:[%s2 + $0x230] sm:$0xff]
  %v809 = vld [vmem:[%s2 + $0x238] sm:$0xff]
  %v810 = vld [vmem:[%s2 + $0x240] sm:$0xff]
  %v811 = vld [vmem:[%s2 + $0x248] sm:$0xff]
  %v812 = vld [vmem:[%s2 + $0x250] sm:$0xff]
  %v813 = vld [vmem:[%s2 + $0x258] sm:$0xff]
  %v814 = vld [vmem:[%s2 + $0x260] sm:$0xff]
  %v815 = vld [vmem:[%s2 + $0x268] sm:$0xff]
  %v816 = vld [vmem:[%s2 + $0x270] sm:$0xff]
  %v817 = vld [vmem:[%s2 + $0x278] sm:$0xff]
  %v818 = vld [vmem:[%s2 + $0x280] sm:$0xff]
  %v819 = vld [vmem:[%s2 + $0x288] sm:$0xff]
  %v820 = vld [vmem:[%s2 + $0x290] sm:$0xff]
  %v821 = vld [vmem:[%s2 + $0x298] sm:$0xff]
  %v822 = vld [vmem:[%s2 + $0x2a0] sm:$0xff]
  %v823 = vld [vmem:[%s2 + $0x2a8] sm:$0xff]
  %v824 = vld [vmem:[%s2 + $0x2b0] sm:$0xff]
  %v825 = vld [vmem:[%s2 + $0x2b8] sm:$0xff]
  %v826 = vld [vmem:[%s2 + $0x2c0] sm:$0xff]
  %v827 = vld [vmem:[%s2 + $0x2c8] sm:$0xff]
  %v828 = vld [vmem:[%s2 + $0x2d0] sm:$0xff]
  %v829 = vld [vmem:[%s2 + $0x2d8] sm:$0xff]
  %v830 = vld [vmem:[%s2 + $0x2e0] sm:$0xff]
  %v831 = vld [vmem:[%s2 + $0x2e8] sm:$0xff]
  %v832 = vld [vmem:[%s2 + $0x2f0] sm:$0xff]
  %v833 = vld [vmem:[%s2 + $0x2f8] sm:$0xff]
  %v834 = vld [vmem:[%s2 + $0x300] sm:$0xff]
  %v835 = vld [vmem:[%s2 + $0x308] sm:$0xff]
  %v836 = vld [vmem:[%s2 + $0x310] sm:$0xff]
  %v837 = vld [vmem:[%s2 + $0x318] sm:$0xff]
  %v838 = vld [vmem:[%s2 + $0x320] sm:$0xff]
  %v839 = vld [vmem:[%s2 + $0x328] sm:$0xff]
  %v840 = vld [vmem:[%s2 + $0x330] sm:$0xff]
  %v841 = vld [vmem:[%s2 + $0x338] sm:$0xff]
  %v842 = vld [vmem:[%s2 + $0x340] sm:$0xff]
  %v843 = vld [vmem:[%s2 + $0x348] sm:$0xff]
  %v844 = vld [vmem:[%s2 + $0x350] sm:$0xff]
  %v845 = vld [vmem:[%s2 + $0x358] sm:$0xff]
  %v846 = vld [vmem:[%s2 + $0x360] sm:$0xff]
  %v847 = vld [vmem:[%s2 + $0x368] sm:$0xff]
  %v848 = vld [vmem:[%s2 + $0x370] sm:$0xff]
  %v849 = vld [vmem:[%s2 + $0x378] sm:$0xff]
  %v850 = vld [vmem:[%s2 + $0x380] sm:$0xff]
  %v851 = vld [vmem:[%s2 + $0x388] sm:$0xff]
  %v852 = vld [vmem:[%s2 + $0x390] sm:$0xff]
  %v853 = vld [vmem:[%s2 + $0x398] sm:$0xff]
  %v854 = vld [vmem:[%s2 + $0x3a0] sm:$0xff]
  %v855 = vld [vmem:[%s2 + $0x3a8] sm:$0xff]
  %v856 = vld [vmem:[%s2 + $0x3b0] sm:$0xff]
  %v857 = vld [vmem:[%s2 + $0x3b8] sm:$0xff]
  %v858 = vld [vmem:[%s2 + $0x3c0] sm:$0xff]
  %v859 = vld [vmem:[%s2 + $0x3c8] sm:$0xff]
  %v860 = vld [vmem:[%s2 + $0x3d0] sm:$0xff]
  %v861 = vld [vmem:[%s2 + $0x3d8] sm:$0xff]
  %v862 = vld [vmem:[%s2 + $0x3e0] sm:$0xff]
  %v863 = vld [vmem:[%s2 + $0x3e8] sm:$0xff]
  %v864 = vld [vmem:[%s2 + $0x3f0] sm:$0xff]
  %v865 = vld [vmem:[%s2 + $0x3f8] sm:$0xff]
  %v866 = vld [vmem:[%s2 + $0x400] sm:$0xff]
  %v867 = vld [vmem:[%s2 + $0x408] sm:$0xff]
  %v868 = vld [vmem:[%s2 + $0x410] sm:$0xff]
  %v869 = vld [vmem:[%s2 + $0x418] sm:$0xff]
  %v870 = vld [vmem:[%s2 + $0x420] sm:$0xff]
  %v871 = vld [vmem:[%s2 + $0x428] sm:$0xff]
  %v872 = vld [vmem:[%s2 + $0x430] sm:$0xff]
  %v873 = vld [vmem:[%s2 + $0x438] sm:$0xff]
  %v874 = vld [vmem:[%s2 + $0x440] sm:$0xff]
  %v875 = vld [vmem:[%s2 + $0x448] sm:$0xff]
  %v876 = vld [vmem:[%s2 + $0x450] sm:$0xff]
  %v877 = vld [vmem:[%s2 + $0x458] sm:$0xff]
  %v878 = vld [vmem:[%s2 + $0x460] sm:$0xff]
  %v879 = vld [vmem:[%s2 + $0x468] sm:$0xff]
  %v880 = vld [vmem:[%s2 + $0x470] sm:$0xff]
  %v881 = vld [vmem:[%s2 + $0x478] sm:$0xff]
  %v882 = vld [vmem:[%s2 + $0x480] sm:$0xff]
  %v883 = vld [vmem:[%s2 + $0x488] sm:$0xff]
  %v884 = vld [vmem:[%s2 + $0x490] sm:$0xff]
  %v885 = vld [vmem:[%s2 + $0x498] sm:$0xff]
  %v886 = vld [vmem:[%s2 + $0x4a0] sm:$0xff]
  %v887 = vld [vmem:[%s2 + $0x4a8] sm:$0xff]
  %v888 = vld [vmem:[%s2 + $0x4b0] sm:$0xff]
  %v889 = vld [vmem:[%s2 + $0x4b8] sm:$0xff]
  %v890 = vld [vmem:[%s2 + $0x4c0] sm:$0xff]
  %v891 = vld [vmem:[%s2 + $0x4c8] sm:$0xff]
  %v892 = vld [vmem:[%s2 + $0x4d0] sm:$0xff]
  %v893 = vld [vmem:[%s2 + $0x4d8] sm:$0xff]
  %v894 = vld [vmem:[%s2 + $0x4e0] sm:$0xff]
  %v895 = vld [vmem:[%s2 + $0x4e8] sm:$0xff]
  %v896 = vld [vmem:[%s2 + $0x4f0] sm:$0xff]
  %v897 = vld [vmem:[%s2 + $0x4f8] sm:$0xff]
  %v898 = vld [vmem:[%s2 + $0x500] sm:$0xff]
  %v899 = vld [vmem:[%s2 + $0x508] sm:$0xff]
  %v900 = vld [vmem:[%s2 + $0x510] sm:$0xff]
  %v901 = vld [vmem:[%s2 + $0x518] sm:$0xff]
  %v902 = vld [vmem:[%s2 + $0x520] sm:$0xff]
  %v903 = vld [vmem:[%s2 + $0x528] sm:$0xff]
  %v904 = vld [vmem:[%s2 + $0x530] sm:$0xff]
  %v905 = vld [vmem:[%s2 + $0x538] sm:$0xff]
  %v906 = vld [vmem:[%s2 + $0x540] sm:$0xff]
  %v907 = vld [vmem:[%s2 + $0x548] sm:$0xff]
  %v908 = vld [vmem:[%s2 + $0x550] sm:$0xff]
  %v909 = vld [vmem:[%s2 + $0x558] sm:$0xff]
  %v910 = vld [vmem:[%s2 + $0x560] sm:$0xff]
  %v911 = vld [vmem:[%s2 + $0x568] sm:$0xff]
  %v912 = vld [vmem:[%s2 + $0x570] sm:$0xff]
  %v913 = vld [vmem:[%s2 + $0x578] sm:$0xff]
  %v914 = vld [vmem:[%s2 + $0x580] sm:$0xff]
  %v915 = vld [vmem:[%s2 + $0x588] sm:$0xff]
  %v916 = vld [vmem:[%s2 + $0x590] sm:$0xff]
  %v917 = vld [vmem:[%s2 + $0x598] sm:$0xff]
  %v918 = vld [vmem:[%s2 + $0x5a0] sm:$0xff]
  %v919 = vld [vmem:[%s2 + $0x5a8] sm:$0xff]
  %v920 = vld [vmem:[%s2 + $0x5b0] sm:$0xff]
  %v921 = vld [vmem:[%s2 + $0x5b8] sm:$0xff]
  %v922 = vld [vmem:[%s2 + $0x5c0] sm:$0xff]
  %v923 = vld [vmem:[%s2 + $0x5c8] sm:$0xff]
  %v924 = vld [vmem:[%s2 + $0x5d0] sm:$0xff]
  %v925 = vld [vmem:[%s2 + $0x5d8] sm:$0xff]
  %v926 = vld [vmem:[%s2 + $0x5e0] sm:$0xff]
  %v927 = vld [vmem:[%s2 + $0x5e8] sm:$0xff]
  %v928 = vld [vmem:[%s2 + $0x5f0] sm:$0xff]
  %v929 = vld [vmem:[%s2 + $0x5f8] sm:$0xff]
  %v930 = vld [vmem:[%s2 + $0x600] sm:$0xff]
  %v931 = vld [vmem:[%s2 + $0x608] sm:$0xff]
  %v932 = vld [vmem:[%s2 + $0x610] sm:$0xff]
  %v933 = vld [vmem:[%s2 + $0x618] sm:$0xff]
  %v934 = vld [vmem:[%s2 + $0x620] sm:$0xff]
  %v935 = vld [vmem:[%s2 + $0x628] sm:$0xff]
  %v936 = vld [vmem:[%s2 + $0x630] sm:$0xff]
  %v937 = vld [vmem:[%s2 + $0x638] sm:$0xff]
  %v938 = vld [vmem:[%s2 + $0x640] sm:$0xff]
  %v939 = vld [vmem:[%s2 + $0x648] sm:$0xff]
  %v940 = vld [vmem:[%s2 + $0x650] sm:$0xff]
  %v941 = vld [vmem:[%s2 + $0x658] sm:$0xff]
  %v942 = vld [vmem:[%s2 + $0x660] sm:$0xff]
  %v943 = vld [vmem:[%s2 + $0x668] sm:$0xff]
  %v944 = vld [vmem:[%s2 + $0x670] sm:$0xff]
  %v945 = vld [vmem:[%s2 + $0x678] sm:$0xff]
  %v946 = vld [vmem:[%s2 + $0x680] sm:$0xff]
  %v947 = vld [vmem:[%s2 + $0x688] sm:$0xff]
  %v948 = vld [vmem:[%s2 + $0x690] sm:$0xff]
  %v949 = vld [vmem:[%s2 + $0x698] sm:$0xff]
  %v950 = vld [vmem:[%s2 + $0x6a0] sm:$0xff]
  %v951 = vld [vmem:[%s2 + $0x6a8] sm:$0xff]
  %v952 = vld [vmem:[%s2 + $0x6b0] sm:$0xff]
  %v953 = vld [vmem:[%s2 + $0x6b8] sm:$0xff]
  %v954 = vld [vmem:[%s2 + $0x6c0] sm:$0xff]
  %v955 = vld [vmem:[%s2 + $0x6c8] sm:$0xff]
  %v956 = vld [vmem:[%s2 + $0x6d0] sm:$0xff]
  %v957 = vld [vmem:[%s2 + $0x6d8] sm:$0xff]
  %v958 = vld [vmem:[%s2 + $0x6e0] sm:$0xff]
  %v959 = vld [vmem:[%s2 + $0x6e8] sm:$0xff]
  %v960 = vld [vmem:[%s2 + $0x6f0] sm:$0xff]
  %v961 = vld [vmem:[%s2 + $0x6f8] sm:$0xff]
  %v962 = vld [vmem:[%s2 + $0x700] sm:$0xff]
  %v963 = vld [vmem:[%s2 + $0x708] sm:$0xff]
  %v964 = vld [vmem:[%s2 + $0x710] sm:$0xff]
  %v965 = vld [vmem:[%s2 + $0x718] sm:$0xff]
  %v966 = vld [vmem:[%s2 + $0x720] sm:$0xff]
  %v967 = vld [vmem:[%s2 + $0x728] sm:$0xff]
  %v968 = vld [vmem:[%s2 + $0x730] sm:$0xff]
  %v969 = vld [vmem:[%s2 + $0x738] sm:$0xff]
  %v970 = vld [vmem:[%s2 + $0x740] sm:$0xff]
  %v971 = vld [vmem:[%s2 + $0x748] sm:$0xff]
  %v972 = vld [vmem:[%s2 + $0x750] sm:$0xff]
  %v973 = vld [vmem:[%s2 + $0x758] sm:$0xff]
  %v974 = vld [vmem:[%s2 + $0x760] sm:$0xff]
  %v975 = vld [vmem:[%s2 + $0x768] sm:$0xff]
  %v976 = vld [vmem:[%s2 + $0x770] sm:$0xff]
  %v977 = vld [vmem:[%s2 + $0x778] sm:$0xff]
  %v978 = vld [vmem:[%s2 + $0x780] sm:$0xff]
  %v979 = vld [vmem:[%s2 + $0x788] sm:$0xff]
  %v980 = vld [vmem:[%s2 + $0x790] sm:$0xff]
  %v981 = vld [vmem:[%s2 + $0x798] sm:$0xff]
  %v982 = vld [vmem:[%s2 + $0x7a0] sm:$0xff]
  %v983 = vld [vmem:[%s2 + $0x7a8] sm:$0xff]
  %v984 = vld [vmem:[%s2 + $0x7b0] sm:$0xff]
  %v985 = vld [vmem:[%s2 + $0x7b8] sm:$0xff]
  %v986 = vld [vmem:[%s2 + $0x7c0] sm:$0xff]
  %v987 = vld [vmem:[%s2 + $0x7c8] sm:$0xff]
  %v988 = vld [vmem:[%s2 + $0x7d0] sm:$0xff]
  %v989 = vld [vmem:[%s2 + $0x7d8] sm:$0xff]
  %v990 = vld [vmem:[%s2 + $0x7e0] sm:$0xff]
  %v991 = vld [vmem:[%s2 + $0x7e8] sm:$0xff]
  %v992 = vld [vmem:[%s2 + $0x7f0] sm:$0xff]
  %v993 = vld [vmem:[%s2 + $0x7f8] sm:$0xff]
  %v994 = vld [vmem:[%s2 + $0x800] sm:$0xff]
  %v995 = vld [vmem:[%s2 + $0x808] sm:$0xff]
  %v996 = vld [vmem:[%s2 + $0x810] sm:$0xff]
  %v997 = vld [vmem:[%s2 + $0x818] sm:$0xff]
  %v998 = vld [vmem:[%s2 + $0x820] sm:$0xff]
  %v999 = vld [vmem:[%s2 + $0x828] sm:$0xff]
  %v1000 = vld [vmem:[%s2 + $0x830] sm:$0xff]
  %v1001 = vld [vmem:[%s2 + $0x838] sm:$0xff]
  %v1002 = vld [vmem:[%s2 + $0x840] sm:$0xff]
  %v1003 = vld [vmem:[%s2 + $0x848] sm:$0xff]
  %v1004 = vld [vmem:[%s2 + $0x850] sm:$0xff]
  %v1005 = vld [vmem:[%s2 + $0x858] sm:$0xff]
  %v1006 = vld [vmem:[%s2 + $0x860] sm:$0xff]
  %v1007 = vld [vmem:[%s2 + $0x868] sm:$0xff]
  %v1008 = vpack.c.bf16 %v560, %v558
  %v1009 = vpack.c.bf16 %v561, %v559
  %v1010 = vpack.c.bf16 %v564, %v562
  %v1011 = vpack.c.bf16 %v565, %v563
  %v1012 = vpack.c.bf16 %v568, %v566
  %v1013 = vpack.c.bf16 %v569, %v567
  %v1014 = vpack.c.bf16 %v572, %v570
  %v1015 = vpack.c.bf16 %v573, %v571
  %v1016 = vpack.c.bf16 %v576, %v574
  %v1017 = vpack.c.bf16 %v577, %v575
  %v1018 = vpack.c.bf16 %v580, %v578
  %v1019 = vpack.c.bf16 %v581, %v579
  %v1020 = vpack.c.bf16 %v584, %v582
  %v1021 = vpack.c.bf16 %v585, %v583
  %v1022 = vpack.c.bf16 %v588, %v586
  %v1023 = vpack.c.bf16 %v589, %v587
  %v1024 = vpack.c.bf16 %v592, %v590
  %v1025 = vpack.c.bf16 %v593, %v591
  %v1026 = vpack.c.bf16 %v596, %v594
  %v1027 = vpack.c.bf16 %v597, %v595
  %v1028 = vpack.c.bf16 %v600, %v598
  %v1029 = vpack.c.bf16 %v601, %v599
  %v1030 = vpack.c.bf16 %v604, %v602
  %v1031 = vpack.c.bf16 %v605, %v603
  %v1032 = vpack.c.bf16 %v608, %v606
  %v1033 = vpack.c.bf16 %v609, %v607
  %v1034 = vpack.c.bf16 %v612, %v610
  %v1035 = vpack.c.bf16 %v613, %v611
  %v1036 = vpack.c.bf16 %v616, %v614
  %v1037 = vpack.c.bf16 %v617, %v615
  %v1038 = vpack.c.bf16 %v620, %v618
  %v1039 = vpack.c.bf16 %v621, %v619
  %v1040 = vpack.c.bf16 %v624, %v622
  %v1041 = vpack.c.bf16 %v625, %v623
  %v1042 = vpack.c.bf16 %v628, %v626
  %v1043 = vpack.c.bf16 %v629, %v627
  %v1044 = vpack.c.bf16 %v632, %v630
  %v1045 = vpack.c.bf16 %v633, %v631
  %v1046 = vpack.c.bf16 %v636, %v634
  %v1047 = vpack.c.bf16 %v637, %v635
  %v1048 = vpack.c.bf16 %v640, %v638
  %v1049 = vpack.c.bf16 %v641, %v639
  %v1050 = vpack.c.bf16 %v644, %v642
  %v1051 = vpack.c.bf16 %v645, %v643
  %v1052 = vpack.c.bf16 %v648, %v646
  %v1053 = vpack.c.bf16 %v649, %v647
  %v1054 = vpack.c.bf16 %v652, %v650
  %v1055 = vpack.c.bf16 %v653, %v651
  %v1056 = vpack.c.bf16 %v656, %v654
  %v1057 = vpack.c.bf16 %v657, %v655
  %v1058 = vpack.c.bf16 %v660, %v658
  %v1059 = vpack.c.bf16 %v661, %v659
  %v1060 = vpack.c.bf16 %v664, %v662
  %v1061 = vpack.c.bf16 %v665, %v663
  %v1062 = vpack.c.bf16 %v668, %v666
  %v1063 = vpack.c.bf16 %v669, %v667
  %v1064 = vpack.c.bf16 %v672, %v670
  %v1065 = vpack.c.bf16 %v673, %v671
  %v1066 = vpack.c.bf16 %v676, %v674
  %v1067 = vpack.c.bf16 %v677, %v675
  %v1068 = vpack.c.bf16 %v680, %v678
  %v1069 = vpack.c.bf16 %v681, %v679
  %v1070 = vpack.c.bf16 %v684, %v682
  %v1071 = vpack.c.bf16 %v685, %v683
  %v1072 = vpack.c.bf16 %v688, %v686
  %v1073 = vpack.c.bf16 %v689, %v687
  %v1074 = vpack.c.bf16 %v692, %v690
  %v1075 = vpack.c.bf16 %v693, %v691
  %v1076 = vpack.c.bf16 %v696, %v694
  %v1077 = vpack.c.bf16 %v697, %v695
  %v1078 = vpack.c.bf16 %v700, %v698
  %v1079 = vpack.c.bf16 %v701, %v699
  %v1080 = vpack.c.bf16 %v704, %v702
  %v1081 = vpack.c.bf16 %v705, %v703
  %v1082 = vpack.c.bf16 %v708, %v706
  %v1083 = vpack.c.bf16 %v709, %v707
  %v1084 = vpack.c.bf16 %v712, %v710
  %v1085 = vpack.c.bf16 %v713, %v711
  %v1086 = vpack.c.bf16 %v716, %v714
  %v1087 = vpack.c.bf16 %v717, %v715
  %v1088 = vpack.c.bf16 %v720, %v718
  %v1089 = vpack.c.bf16 %v721, %v719
  %v1090 = vpack.c.bf16 %v724, %v722
  %v1091 = vpack.c.bf16 %v725, %v723
  %v1092 = vpack.c.bf16 %v728, %v726
  %v1093 = vpack.c.bf16 %v729, %v727
  %v1094 = vpack.c.bf16 %v732, %v730
  %v1095 = vpack.c.bf16 %v733, %v731
  %v1096 = vpack.c.bf16 %v736, %v734
  %v1097 = vpack.c.bf16 %v737, %v735
  %v1368 = vunpack.c.l.b16 %v738
  %v1369 = vunpack.c.h.b16 %v738
  %v1370 = vunpack.c.l.b16 %v739
  %v1371 = vunpack.c.h.b16 %v739
  %v1372 = vunpack.c.l.b16 %v740
  %v1373 = vunpack.c.h.b16 %v740
  %v1374 = vunpack.c.l.b16 %v741
  %v1375 = vunpack.c.h.b16 %v741
  %v1376 = vunpack.c.l.b16 %v742
  %v1377 = vunpack.c.h.b16 %v742
  %v1378 = vunpack.c.l.b16 %v743
  %v1379 = vunpack.c.h.b16 %v743
  %v1380 = vunpack.c.l.b16 %v744
  %v1381 = vunpack.c.h.b16 %v744
  %v1382 = vunpack.c.l.b16 %v745
  %v1383 = vunpack.c.h.b16 %v745
  %v1384 = vunpack.c.l.b16 %v746
  %v1385 = vunpack.c.h.b16 %v746
  %v1386 = vunpack.c.l.b16 %v747
  %v1387 = vunpack.c.h.b16 %v747
  %v1388 = vunpack.c.l.b16 %v748
  %v1389 = vunpack.c.h.b16 %v748
  %v1390 = vunpack.c.l.b16 %v749
  %v1391 = vunpack.c.h.b16 %v749
  %v1392 = vunpack.c.l.b16 %v750
  %v1393 = vunpack.c.h.b16 %v750
  %v1394 = vunpack.c.l.b16 %v751
  %v1395 = vunpack.c.h.b16 %v751
  %v1396 = vunpack.c.l.b16 %v752
  %v1397 = vunpack.c.h.b16 %v752
  %v1398 = vunpack.c.l.b16 %v753
  %v1399 = vunpack.c.h.b16 %v753
  %v1400 = vunpack.c.l.b16 %v754
  %v1401 = vunpack.c.h.b16 %v754
  %v1402 = vunpack.c.l.b16 %v755
  %v1403 = vunpack.c.h.b16 %v755
  %v1404 = vunpack.c.l.b16 %v756
  %v1405 = vunpack.c.h.b16 %v756
  %v1406 = vunpack.c.l.b16 %v757
  %v1407 = vunpack.c.h.b16 %v757
  %v1408 = vunpack.c.l.b16 %v758
  %v1409 = vunpack.c.h.b16 %v758
  %v1410 = vunpack.c.l.b16 %v759
  %v1411 = vunpack.c.h.b16 %v759
  %v1412 = vunpack.c.l.b16 %v760
  %v1413 = vunpack.c.h.b16 %v760
  %v1414 = vunpack.c.l.b16 %v761
  %v1415 = vunpack.c.h.b16 %v761
  %v1416 = vunpack.c.l.b16 %v762
  %v1417 = vunpack.c.h.b16 %v762
  %v1418 = vunpack.c.l.b16 %v763
  %v1419 = vunpack.c.h.b16 %v763
  %v1420 = vunpack.c.l.b16 %v764
  %v1421 = vunpack.c.h.b16 %v764
  %v1422 = vunpack.c.l.b16 %v765
  %v1423 = vunpack.c.h.b16 %v765
  %v1424 = vunpack.c.l.b16 %v766
  %v1425 = vunpack.c.h.b16 %v766
  %v1426 = vunpack.c.l.b16 %v767
  %v1427 = vunpack.c.h.b16 %v767
  %v1428 = vunpack.c.l.b16 %v768
  %v1429 = vunpack.c.h.b16 %v768
  %v1430 = vunpack.c.l.b16 %v769
  %v1431 = vunpack.c.h.b16 %v769
  %v1432 = vunpack.c.l.b16 %v770
  %v1433 = vunpack.c.h.b16 %v770
  %v1434 = vunpack.c.l.b16 %v771
  %v1435 = vunpack.c.h.b16 %v771
  %v1436 = vunpack.c.l.b16 %v772
  %v1437 = vunpack.c.h.b16 %v772
  %v1438 = vunpack.c.l.b16 %v773
  %v1439 = vunpack.c.h.b16 %v773
  %v1440 = vunpack.c.l.b16 %v774
  %v1441 = vunpack.c.h.b16 %v774
  %v1442 = vunpack.c.l.b16 %v775
  %v1443 = vunpack.c.h.b16 %v775
  %v1444 = vunpack.c.l.b16 %v776
  %v1445 = vunpack.c.h.b16 %v776
  %v1446 = vunpack.c.l.b16 %v777
  %v1447 = vunpack.c.h.b16 %v777
  %v1448 = vunpack.c.l.b16 %v778
  %v1449 = vunpack.c.h.b16 %v778
  %v1450 = vunpack.c.l.b16 %v779
  %v1451 = vunpack.c.h.b16 %v779
  %v1452 = vunpack.c.l.b16 %v780
  %v1453 = vunpack.c.h.b16 %v780
  %v1454 = vunpack.c.l.b16 %v781
  %v1455 = vunpack.c.h.b16 %v781
  %v1456 = vunpack.c.l.b16 %v782
  %v1457 = vunpack.c.h.b16 %v782
  %v1458 = vunpack.c.l.b16 %v783
  %v1459 = vunpack.c.h.b16 %v783
  %v1460 = vunpack.c.l.b16 %v784
  %v1461 = vunpack.c.h.b16 %v784
  %v1462 = vunpack.c.l.b16 %v785
  %v1463 = vunpack.c.h.b16 %v785
  %v1464 = vunpack.c.l.b16 %v786
  %v1465 = vunpack.c.h.b16 %v786
  %v1466 = vunpack.c.l.b16 %v787
  %v1467 = vunpack.c.h.b16 %v787
  %v1468 = vunpack.c.l.b16 %v788
  %v1469 = vunpack.c.h.b16 %v788
  %v1470 = vunpack.c.l.b16 %v789
  %v1471 = vunpack.c.h.b16 %v789
  %v1472 = vunpack.c.l.b16 %v790
  %v1473 = vunpack.c.h.b16 %v790
  %v1474 = vunpack.c.l.b16 %v791
  %v1475 = vunpack.c.h.b16 %v791
  %v1476 = vunpack.c.l.b16 %v792
  %v1477 = vunpack.c.h.b16 %v792
  %v1478 = vunpack.c.l.b16 %v793
  %v1479 = vunpack.c.h.b16 %v793
  %v1480 = vunpack.c.l.b16 %v794
  %v1481 = vunpack.c.h.b16 %v794
  %v1482 = vunpack.c.l.b16 %v795
  %v1483 = vunpack.c.h.b16 %v795
  %v1484 = vunpack.c.l.b16 %v796
  %v1485 = vunpack.c.h.b16 %v796
  %v1486 = vunpack.c.l.b16 %v797
  %v1487 = vunpack.c.h.b16 %v797
  %v1488 = vunpack.c.l.b16 %v798
  %v1489 = vunpack.c.h.b16 %v798
  %v1490 = vunpack.c.l.b16 %v799
  %v1491 = vunpack.c.h.b16 %v799
  %v1492 = vunpack.c.l.b16 %v800
  %v1493 = vunpack.c.h.b16 %v800
  %v1494 = vunpack.c.l.b16 %v801
  %v1495 = vunpack.c.h.b16 %v801
  %v1496 = vunpack.c.l.b16 %v802
  %v1497 = vunpack.c.h.b16 %v802
  %v1498 = vunpack.c.l.b16 %v803
  %v1499 = vunpack.c.h.b16 %v803
  %v1500 = vunpack.c.l.b16 %v804
  %v1501 = vunpack.c.h.b16 %v804
  %v1502 = vunpack.c.l.b16 %v805
  %v1503 = vunpack.c.h.b16 %v805
  %v1504 = vunpack.c.l.b16 %v806
  %v1505 = vunpack.c.h.b16 %v806
  %v1506 = vunpack.c.l.b16 %v807
  %v1507 = vunpack.c.h.b16 %v807
  %v1508 = vunpack.c.l.b16 %v808
  %v1509 = vunpack.c.h.b16 %v808
  %v1510 = vunpack.c.l.b16 %v809
  %v1511 = vunpack.c.h.b16 %v809
  %v1512 = vunpack.c.l.b16 %v810
  %v1513 = vunpack.c.h.b16 %v810
  %v1514 = vunpack.c.l.b16 %v811
  %v1515 = vunpack.c.h.b16 %v811
  %v1516 = vunpack.c.l.b16 %v812
  %v1517 = vunpack.c.h.b16 %v812
  %v1518 = vunpack.c.l.b16 %v813
  %v1519 = vunpack.c.h.b16 %v813
  %v1520 = vunpack.c.l.b16 %v814
  %v1521 = vunpack.c.h.b16 %v814
  %v1522 = vunpack.c.l.b16 %v815
  %v1523 = vunpack.c.h.b16 %v815
  %v1524 = vunpack.c.l.b16 %v816
  %v1525 = vunpack.c.h.b16 %v816
  %v1526 = vunpack.c.l.b16 %v817
  %v1527 = vunpack.c.h.b16 %v817
  %v1528 = vunpack.c.l.b16 %v818
  %v1529 = vunpack.c.h.b16 %v818
  %v1530 = vunpack.c.l.b16 %v819
  %v1531 = vunpack.c.h.b16 %v819
  %v1532 = vunpack.c.l.b16 %v820
  %v1533 = vunpack.c.h.b16 %v820
  %v1534 = vunpack.c.l.b16 %v821
  %v1535 = vunpack.c.h.b16 %v821
  %v1536 = vunpack.c.l.b16 %v822
  %v1537 = vunpack.c.h.b16 %v822
  %v1538 = vunpack.c.l.b16 %v823
  %v1539 = vunpack.c.h.b16 %v823
  %v1540 = vunpack.c.l.b16 %v824
  %v1541 = vunpack.c.h.b16 %v824
  %v1542 = vunpack.c.l.b16 %v825
  %v1543 = vunpack.c.h.b16 %v825
  %v1544 = vunpack.c.l.b16 %v826
  %v1545 = vunpack.c.h.b16 %v826
  %v1546 = vunpack.c.l.b16 %v827
  %v1547 = vunpack.c.h.b16 %v827
  %v1548 = vunpack.c.l.b16 %v828
  %v1549 = vunpack.c.h.b16 %v828
  %v1550 = vunpack.c.l.b16 %v829
  %v1551 = vunpack.c.h.b16 %v829
  %v1552 = vunpack.c.l.b16 %v830
  %v1553 = vunpack.c.h.b16 %v830
  %v1554 = vunpack.c.l.b16 %v831
  %v1555 = vunpack.c.h.b16 %v831
  %v1556 = vunpack.c.l.b16 %v832
  %v1557 = vunpack.c.h.b16 %v832
  %v1558 = vunpack.c.l.b16 %v833
  %v1559 = vunpack.c.h.b16 %v833
  %v1560 = vunpack.c.l.b16 %v834
  %v1561 = vunpack.c.h.b16 %v834
  %v1562 = vunpack.c.l.b16 %v835
  %v1563 = vunpack.c.h.b16 %v835
  %v1564 = vunpack.c.l.b16 %v836
  %v1565 = vunpack.c.h.b16 %v836
  %v1566 = vunpack.c.l.b16 %v837
  %v1567 = vunpack.c.h.b16 %v837
  %v1568 = vunpack.c.l.b16 %v838
  %v1569 = vunpack.c.h.b16 %v838
  %v1570 = vunpack.c.l.b16 %v839
  %v1571 = vunpack.c.h.b16 %v839
  %v1572 = vunpack.c.l.b16 %v840
  %v1573 = vunpack.c.h.b16 %v840
  %v1574 = vunpack.c.l.b16 %v841
  %v1575 = vunpack.c.h.b16 %v841
  %v1576 = vunpack.c.l.b16 %v842
  %v1577 = vunpack.c.h.b16 %v842
  %v1578 = vunpack.c.l.b16 %v843
  %v1579 = vunpack.c.h.b16 %v843
  %v1580 = vunpack.c.l.b16 %v844
  %v1581 = vunpack.c.h.b16 %v844
  %v1582 = vunpack.c.l.b16 %v845
  %v1583 = vunpack.c.h.b16 %v845
  %v1584 = vunpack.c.l.b16 %v846
  %v1585 = vunpack.c.h.b16 %v846
  %v1586 = vunpack.c.l.b16 %v847
  %v1587 = vunpack.c.h.b16 %v847
  %v1588 = vunpack.c.l.b16 %v848
  %v1589 = vunpack.c.h.b16 %v848
  %v1590 = vunpack.c.l.b16 %v849
  %v1591 = vunpack.c.h.b16 %v849
  %v1592 = vunpack.c.l.b16 %v850
  %v1593 = vunpack.c.h.b16 %v850
  %v1594 = vunpack.c.l.b16 %v851
  %v1595 = vunpack.c.h.b16 %v851
  %v1596 = vunpack.c.l.b16 %v852
  %v1597 = vunpack.c.h.b16 %v852
  %v1598 = vunpack.c.l.b16 %v853
  %v1599 = vunpack.c.h.b16 %v853
  %v1600 = vunpack.c.l.b16 %v854
  %v1601 = vunpack.c.h.b16 %v854
  %v1602 = vunpack.c.l.b16 %v855
  %v1603 = vunpack.c.h.b16 %v855
  %v1604 = vunpack.c.l.b16 %v856
  %v1605 = vunpack.c.h.b16 %v856
  %v1606 = vunpack.c.l.b16 %v857
  %v1607 = vunpack.c.h.b16 %v857
  %v1608 = vunpack.c.l.b16 %v858
  %v1609 = vunpack.c.h.b16 %v858
  %v1610 = vunpack.c.l.b16 %v859
  %v1611 = vunpack.c.h.b16 %v859
  %v1612 = vunpack.c.l.b16 %v860
  %v1613 = vunpack.c.h.b16 %v860
  %v1614 = vunpack.c.l.b16 %v861
  %v1615 = vunpack.c.h.b16 %v861
  %v1616 = vunpack.c.l.b16 %v862
  %v1617 = vunpack.c.h.b16 %v862
  %v1618 = vunpack.c.l.b16 %v863
  %v1619 = vunpack.c.h.b16 %v863
  %v1620 = vunpack.c.l.b16 %v864
  %v1621 = vunpack.c.h.b16 %v864
  %v1622 = vunpack.c.l.b16 %v865
  %v1623 = vunpack.c.h.b16 %v865
  %v1624 = vunpack.c.l.b16 %v866
  %v1625 = vunpack.c.h.b16 %v866
  %v1626 = vunpack.c.l.b16 %v867
  %v1627 = vunpack.c.h.b16 %v867
  %v1628 = vunpack.c.l.b16 %v868
  %v1629 = vunpack.c.h.b16 %v868
  %v1630 = vunpack.c.l.b16 %v869
  %v1631 = vunpack.c.h.b16 %v869
  %v1632 = vunpack.c.l.b16 %v870
  %v1633 = vunpack.c.h.b16 %v870
  %v1634 = vunpack.c.l.b16 %v871
  %v1635 = vunpack.c.h.b16 %v871
  %v1636 = vunpack.c.l.b16 %v872
  %v1637 = vunpack.c.h.b16 %v872
  %v1638 = vunpack.c.l.b16 %v873
  %v1639 = vunpack.c.h.b16 %v873
  %v1640 = vunpack.c.l.b16 %v874
  %v1641 = vunpack.c.h.b16 %v874
  %v1642 = vunpack.c.l.b16 %v875
  %v1643 = vunpack.c.h.b16 %v875
  %v1644 = vunpack.c.l.b16 %v876
  %v1645 = vunpack.c.h.b16 %v876
  %v1646 = vunpack.c.l.b16 %v877
  %v1647 = vunpack.c.h.b16 %v877
  %v1648 = vunpack.c.l.b16 %v878
  %v1649 = vunpack.c.h.b16 %v878
  %v1650 = vunpack.c.l.b16 %v879
  %v1651 = vunpack.c.h.b16 %v879
  %v1652 = vunpack.c.l.b16 %v880
  %v1653 = vunpack.c.h.b16 %v880
  %v1654 = vunpack.c.l.b16 %v881
  %v1655 = vunpack.c.h.b16 %v881
  %v1656 = vunpack.c.l.b16 %v882
  %v1657 = vunpack.c.h.b16 %v882
  %v1658 = vunpack.c.l.b16 %v883
  %v1659 = vunpack.c.h.b16 %v883
  %v1660 = vunpack.c.l.b16 %v884
  %v1661 = vunpack.c.h.b16 %v884
  %v1662 = vunpack.c.l.b16 %v885
  %v1663 = vunpack.c.h.b16 %v885
  %v1664 = vunpack.c.l.b16 %v886
  %v1665 = vunpack.c.h.b16 %v886
  %v1666 = vunpack.c.l.b16 %v887
  %v1667 = vunpack.c.h.b16 %v887
  %v1668 = vunpack.c.l.b16 %v888
  %v1669 = vunpack.c.h.b16 %v888
  %v1670 = vunpack.c.l.b16 %v889
  %v1671 = vunpack.c.h.b16 %v889
  %v1672 = vunpack.c.l.b16 %v890
  %v1673 = vunpack.c.h.b16 %v890
  %v1674 = vunpack.c.l.b16 %v891
  %v1675 = vunpack.c.h.b16 %v891
  %v1676 = vunpack.c.l.b16 %v892
  %v1677 = vunpack.c.h.b16 %v892
  %v1678 = vunpack.c.l.b16 %v893
  %v1679 = vunpack.c.h.b16 %v893
  %v1680 = vunpack.c.l.b16 %v894
  %v1681 = vunpack.c.h.b16 %v894
  %v1682 = vunpack.c.l.b16 %v895
  %v1683 = vunpack.c.h.b16 %v895
  %v1684 = vunpack.c.l.b16 %v896
  %v1685 = vunpack.c.h.b16 %v896
  %v1686 = vunpack.c.l.b16 %v897
  %v1687 = vunpack.c.h.b16 %v897
  %v1688 = vunpack.c.l.b16 %v898
  %v1689 = vunpack.c.h.b16 %v898
  %v1690 = vunpack.c.l.b16 %v899
  %v1691 = vunpack.c.h.b16 %v899
  %v1692 = vunpack.c.l.b16 %v900
  %v1693 = vunpack.c.h.b16 %v900
  %v1694 = vunpack.c.l.b16 %v901
  %v1695 = vunpack.c.h.b16 %v901
  %v1696 = vunpack.c.l.b16 %v902
  %v1697 = vunpack.c.h.b16 %v902
  %v1698 = vunpack.c.l.b16 %v903
  %v1699 = vunpack.c.h.b16 %v903
  %v1700 = vunpack.c.l.b16 %v904
  %v1701 = vunpack.c.h.b16 %v904
  %v1702 = vunpack.c.l.b16 %v905
  %v1703 = vunpack.c.h.b16 %v905
  %v1704 = vunpack.c.l.b16 %v906
  %v1705 = vunpack.c.h.b16 %v906
  %v1706 = vunpack.c.l.b16 %v907
  %v1707 = vunpack.c.h.b16 %v907
  %v1708 = vunpack.c.l.b16 %v908
  %v1709 = vunpack.c.h.b16 %v908
  %v1710 = vunpack.c.l.b16 %v909
  %v1711 = vunpack.c.h.b16 %v909
  %v1712 = vunpack.c.l.b16 %v910
  %v1713 = vunpack.c.h.b16 %v910
  %v1714 = vunpack.c.l.b16 %v911
  %v1715 = vunpack.c.h.b16 %v911
  %v1716 = vunpack.c.l.b16 %v912
  %v1717 = vunpack.c.h.b16 %v912
  %v1718 = vunpack.c.l.b16 %v913
  %v1719 = vunpack.c.h.b16 %v913
  %v1720 = vunpack.c.l.b16 %v914
  %v1721 = vunpack.c.h.b16 %v914
  %v1722 = vunpack.c.l.b16 %v915
  %v1723 = vunpack.c.h.b16 %v915
  %v1724 = vunpack.c.l.b16 %v916
  %v1725 = vunpack.c.h.b16 %v916
  %v1726 = vunpack.c.l.b16 %v917
  %v1727 = vunpack.c.h.b16 %v917
  %v1728 = vunpack.c.l.b16 %v918
  %v1729 = vunpack.c.h.b16 %v918
  %v1730 = vunpack.c.l.b16 %v919
  %v1731 = vunpack.c.h.b16 %v919
  %v1732 = vunpack.c.l.b16 %v920
  %v1733 = vunpack.c.h.b16 %v920
  %v1734 = vunpack.c.l.b16 %v921
  %v1735 = vunpack.c.h.b16 %v921
  %v1736 = vunpack.c.l.b16 %v922
  %v1737 = vunpack.c.h.b16 %v922
  %v1738 = vunpack.c.l.b16 %v923
  %v1739 = vunpack.c.h.b16 %v923
  %v1740 = vunpack.c.l.b16 %v924
  %v1741 = vunpack.c.h.b16 %v924
  %v1742 = vunpack.c.l.b16 %v925
  %v1743 = vunpack.c.h.b16 %v925
  %v1744 = vunpack.c.l.b16 %v926
  %v1745 = vunpack.c.h.b16 %v926
  %v1746 = vunpack.c.l.b16 %v927
  %v1747 = vunpack.c.h.b16 %v927
  %v1748 = vunpack.c.l.b16 %v928
  %v1749 = vunpack.c.h.b16 %v928
  %v1750 = vunpack.c.l.b16 %v929
  %v1751 = vunpack.c.h.b16 %v929
  %v1752 = vunpack.c.l.b16 %v930
  %v1753 = vunpack.c.h.b16 %v930
  %v1754 = vunpack.c.l.b16 %v931
  %v1755 = vunpack.c.h.b16 %v931
  %v1756 = vunpack.c.l.b16 %v932
  %v1757 = vunpack.c.h.b16 %v932
  %v1758 = vunpack.c.l.b16 %v933
  %v1759 = vunpack.c.h.b16 %v933
  %v1760 = vunpack.c.l.b16 %v934
  %v1761 = vunpack.c.h.b16 %v934
  %v1762 = vunpack.c.l.b16 %v935
  %v1763 = vunpack.c.h.b16 %v935
  %v1764 = vunpack.c.l.b16 %v936
  %v1765 = vunpack.c.h.b16 %v936
  %v1766 = vunpack.c.l.b16 %v937
  %v1767 = vunpack.c.h.b16 %v937
  %v1768 = vunpack.c.l.b16 %v938
  %v1769 = vunpack.c.h.b16 %v938
  %v1770 = vunpack.c.l.b16 %v939
  %v1771 = vunpack.c.h.b16 %v939
  %v1772 = vunpack.c.l.b16 %v940
  %v1773 = vunpack.c.h.b16 %v940
  %v1774 = vunpack.c.l.b16 %v941
  %v1775 = vunpack.c.h.b16 %v941
  %v1776 = vunpack.c.l.b16 %v942
  %v1777 = vunpack.c.h.b16 %v942
  %v1778 = vunpack.c.l.b16 %v943
  %v1779 = vunpack.c.h.b16 %v943
  %v1780 = vunpack.c.l.b16 %v944
  %v1781 = vunpack.c.h.b16 %v944
  %v1782 = vunpack.c.l.b16 %v945
  %v1783 = vunpack.c.h.b16 %v945
  %v1784 = vunpack.c.l.b16 %v946
  %v1785 = vunpack.c.h.b16 %v946
  %v1786 = vunpack.c.l.b16 %v947
  %v1787 = vunpack.c.h.b16 %v947
  %v1788 = vunpack.c.l.b16 %v948
  %v1789 = vunpack.c.h.b16 %v948
  %v1790 = vunpack.c.l.b16 %v949
  %v1791 = vunpack.c.h.b16 %v949
  %v1792 = vunpack.c.l.b16 %v950
  %v1793 = vunpack.c.h.b16 %v950
  %v1794 = vunpack.c.l.b16 %v951
  %v1795 = vunpack.c.h.b16 %v951
  %v1796 = vunpack.c.l.b16 %v952
  %v1797 = vunpack.c.h.b16 %v952
  %v1798 = vunpack.c.l.b16 %v953
  %v1799 = vunpack.c.h.b16 %v953
  %v1800 = vunpack.c.l.b16 %v954
  %v1801 = vunpack.c.h.b16 %v954
  %v1802 = vunpack.c.l.b16 %v955
  %v1803 = vunpack.c.h.b16 %v955
  %v1804 = vunpack.c.l.b16 %v956
  %v1805 = vunpack.c.h.b16 %v956
  %v1806 = vunpack.c.l.b16 %v957
  %v1807 = vunpack.c.h.b16 %v957
  %v1808 = vunpack.c.l.b16 %v958
  %v1809 = vunpack.c.h.b16 %v958
  %v1810 = vunpack.c.l.b16 %v959
  %v1811 = vunpack.c.h.b16 %v959
  %v1812 = vunpack.c.l.b16 %v960
  %v1813 = vunpack.c.h.b16 %v960
  %v1814 = vunpack.c.l.b16 %v961
  %v1815 = vunpack.c.h.b16 %v961
  %v1816 = vunpack.c.l.b16 %v962
  %v1817 = vunpack.c.h.b16 %v962
  %v1818 = vunpack.c.l.b16 %v963
  %v1819 = vunpack.c.h.b16 %v963
  %v1820 = vunpack.c.l.b16 %v964
  %v1821 = vunpack.c.h.b16 %v964
  %v1822 = vunpack.c.l.b16 %v965
  %v1823 = vunpack.c.h.b16 %v965
  %v1824 = vunpack.c.l.b16 %v966
  %v1825 = vunpack.c.h.b16 %v966
  %v1826 = vunpack.c.l.b16 %v967
  %v1827 = vunpack.c.h.b16 %v967
  %v1828 = vunpack.c.l.b16 %v968
  %v1829 = vunpack.c.h.b16 %v968
  %v1830 = vunpack.c.l.b16 %v969
  %v1831 = vunpack.c.h.b16 %v969
  %v1832 = vunpack.c.l.b16 %v970
  %v1833 = vunpack.c.h.b16 %v970
  %v1834 = vunpack.c.l.b16 %v971
  %v1835 = vunpack.c.h.b16 %v971
  %v1836 = vunpack.c.l.b16 %v972
  %v1837 = vunpack.c.h.b16 %v972
  %v1838 = vunpack.c.l.b16 %v973
  %v1839 = vunpack.c.h.b16 %v973
  %v1840 = vunpack.c.l.b16 %v974
  %v1841 = vunpack.c.h.b16 %v974
  %v1842 = vunpack.c.l.b16 %v975
  %v1843 = vunpack.c.h.b16 %v975
  %v1844 = vunpack.c.l.b16 %v976
  %v1845 = vunpack.c.h.b16 %v976
  %v1846 = vunpack.c.l.b16 %v977
  %v1847 = vunpack.c.h.b16 %v977
  %v1848 = vunpack.c.l.b16 %v978
  %v1849 = vunpack.c.h.b16 %v978
  %v1850 = vunpack.c.l.b16 %v979
  %v1851 = vunpack.c.h.b16 %v979
  %v1852 = vunpack.c.l.b16 %v980
  %v1853 = vunpack.c.h.b16 %v980
  %v1854 = vunpack.c.l.b16 %v981
  %v1855 = vunpack.c.h.b16 %v981
  %v1856 = vunpack.c.l.b16 %v982
  %v1857 = vunpack.c.h.b16 %v982
  %v1858 = vunpack.c.l.b16 %v983
  %v1859 = vunpack.c.h.b16 %v983
  %v1860 = vunpack.c.l.b16 %v984
  %v1861 = vunpack.c.h.b16 %v984
  %v1862 = vunpack.c.l.b16 %v985
  %v1863 = vunpack.c.h.b16 %v985
  %v1864 = vunpack.c.l.b16 %v986
  %v1865 = vunpack.c.h.b16 %v986
  %v1866 = vunpack.c.l.b16 %v987
  %v1867 = vunpack.c.h.b16 %v987
  %v1868 = vunpack.c.l.b16 %v988
  %v1869 = vunpack.c.h.b16 %v988
  %v1870 = vunpack.c.l.b16 %v989
  %v1871 = vunpack.c.h.b16 %v989
  %v1872 = vunpack.c.l.b16 %v990
  %v1873 = vunpack.c.h.b16 %v990
  %v1874 = vunpack.c.l.b16 %v991
  %v1875 = vunpack.c.h.b16 %v991
  %v1876 = vunpack.c.l.b16 %v992
  %v1877 = vunpack.c.h.b16 %v992
  %v1878 = vunpack.c.l.b16 %v993
  %v1879 = vunpack.c.h.b16 %v993
  %v1880 = vunpack.c.l.b16 %v994
  %v1881 = vunpack.c.h.b16 %v994
  %v1882 = vunpack.c.l.b16 %v995
  %v1883 = vunpack.c.h.b16 %v995
  %v1884 = vunpack.c.l.b16 %v996
  %v1885 = vunpack.c.h.b16 %v996
  %v1886 = vunpack.c.l.b16 %v997
  %v1887 = vunpack.c.h.b16 %v997
  %v1888 = vunpack.c.l.b16 %v998
  %v1889 = vunpack.c.h.b16 %v998
  %v1890 = vunpack.c.l.b16 %v999
  %v1891 = vunpack.c.h.b16 %v999
  %v1892 = vunpack.c.l.b16 %v1000
  %v1893 = vunpack.c.h.b16 %v1000
  %v1894 = vunpack.c.l.b16 %v1001
  %v1895 = vunpack.c.h.b16 %v1001
  %v1896 = vunpack.c.l.b16 %v1002
  %v1897 = vunpack.c.h.b16 %v1002
  %v1898 = vunpack.c.l.b16 %v1003
  %v1899 = vunpack.c.h.b16 %v1003
  %v1900 = vunpack.c.l.b16 %v1004
  %v1901 = vunpack.c.h.b16 %v1004
  %v1902 = vunpack.c.l.b16 %v1005
  %v1903 = vunpack.c.h.b16 %v1005
  %v1904 = vunpack.c.l.b16 %v1006
  %v1905 = vunpack.c.h.b16 %v1006
  %v1906 = vunpack.c.l.b16 %v1007
  %v1907 = vunpack.c.h.b16 %v1007
  %v1908 = vpack.c.b16 %v1374, %v1368
  %v1909 = vpack.c.b16 %v1375, %v1369
  %v1910 = vpack.c.b16 %v1376, %v1370
  %v1911 = vpack.c.b16 %v1377, %v1371
  %v1912 = vpack.c.b16 %v1378, %v1372
  %v1913 = vpack.c.b16 %v1379, %v1373
  %v1914 = vpack.c.b16 %v1386, %v1380
  %v1915 = vpack.c.b16 %v1387, %v1381
  %v1916 = vpack.c.b16 %v1388, %v1382
  %v1917 = vpack.c.b16 %v1389, %v1383
  %v1918 = vpack.c.b16 %v1390, %v1384
  %v1919 = vpack.c.b16 %v1391, %v1385
  %v1920 = vpack.c.b16 %v1398, %v1392
  %v1921 = vpack.c.b16 %v1399, %v1393
  %v1922 = vpack.c.b16 %v1400, %v1394
  %v1923 = vpack.c.b16 %v1401, %v1395
  %v1924 = vpack.c.b16 %v1402, %v1396
  %v1925 = vpack.c.b16 %v1403, %v1397
  %v1926 = vpack.c.b16 %v1410, %v1404
  %v1927 = vpack.c.b16 %v1411, %v1405
  %v1928 = vpack.c.b16 %v1412, %v1406
  %v1929 = vpack.c.b16 %v1413, %v1407
  %v1930 = vpack.c.b16 %v1414, %v1408
  %v1931 = vpack.c.b16 %v1415, %v1409
  %v1932 = vpack.c.b16 %v1422, %v1416
  %v1933 = vpack.c.b16 %v1423, %v1417
  %v1934 = vpack.c.b16 %v1424, %v1418
  %v1935 = vpack.c.b16 %v1425, %v1419
  %v1936 = vpack.c.b16 %v1426, %v1420
  %v1937 = vpack.c.b16 %v1427, %v1421
  %v1938 = vpack.c.b16 %v1434, %v1428
  %v1939 = vpack.c.b16 %v1435, %v1429
  %v1940 = vpack.c.b16 %v1436, %v1430
  %v1941 = vpack.c.b16 %v1437, %v1431
  %v1942 = vpack.c.b16 %v1438, %v1432
  %v1943 = vpack.c.b16 %v1439, %v1433
  %v1944 = vpack.c.b16 %v1446, %v1440
  %v1945 = vpack.c.b16 %v1447, %v1441
  %v1946 = vpack.c.b16 %v1448, %v1442
  %v1947 = vpack.c.b16 %v1449, %v1443
  %v1948 = vpack.c.b16 %v1450, %v1444
  %v1949 = vpack.c.b16 %v1451, %v1445
  %v1950 = vpack.c.b16 %v1458, %v1452
  %v1951 = vpack.c.b16 %v1459, %v1453
  %v1952 = vpack.c.b16 %v1460, %v1454
  %v1953 = vpack.c.b16 %v1461, %v1455
  %v1954 = vpack.c.b16 %v1462, %v1456
  %v1955 = vpack.c.b16 %v1463, %v1457
  %v1956 = vpack.c.b16 %v1470, %v1464
  %v1957 = vpack.c.b16 %v1471, %v1465
  %v1958 = vpack.c.b16 %v1472, %v1466
  %v1959 = vpack.c.b16 %v1473, %v1467
  %v1960 = vpack.c.b16 %v1474, %v1468
  %v1961 = vpack.c.b16 %v1475, %v1469
  %v1962 = vpack.c.b16 %v1482, %v1476
  %v1963 = vpack.c.b16 %v1483, %v1477
  %v1964 = vpack.c.b16 %v1484, %v1478
  %v1965 = vpack.c.b16 %v1485, %v1479
  %v1966 = vpack.c.b16 %v1486, %v1480
  %v1967 = vpack.c.b16 %v1487, %v1481
  %v1968 = vpack.c.b16 %v1494, %v1488
  %v1969 = vpack.c.b16 %v1495, %v1489
  %v1970 = vpack.c.b16 %v1496, %v1490
  %v1971 = vpack.c.b16 %v1497, %v1491
  %v1972 = vpack.c.b16 %v1498, %v1492
  %v1973 = vpack.c.b16 %v1499, %v1493
  %v1974 = vpack.c.b16 %v1506, %v1500
  %v1975 = vpack.c.b16 %v1507, %v1501
  %v1976 = vpack.c.b16 %v1508, %v1502
  %v1977 = vpack.c.b16 %v1509, %v1503
  %v1978 = vpack.c.b16 %v1510, %v1504
  %v1979 = vpack.c.b16 %v1511, %v1505
  %v1980 = vpack.c.b16 %v1518, %v1512
  %v1981 = vpack.c.b16 %v1519, %v1513
  %v1982 = vpack.c.b16 %v1520, %v1514
  %v1983 = vpack.c.b16 %v1521, %v1515
  %v1984 = vpack.c.b16 %v1522, %v1516
  %v1985 = vpack.c.b16 %v1523, %v1517
  %v1986 = vpack.c.b16 %v1530, %v1524
  %v1987 = vpack.c.b16 %v1531, %v1525
  %v1988 = vpack.c.b16 %v1532, %v1526
  %v1989 = vpack.c.b16 %v1533, %v1527
  %v1990 = vpack.c.b16 %v1534, %v1528
  %v1991 = vpack.c.b16 %v1535, %v1529
  %v1992 = vpack.c.b16 %v1542, %v1536
  %v1993 = vpack.c.b16 %v1543, %v1537
  %v1994 = vpack.c.b16 %v1544, %v1538
  %v1995 = vpack.c.b16 %v1545, %v1539
  %v1996 = vpack.c.b16 %v1546, %v1540
  %v1997 = vpack.c.b16 %v1547, %v1541
  %v1998 = vpack.c.b16 %v1554, %v1548
  %v1999 = vpack.c.b16 %v1555, %v1549
  %v2000 = vpack.c.b16 %v1556, %v1550
  %v2001 = vpack.c.b16 %v1557, %v1551
  %v2002 = vpack.c.b16 %v1558, %v1552
  %v2003 = vpack.c.b16 %v1559, %v1553
  %v2004 = vpack.c.b16 %v1566, %v1560
  %v2005 = vpack.c.b16 %v1567, %v1561
  %v2006 = vpack.c.b16 %v1568, %v1562
  %v2007 = vpack.c.b16 %v1569, %v1563
  %v2008 = vpack.c.b16 %v1570, %v1564
  %v2009 = vpack.c.b16 %v1571, %v1565
  %v2010 = vpack.c.b16 %v1578, %v1572
  %v2011 = vpack.c.b16 %v1579, %v1573
  %v2012 = vpack.c.b16 %v1580, %v1574
  %v2013 = vpack.c.b16 %v1581, %v1575
  %v2014 = vpack.c.b16 %v1582, %v1576
  %v2015 = vpack.c.b16 %v1583, %v1577
  %v2016 = vpack.c.b16 %v1590, %v1584
  %v2017 = vpack.c.b16 %v1591, %v1585
  %v2018 = vpack.c.b16 %v1592, %v1586
  %v2019 = vpack.c.b16 %v1593, %v1587
  %v2020 = vpack.c.b16 %v1594, %v1588
  %v2021 = vpack.c.b16 %v1595, %v1589
  %v2022 = vpack.c.b16 %v1602, %v1596
  %v2023 = vpack.c.b16 %v1603, %v1597
  %v2024 = vpack.c.b16 %v1604, %v1598
  %v2025 = vpack.c.b16 %v1605, %v1599
  %v2026 = vpack.c.b16 %v1606, %v1600
  %v2027 = vpack.c.b16 %v1607, %v1601
  %v2028 = vpack.c.b16 %v1614, %v1608
  %v2029 = vpack.c.b16 %v1615, %v1609
  %v2030 = vpack.c.b16 %v1616, %v1610
  %v2031 = vpack.c.b16 %v1617, %v1611
  %v2032 = vpack.c.b16 %v1618, %v1612
  %v2033 = vpack.c.b16 %v1619, %v1613
  %v2034 = vpack.c.b16 %v1626, %v1620
  %v2035 = vpack.c.b16 %v1627, %v1621
  %v2036 = vpack.c.b16 %v1628, %v1622
  %v2037 = vpack.c.b16 %v1629, %v1623
  %v2038 = vpack.c.b16 %v1630, %v1624
  %v2039 = vpack.c.b16 %v1631, %v1625
  %v2040 = vpack.c.b16 %v1638, %v1632
  %v2041 = vpack.c.b16 %v1639, %v1633
  %v2042 = vpack.c.b16 %v1640, %v1634
  %v2043 = vpack.c.b16 %v1641, %v1635
  %v2044 = vpack.c.b16 %v1642, %v1636
  %v2045 = vpack.c.b16 %v1643, %v1637
  %v2046 = vpack.c.b16 %v1650, %v1644
  %v2047 = vpack.c.b16 %v1651, %v1645
  %v2048 = vpack.c.b16 %v1652, %v1646
  %v2049 = vpack.c.b16 %v1653, %v1647
  %v2050 = vpack.c.b16 %v1654, %v1648
  %v2051 = vpack.c.b16 %v1655, %v1649
  %v2052 = vpack.c.b16 %v1662, %v1656
  %v2053 = vpack.c.b16 %v1663, %v1657
  %v2054 = vpack.c.b16 %v1664, %v1658
  %v2055 = vpack.c.b16 %v1665, %v1659
  %v2056 = vpack.c.b16 %v1666, %v1660
  %v2057 = vpack.c.b16 %v1667, %v1661
  %v2058 = vpack.c.b16 %v1674, %v1668
  %v2059 = vpack.c.b16 %v1675, %v1669
  %v2060 = vpack.c.b16 %v1676, %v1670
  %v2061 = vpack.c.b16 %v1677, %v1671
  %v2062 = vpack.c.b16 %v1678, %v1672
  %v2063 = vpack.c.b16 %v1679, %v1673
  %v2064 = vpack.c.b16 %v1686, %v1680
  %v2065 = vpack.c.b16 %v1687, %v1681
  %v2066 = vpack.c.b16 %v1688, %v1682
  %v2067 = vpack.c.b16 %v1689, %v1683
  %v2068 = vpack.c.b16 %v1690, %v1684
  %v2069 = vpack.c.b16 %v1691, %v1685
  %v2070 = vpack.c.b16 %v1698, %v1692
  %v2071 = vpack.c.b16 %v1699, %v1693
  %v2072 = vpack.c.b16 %v1700, %v1694
  %v2073 = vpack.c.b16 %v1701, %v1695
  %v2074 = vpack.c.b16 %v1702, %v1696
  %v2075 = vpack.c.b16 %v1703, %v1697
  %v2076 = vpack.c.b16 %v1710, %v1704
  %v2077 = vpack.c.b16 %v1711, %v1705
  %v2078 = vpack.c.b16 %v1712, %v1706
  %v2079 = vpack.c.b16 %v1713, %v1707
  %v2080 = vpack.c.b16 %v1714, %v1708
  %v2081 = vpack.c.b16 %v1715, %v1709
  %v2082 = vpack.c.b16 %v1722, %v1716
  %v2083 = vpack.c.b16 %v1723, %v1717
  %v2084 = vpack.c.b16 %v1724, %v1718
  %v2085 = vpack.c.b16 %v1725, %v1719
  %v2086 = vpack.c.b16 %v1726, %v1720
  %v2087 = vpack.c.b16 %v1727, %v1721
  %v2088 = vpack.c.b16 %v1734, %v1728
  %v2089 = vpack.c.b16 %v1735, %v1729
  %v2090 = vpack.c.b16 %v1736, %v1730
  %v2091 = vpack.c.b16 %v1737, %v1731
  %v2092 = vpack.c.b16 %v1738, %v1732
  %v2093 = vpack.c.b16 %v1739, %v1733
  %v2094 = vpack.c.b16 %v1746, %v1740
  %v2095 = vpack.c.b16 %v1747, %v1741
  %v2096 = vpack.c.b16 %v1748, %v1742
  %v2097 = vpack.c.b16 %v1749, %v1743
  %v2098 = vpack.c.b16 %v1750, %v1744
  %v2099 = vpack.c.b16 %v1751, %v1745
  %v2100 = vpack.c.b16 %v1758, %v1752
  %v2101 = vpack.c.b16 %v1759, %v1753
  %v2102 = vpack.c.b16 %v1760, %v1754
  %v2103 = vpack.c.b16 %v1761, %v1755
  %v2104 = vpack.c.b16 %v1762, %v1756
  %v2105 = vpack.c.b16 %v1763, %v1757
  %v2106 = vpack.c.b16 %v1770, %v1764
  %v2107 = vpack.c.b16 %v1771, %v1765
  %v2108 = vpack.c.b16 %v1772, %v1766
  %v2109 = vpack.c.b16 %v1773, %v1767
  %v2110 = vpack.c.b16 %v1774, %v1768
  %v2111 = vpack.c.b16 %v1775, %v1769
  %v2112 = vpack.c.b16 %v1782, %v1776
  %v2113 = vpack.c.b16 %v1783, %v1777
  %v2114 = vpack.c.b16 %v1784, %v1778
  %v2115 = vpack.c.b16 %v1785, %v1779
  %v2116 = vpack.c.b16 %v1786, %v1780
  %v2117 = vpack.c.b16 %v1787, %v1781
  %v2118 = vpack.c.b16 %v1794, %v1788
  %v2119 = vpack.c.b16 %v1795, %v1789
  %v2120 = vpack.c.b16 %v1796, %v1790
  %v2121 = vpack.c.b16 %v1797, %v1791
  %v2122 = vpack.c.b16 %v1798, %v1792
  %v2123 = vpack.c.b16 %v1799, %v1793
  %v2124 = vpack.c.b16 %v1806, %v1800
  %v2125 = vpack.c.b16 %v1807, %v1801
  %v2126 = vpack.c.b16 %v1808, %v1802
  %v2127 = vpack.c.b16 %v1809, %v1803
  %v2128 = vpack.c.b16 %v1810, %v1804
  %v2129 = vpack.c.b16 %v1811, %v1805
  %v2130 = vpack.c.b16 %v1818, %v1812
  %v2131 = vpack.c.b16 %v1819, %v1813
  %v2132 = vpack.c.b16 %v1820, %v1814
  %v2133 = vpack.c.b16 %v1821, %v1815
  %v2134 = vpack.c.b16 %v1822, %v1816
  %v2135 = vpack.c.b16 %v1823, %v1817
  %v2136 = vpack.c.b16 %v1830, %v1824
  %v2137 = vpack.c.b16 %v1831, %v1825
  %v2138 = vpack.c.b16 %v1832, %v1826
  %v2139 = vpack.c.b16 %v1833, %v1827
  %v2140 = vpack.c.b16 %v1834, %v1828
  %v2141 = vpack.c.b16 %v1835, %v1829
  %v2142 = vpack.c.b16 %v1842, %v1836
  %v2143 = vpack.c.b16 %v1843, %v1837
  %v2144 = vpack.c.b16 %v1844, %v1838
  %v2145 = vpack.c.b16 %v1845, %v1839
  %v2146 = vpack.c.b16 %v1846, %v1840
  %v2147 = vpack.c.b16 %v1847, %v1841
  %v2148 = vpack.c.b16 %v1854, %v1848
  %v2149 = vpack.c.b16 %v1855, %v1849
  %v2150 = vpack.c.b16 %v1856, %v1850
  %v2151 = vpack.c.b16 %v1857, %v1851
  %v2152 = vpack.c.b16 %v1858, %v1852
  %v2153 = vpack.c.b16 %v1859, %v1853
  %v2154 = vpack.c.b16 %v1866, %v1860
  %v2155 = vpack.c.b16 %v1867, %v1861
  %v2156 = vpack.c.b16 %v1868, %v1862
  %v2157 = vpack.c.b16 %v1869, %v1863
  %v2158 = vpack.c.b16 %v1870, %v1864
  %v2159 = vpack.c.b16 %v1871, %v1865
  %v2160 = vpack.c.b16 %v1878, %v1872
  %v2161 = vpack.c.b16 %v1879, %v1873
  %v2162 = vpack.c.b16 %v1880, %v1874
  %v2163 = vpack.c.b16 %v1881, %v1875
  %v2164 = vpack.c.b16 %v1882, %v1876
  %v2165 = vpack.c.b16 %v1883, %v1877
  %v2166 = vpack.c.b16 %v1890, %v1884
  %v2167 = vpack.c.b16 %v1891, %v1885
  %v2168 = vpack.c.b16 %v1892, %v1886
  %v2169 = vpack.c.b16 %v1893, %v1887
  %v2170 = vpack.c.b16 %v1894, %v1888
  %v2171 = vpack.c.b16 %v1895, %v1889
  %v2172 = vpack.c.b16 %v1902, %v1896
  %v2173 = vpack.c.b16 %v1903, %v1897
  %v2174 = vpack.c.b16 %v1904, %v1898
  %v2175 = vpack.c.b16 %v1905, %v1899
  %v2176 = vpack.c.b16 %v1906, %v1900
  %v2177 = vpack.c.b16 %v1907, %v1901
  %vm2403 = vcmask 654336
  %v2405 = vsel %vm2403, %v1913, 0
  %v2408 = vsel %vm2403, %v1919, 0
  %v2411 = vsel %vm2403, %v1925, 0
  %v2414 = vsel %vm2403, %v1931, 0
  %v2417 = vsel %vm2403, %v1937, 0
  %v2420 = vsel %vm2403, %v1943, 0
  %v2423 = vsel %vm2403, %v1949, 0
  %v2426 = vsel %vm2403, %v1955, 0
  %v2429 = vsel %vm2403, %v1961, 0
  %v2432 = vsel %vm2403, %v1967, 0
  %v2435 = vsel %vm2403, %v1973, 0
  %v2438 = vsel %vm2403, %v1979, 0
  %v2441 = vsel %vm2403, %v1985, 0
  %v2444 = vsel %vm2403, %v1991, 0
  %v2447 = vsel %vm2403, %v1997, 0
  %v2450 = vsel %vm2403, %v2003, 0
  %v2453 = vsel %vm2403, %v2009, 0
  %v2456 = vsel %vm2403, %v2015, 0
  %v2459 = vsel %vm2403, %v2021, 0
  %v2462 = vsel %vm2403, %v2027, 0
  %v2465 = vsel %vm2403, %v2033, 0
  %v2468 = vsel %vm2403, %v2039, 0
  %v2471 = vsel %vm2403, %v2045, 0
  %v2474 = vsel %vm2403, %v2051, 0
  %v2477 = vsel %vm2403, %v2057, 0
  %v2480 = vsel %vm2403, %v2063, 0
  %v2483 = vsel %vm2403, %v2069, 0
  %v2486 = vsel %vm2403, %v2075, 0
  %v2489 = vsel %vm2403, %v2081, 0
  %v2492 = vsel %vm2403, %v2087, 0
  %v2495 = vsel %vm2403, %v2093, 0
  %v2498 = vsel %vm2403, %v2099, 0
  %v2501 = vsel %vm2403, %v2105, 0
  %v2504 = vsel %vm2403, %v2111, 0
  %v2507 = vsel %vm2403, %v2117, 0
  %v2510 = vsel %vm2403, %v2123, 0
  %v2513 = vsel %vm2403, %v2129, 0
  %v2516 = vsel %vm2403, %v2135, 0
  %v2519 = vsel %vm2403, %v2141, 0
  %v2522 = vsel %vm2403, %v2147, 0
  %v2525 = vsel %vm2403, %v2153, 0
  %v2528 = vsel %vm2403, %v2159, 0
  %v2531 = vsel %vm2403, %v2165, 0
  %v2534 = vsel %vm2403, %v2171, 0
  %v2537 = vsel %vm2403, %v2177, 0
  %2539 = vmatprep.subr.bf16.mxu0 %v1009
  %2540 = vmatpush1.bf16.msra.mxu0 %v1008
  %2541 = vmatprep.subr.bf16.mxu0 %v1011
  %2542 = vmatpush1.bf16.msra.mxu0 %v1010
  %2543 = vmatprep.subr.bf16.mxu0 %v1013
  %2544 = vmatpush1.bf16.msra.mxu0 %v1012
  %2545 = vmatprep.subr.bf16.mxu0 %v1015
  %2546 = vmatpush1.bf16.msra.mxu0 %v1014
  %2547 = vmatprep.subr.bf16.mxu0 %v1017
  %2548 = vmatpush1.bf16.msra.mxu0 %v1016
  %2549 = vmatprep.subr.bf16.mxu0 %v1019
  %2550 = vmatpush1.bf16.msra.mxu0 %v1018
  %2551 = vmatprep.subr.bf16.mxu0 %v1021
  %2552 = vmatpush1.bf16.msra.mxu0 %v1020
  %2553 = vmatprep.subr.bf16.mxu0 %v1023
  %2554 = vmatpush1.bf16.msra.mxu0 %v1022
  %2555 = vmatprep.subr.bf16.mxu0 %v1025
  %2556 = vmatpush1.bf16.msra.mxu0 %v1024
  %2557 = vmatprep.subr.bf16.mxu0 %v1027
  %2558 = vmatpush1.bf16.msra.mxu0 %v1026
  %2559 = vmatprep.subr.bf16.mxu0 %v1029
  %2560 = vmatpush1.bf16.msra.mxu0 %v1028
  %2561 = vmatprep.subr.bf16.mxu0 %v1031
  %2562 = vmatpush1.bf16.msra.mxu0 %v1030
  %2563 = vmatprep.subr.bf16.mxu0 %v1033
  %2564 = vmatpush1.bf16.msra.mxu0 %v1032
  %2565 = vmatprep.subr.bf16.mxu0 %v1035
  %2566 = vmatpush1.bf16.msra.mxu0 %v1034
  %2567 = vmatprep.subr.bf16.mxu0 %v1037
  %2568 = vmatpush1.bf16.msra.mxu0 %v1036
  %2569 = vmatprep.subr.bf16.mxu0 %v1039
  %2570 = vmatpush1.bf16.msra.mxu0 %v1038
  %2571 = vmatprep.mubr.bf16.mxu0 %v1909
  %2572 = vmatmul.mubr.bf16.gmra.mrb[0].mxu0 %v1908
  %v2573 = vpop.f32.mrb[0].mxu0
  %v2574 = vadd.f32 0.0, %v2573
  %v2575 = vpop.f32.mrb[0].mxu0
  %v2576 = vadd.f32 0.0, %v2575
  %v2577 = vpop.f32.mrb[0].mxu0
  %v2578 = vadd.f32 0.0, %v2577
  %v2579 = vpop.f32.mrb[0].mxu0
  %v2580 = vadd.f32 0.0, %v2579
  %2581 = vmatprep.mubr.bf16.mxu0 %v1915
  %2582 = vmatmul.mubr.bf16.gmra.mrb[0].mxu0 %v1914
  %v2583 = vpop.f32.mrb[0].mxu0
  %v2584 = vadd.f32 0.0, %v2583
  %v2585 = vpop.f32.mrb[0].mxu0
  %v2586 = vadd.f32 0.0, %v2585
  %v2587 = vpop.f32.mrb[0].mxu0
  %v2588 = vadd.f32 0.0, %v2587
  %v2589 = vpop.f32.mrb[0].mxu0
  %v2590 = vadd.f32 0.0, %v2589
  %2591 = vmatprep.mubr.bf16.mxu0 %v1921
  %2592 = vmatmul.mubr.bf16.gmra.mrb[0].mxu0 %v1920
  %v2593 = vpop.f32.mrb[0].mxu0
  %v2594 = vadd.f32 0.0, %v2593
  %v2595 = vpop.f32.mrb[0].mxu0
  %v2596 = vadd.f32 0.0, %v2595
  %v2597 = vpop.f32.mrb[0].mxu0
  %v2598 = vadd.f32 0.0, %v2597
  %v2599 = vpop.f32.mrb[0].mxu0
  %v2600 = vadd.f32 0.0, %v2599
  %2601 = vmatprep.mubr.bf16.mxu0 %v1927
  %2602 = vmatmul.mubr.bf16.gmra.mrb[0].mxu0 %v1926
  %v2603 = vpop.f32.mrb[0].mxu0
  %v2604 = vadd.f32 0.0, %v2603
  %v2605 = vpop.f32.mrb[0].mxu0
  %v2606 = vadd.f32 0.0, %v2605
  %v2607 = vpop.f32.mrb[0].mxu0
  %v2608 = vadd.f32 0.0, %v2607
  %v2609 = vpop.f32.mrb[0].mxu0
  %v2610 = vadd.f32 0.0, %v2609
  %2611 = vmatprep.mubr.bf16.mxu0 %v1933
  %2612 = vmatmul.mubr.bf16.gmra.mrb[0].mxu0 %v1932
  %v2613 = vpop.f32.mrb[0].mxu0
  %v2614 = vadd.f32 0.0, %v2613
  %v2615 = vpop.f32.mrb[0].mxu0
  %v2616 = vadd.f32 0.0, %v2615
  %v2617 = vpop.f32.mrb[0].mxu0
  %v2618 = vadd.f32 0.0, %v2617
  %v2619 = vpop.f32.mrb[0].mxu0
  %v2620 = vadd.f32 0.0, %v2619
  %2621 = vmatprep.mubr.bf16.mxu0 %v1939
  %2622 = vmatmul.mubr.bf16.gmra.mrb[0].mxu0 %v1938
  %v2623 = vpop.f32.mrb[0].mxu0
  %v2624 = vadd.f32 0.0, %v2623
  %v2625 = vpop.f32.mrb[0].mxu0
  %v2626 = vadd.f32 0.0, %v2625
  %v2627 = vpop.f32.mrb[0].mxu0
  %v2628 = vadd.f32 0.0, %v2627
  %v2629 = vpop.f32.mrb[0].mxu0
  %v2630 = vadd.f32 0.0, %v2629
  %2631 = vmatprep.mubr.bf16.mxu0 %v1945
  %2632 = vmatmul.mubr.bf16.gmra.mrb[0].mxu0 %v1944
  %v2633 = vpop.f32.mrb[0].mxu0
  %v2634 = vadd.f32 0.0, %v2633
  %v2635 = vpop.f32.mrb[0].mxu0
  %v2636 = vadd.f32 0.0, %v2635
  %v2637 = vpop.f32.mrb[0].mxu0
  %v2638 = vadd.f32 0.0, %v2637
  %v2639 = vpop.f32.mrb[0].mxu0
  %v2640 = vadd.f32 0.0, %v2639
  %2641 = vmatprep.mubr.bf16.mxu0 %v1951
  %2642 = vmatmul.mubr.bf16.gmra.mrb[0].mxu0 %v1950
  %v2643 = vpop.f32.mrb[0].mxu0
  %v2644 = vadd.f32 0.0, %v2643
  %v2645 = vpop.f32.mrb[0].mxu0
  %v2646 = vadd.f32 0.0, %v2645
  %v2647 = vpop.f32.mrb[0].mxu0
  %v2648 = vadd.f32 0.0, %v2647
  %v2649 = vpop.f32.mrb[0].mxu0
  %v2650 = vadd.f32 0.0, %v2649
  %2651 = vmatprep.mubr.bf16.mxu0 %v1957
  %2652 = vmatmul.mubr.bf16.gmra.mrb[0].mxu0 %v1956
  %v2653 = vpop.f32.mrb[0].mxu0
  %v2654 = vadd.f32 0.0, %v2653
  %v2655 = vpop.f32.mrb[0].mxu0
  %v2656 = vadd.f32 0.0, %v2655
  %v2657 = vpop.f32.mrb[0].mxu0
  %v2658 = vadd.f32 0.0, %v2657
  %v2659 = vpop.f32.mrb[0].mxu0
  %v2660 = vadd.f32 0.0, %v2659
  %2661 = vmatprep.mubr.bf16.mxu0 %v1963
  %2662 = vmatmul.mubr.bf16.gmra.mrb[0].mxu0 %v1962
  %v2663 = vpop.f32.mrb[0].mxu0
  %v2664 = vadd.f32 0.0, %v2663
  %v2665 = vpop.f32.mrb[0].mxu0
  %v2666 = vadd.f32 0.0, %v2665
  %v2667 = vpop.f32.mrb[0].mxu0
  %v2668 = vadd.f32 0.0, %v2667
  %v2669 = vpop.f32.mrb[0].mxu0
  %v2670 = vadd.f32 0.0, %v2669
  %2671 = vmatprep.mubr.bf16.mxu0 %v1969
  %2672 = vmatmul.mubr.bf16.gmra.mrb[0].mxu0 %v1968
  %v2673 = vpop.f32.mrb[0].mxu0
  %v2674 = vadd.f32 0.0, %v2673
  %v2675 = vpop.f32.mrb[0].mxu0
  %v2676 = vadd.f32 0.0, %v2675
  %v2677 = vpop.f32.mrb[0].mxu0
  %v2678 = vadd.f32 0.0, %v2677
  %v2679 = vpop.f32.mrb[0].mxu0
  %v2680 = vadd.f32 0.0, %v2679
  %2681 = vmatprep.mubr.bf16.mxu0 %v1975
  %2682 = vmatmul.mubr.bf16.gmra.mrb[0].mxu0 %v1974
  %v2683 = vpop.f32.mrb[0].mxu0
  %v2684 = vadd.f32 0.0, %v2683
  %v2685 = vpop.f32.mrb[0].mxu0
  %v2686 = vadd.f32 0.0, %v2685
  %v2687 = vpop.f32.mrb[0].mxu0
  %v2688 = vadd.f32 0.0, %v2687
  %v2689 = vpop.f32.mrb[0].mxu0
  %v2690 = vadd.f32 0.0, %v2689
  %2691 = vmatprep.mubr.bf16.mxu0 %v1981
  %2692 = vmatmul.mubr.bf16.gmra.mrb[0].mxu0 %v1980
  %v2693 = vpop.f32.mrb[0].mxu0
  %v2694 = vadd.f32 0.0, %v2693
  %v2695 = vpop.f32.mrb[0].mxu0
  %v2696 = vadd.f32 0.0, %v2695
  %v2697 = vpop.f32.mrb[0].mxu0
  %v2698 = vadd.f32 0.0, %v2697
  %v2699 = vpop.f32.mrb[0].mxu0
  %v2700 = vadd.f32 0.0, %v2699
  %2701 = vmatprep.mubr.bf16.mxu0 %v1987
  %2702 = vmatmul.mubr.bf16.gmra.mrb[0].mxu0 %v1986
  %v2703 = vpop.f32.mrb[0].mxu0
  %v2704 = vadd.f32 0.0, %v2703
  %v2705 = vpop.f32.mrb[0].mxu0
  %v2706 = vadd.f32 0.0, %v2705
  %v2707 = vpop.f32.mrb[0].mxu0
  %v2708 = vadd.f32 0.0, %v2707
  %v2709 = vpop.f32.mrb[0].mxu0
  %v2710 = vadd.f32 0.0, %v2709
  %2711 = vmatprep.mubr.bf16.mxu0 %v1993
  %2712 = vmatmul.mubr.bf16.gmra.mrb[0].mxu0 %v1992
  %v2713 = vpop.f32.mrb[0].mxu0
  %v2714 = vadd.f32 0.0, %v2713
  %v2715 = vpop.f32.mrb[0].mxu0
  %v2716 = vadd.f32 0.0, %v2715
  %v2717 = vpop.f32.mrb[0].mxu0
  %v2718 = vadd.f32 0.0, %v2717
  %v2719 = vpop.f32.mrb[0].mxu0
  %v2720 = vadd.f32 0.0, %v2719
  %2721 = vmatprep.mubr.bf16.mxu0 %v1999
  %2722 = vmatmul.mubr.bf16.gmra.mrb[0].mxu0 %v1998
  %v2723 = vpop.f32.mrb[0].mxu0
  %v2724 = vadd.f32 0.0, %v2723
  %v2725 = vpop.f32.mrb[0].mxu0
  %v2726 = vadd.f32 0.0, %v2725
  %v2727 = vpop.f32.mrb[0].mxu0
  %v2728 = vadd.f32 0.0, %v2727
  %v2729 = vpop.f32.mrb[0].mxu0
  %v2730 = vadd.f32 0.0, %v2729
  %2731 = vmatprep.mubr.bf16.mxu0 %v2005
  %2732 = vmatmul.mubr.bf16.gmra.mrb[0].mxu0 %v2004
  %v2733 = vpop.f32.mrb[0].mxu0
  %v2734 = vadd.f32 0.0, %v2733
  %v2735 = vpop.f32.mrb[0].mxu0
  %v2736 = vadd.f32 0.0, %v2735
  %v2737 = vpop.f32.mrb[0].mxu0
  %v2738 = vadd.f32 0.0, %v2737
  %v2739 = vpop.f32.mrb[0].mxu0
  %v2740 = vadd.f32 0.0, %v2739
  %2741 = vmatprep.mubr.bf16.mxu0 %v2011
  %2742 = vmatmul.mubr.bf16.gmra.mrb[0].mxu0 %v2010
  %v2743 = vpop.f32.mrb[0].mxu0
  %v2744 = vadd.f32 0.0, %v2743
  %v2745 = vpop.f32.mrb[0].mxu0
  %v2746 = vadd.f32 0.0, %v2745
  %v2747 = vpop.f32.mrb[0].mxu0
  %v2748 = vadd.f32 0.0, %v2747
  %v2749 = vpop.f32.mrb[0].mxu0
  %v2750 = vadd.f32 0.0, %v2749
  %2751 = vmatprep.mubr.bf16.mxu0 %v2017
  %2752 = vmatmul.mubr.bf16.gmra.mrb[0].mxu0 %v2016
  %v2753 = vpop.f32.mrb[0].mxu0
  %v2754 = vadd.f32 0.0, %v2753
  %v2755 = vpop.f32.mrb[0].mxu0
  %v2756 = vadd.f32 0.0, %v2755
  %v2757 = vpop.f32.mrb[0].mxu0
  %v2758 = vadd.f32 0.0, %v2757
  %v2759 = vpop.f32.mrb[0].mxu0
  %v2760 = vadd.f32 0.0, %v2759
  %2761 = vmatprep.mubr.bf16.mxu0 %v2023
  %2762 = vmatmul.mubr.bf16.gmra.mrb[0].mxu0 %v2022
  %v2763 = vpop.f32.mrb[0].mxu0
  %v2764 = vadd.f32 0.0, %v2763
  %v2765 = vpop.f32.mrb[0].mxu0
  %v2766 = vadd.f32 0.0, %v2765
  %v2767 = vpop.f32.mrb[0].mxu0
  %v2768 = vadd.f32 0.0, %v2767
  %v2769 = vpop.f32.mrb[0].mxu0
  %v2770 = vadd.f32 0.0, %v2769
  %2771 = vmatprep.mubr.bf16.mxu0 %v2029
  %2772 = vmatmul.mubr.bf16.gmra.mrb[0].mxu0 %v2028
  %v2773 = vpop.f32.mrb[0].mxu0
  %v2774 = vadd.f32 0.0, %v2773
  %v2775 = vpop.f32.mrb[0].mxu0
  %v2776 = vadd.f32 0.0, %v2775
  %v2777 = vpop.f32.mrb[0].mxu0
  %v2778 = vadd.f32 0.0, %v2777
  %v2779 = vpop.f32.mrb[0].mxu0
  %v2780 = vadd.f32 0.0, %v2779
  %2781 = vmatprep.mubr.bf16.mxu0 %v2035
  %2782 = vmatmul.mubr.bf16.gmra.mrb[0].mxu0 %v2034
  %v2783 = vpop.f32.mrb[0].mxu0
  %v2784 = vadd.f32 0.0, %v2783
  %v2785 = vpop.f32.mrb[0].mxu0
  %v2786 = vadd.f32 0.0, %v2785
  %v2787 = vpop.f32.mrb[0].mxu0
  %v2788 = vadd.f32 0.0, %v2787
  %v2789 = vpop.f32.mrb[0].mxu0
  %v2790 = vadd.f32 0.0, %v2789
  %2791 = vmatprep.mubr.bf16.mxu0 %v2041
  %2792 = vmatmul.mubr.bf16.gmra.mrb[0].mxu0 %v2040
  %v2793 = vpop.f32.mrb[0].mxu0
  %v2794 = vadd.f32 0.0, %v2793
  %v2795 = vpop.f32.mrb[0].mxu0
  %v2796 = vadd.f32 0.0, %v2795
  %v2797 = vpop.f32.mrb[0].mxu0
  %v2798 = vadd.f32 0.0, %v2797
  %v2799 = vpop.f32.mrb[0].mxu0
  %v2800 = vadd.f32 0.0, %v2799
  %2801 = vmatprep.mubr.bf16.mxu0 %v2047
  %2802 = vmatmul.mubr.bf16.gmra.mrb[0].mxu0 %v2046
  %v2803 = vpop.f32.mrb[0].mxu0
  %v2804 = vadd.f32 0.0, %v2803
  %v2805 = vpop.f32.mrb[0].mxu0
  %v2806 = vadd.f32 0.0, %v2805
  %v2807 = vpop.f32.mrb[0].mxu0
  %v2808 = vadd.f32 0.0, %v2807
  %v2809 = vpop.f32.mrb[0].mxu0
  %v2810 = vadd.f32 0.0, %v2809
  %2811 = vmatprep.mubr.bf16.mxu0 %v2053
  %2812 = vmatmul.mubr.bf16.gmra.mrb[0].mxu0 %v2052
  %v2813 = vpop.f32.mrb[0].mxu0
  %v2814 = vadd.f32 0.0, %v2813
  %v2815 = vpop.f32.mrb[0].mxu0
  %v2816 = vadd.f32 0.0, %v2815
  %v2817 = vpop.f32.mrb[0].mxu0
  %v2818 = vadd.f32 0.0, %v2817
  %v2819 = vpop.f32.mrb[0].mxu0
  %v2820 = vadd.f32 0.0, %v2819
  %2821 = vmatprep.mubr.bf16.mxu0 %v2059
  %2822 = vmatmul.mubr.bf16.gmra.mrb[0].mxu0 %v2058
  %v2823 = vpop.f32.mrb[0].mxu0
  %v2824 = vadd.f32 0.0, %v2823
  %v2825 = vpop.f32.mrb[0].mxu0
  %v2826 = vadd.f32 0.0, %v2825
  %v2827 = vpop.f32.mrb[0].mxu0
  %v2828 = vadd.f32 0.0, %v2827
  %v2829 = vpop.f32.mrb[0].mxu0
  %v2830 = vadd.f32 0.0, %v2829
  %2831 = vmatprep.mubr.bf16.mxu0 %v2065
  %2832 = vmatmul.mubr.bf16.gmra.mrb[0].mxu0 %v2064
  %v2833 = vpop.f32.mrb[0].mxu0
  %v2834 = vadd.f32 0.0, %v2833
  %v2835 = vpop.f32.mrb[0].mxu0
  %v2836 = vadd.f32 0.0, %v2835
  %v2837 = vpop.f32.mrb[0].mxu0
  %v2838 = vadd.f32 0.0, %v2837
  %v2839 = vpop.f32.mrb[0].mxu0
  %v2840 = vadd.f32 0.0, %v2839
  %2841 = vmatprep.mubr.bf16.mxu0 %v2071
  %2842 = vmatmul.mubr.bf16.gmra.mrb[0].mxu0 %v2070
  %v2843 = vpop.f32.mrb[0].mxu0
  %v2844 = vadd.f32 0.0, %v2843
  %v2845 = vpop.f32.mrb[0].mxu0
  %v2846 = vadd.f32 0.0, %v2845
  %v2847 = vpop.f32.mrb[0].mxu0
  %v2848 = vadd.f32 0.0, %v2847
  %v2849 = vpop.f32.mrb[0].mxu0
  %v2850 = vadd.f32 0.0, %v2849
  %2851 = vmatprep.mubr.bf16.mxu0 %v2077
  %2852 = vmatmul.mubr.bf16.gmra.mrb[0].mxu0 %v2076
  %v2853 = vpop.f32.mrb[0].mxu0
  %v2854 = vadd.f32 0.0, %v2853
  %v2855 = vpop.f32.mrb[0].mxu0
  %v2856 = vadd.f32 0.0, %v2855
  %v2857 = vpop.f32.mrb[0].mxu0
  %v2858 = vadd.f32 0.0, %v2857
  %v2859 = vpop.f32.mrb[0].mxu0
  %v2860 = vadd.f32 0.0, %v2859
  %2861 = vmatprep.mubr.bf16.mxu0 %v2083
  %2862 = vmatmul.mubr.bf16.gmra.mrb[0].mxu0 %v2082
  %v2863 = vpop.f32.mrb[0].mxu0
  %v2864 = vadd.f32 0.0, %v2863
  %v2865 = vpop.f32.mrb[0].mxu0
  %v2866 = vadd.f32 0.0, %v2865
  %v2867 = vpop.f32.mrb[0].mxu0
  %v2868 = vadd.f32 0.0, %v2867
  %v2869 = vpop.f32.mrb[0].mxu0
  %v2870 = vadd.f32 0.0, %v2869
  %2871 = vmatprep.mubr.bf16.mxu0 %v2089
  %2872 = vmatmul.mubr.bf16.gmra.mrb[0].mxu0 %v2088
  %v2873 = vpop.f32.mrb[0].mxu0
  %v2874 = vadd.f32 0.0, %v2873
  %v2875 = vpop.f32.mrb[0].mxu0
  %v2876 = vadd.f32 0.0, %v2875
  %v2877 = vpop.f32.mrb[0].mxu0
  %v2878 = vadd.f32 0.0, %v2877
  %v2879 = vpop.f32.mrb[0].mxu0
  %v2880 = vadd.f32 0.0, %v2879
  %2881 = vmatprep.mubr.bf16.mxu0 %v2095
  %2882 = vmatmul.mubr.bf16.gmra.mrb[0].mxu0 %v2094
  %v2883 = vpop.f32.mrb[0].mxu0
  %v2884 = vadd.f32 0.0, %v2883
  %v2885 = vpop.f32.mrb[0].mxu0
  %v2886 = vadd.f32 0.0, %v2885
  %v2887 = vpop.f32.mrb[0].mxu0
  %v2888 = vadd.f32 0.0, %v2887
  %v2889 = vpop.f32.mrb[0].mxu0
  %v2890 = vadd.f32 0.0, %v2889
  %2891 = vmatprep.mubr.bf16.mxu0 %v2101
  %2892 = vmatmul.mubr.bf16.gmra.mrb[0].mxu0 %v2100
  %v2893 = vpop.f32.mrb[0].mxu0
  %v2894 = vadd.f32 0.0, %v2893
  %v2895 = vpop.f32.mrb[0].mxu0
  %v2896 = vadd.f32 0.0, %v2895
  %v2897 = vpop.f32.mrb[0].mxu0
  %v2898 = vadd.f32 0.0, %v2897
  %v2899 = vpop.f32.mrb[0].mxu0
  %v2900 = vadd.f32 0.0, %v2899
  %2901 = vmatprep.mubr.bf16.mxu0 %v2107
  %2902 = vmatmul.mubr.bf16.gmra.mrb[0].mxu0 %v2106
  %v2903 = vpop.f32.mrb[0].mxu0
  %v2904 = vadd.f32 0.0, %v2903
  %v2905 = vpop.f32.mrb[0].mxu0
  %v2906 = vadd.f32 0.0, %v2905
  %v2907 = vpop.f32.mrb[0].mxu0
  %v2908 = vadd.f32 0.0, %v2907
  %v2909 = vpop.f32.mrb[0].mxu0
  %v2910 = vadd.f32 0.0, %v2909
  %2911 = vmatprep.mubr.bf16.mxu0 %v2113
  %2912 = vmatmul.mubr.bf16.gmra.mrb[0].mxu0 %v2112
  %v2913 = vpop.f32.mrb[0].mxu0
  %v2914 = vadd.f32 0.0, %v2913
  %v2915 = vpop.f32.mrb[0].mxu0
  %v2916 = vadd.f32 0.0, %v2915
  %v2917 = vpop.f32.mrb[0].mxu0
  %v2918 = vadd.f32 0.0, %v2917
  %v2919 = vpop.f32.mrb[0].mxu0
  %v2920 = vadd.f32 0.0, %v2919
  %2921 = vmatprep.mubr.bf16.mxu0 %v2119
  %2922 = vmatmul.mubr.bf16.gmra.mrb[0].mxu0 %v2118
  %v2923 = vpop.f32.mrb[0].mxu0
  %v2924 = vadd.f32 0.0, %v2923
  %v2925 = vpop.f32.mrb[0].mxu0
  %v2926 = vadd.f32 0.0, %v2925
  %v2927 = vpop.f32.mrb[0].mxu0
  %v2928 = vadd.f32 0.0, %v2927
  %v2929 = vpop.f32.mrb[0].mxu0
  %v2930 = vadd.f32 0.0, %v2929
  %2931 = vmatprep.mubr.bf16.mxu0 %v2125
  %2932 = vmatmul.mubr.bf16.gmra.mrb[0].mxu0 %v2124
  %v2933 = vpop.f32.mrb[0].mxu0
  %v2934 = vadd.f32 0.0, %v2933
  %v2935 = vpop.f32.mrb[0].mxu0
  %v2936 = vadd.f32 0.0, %v2935
  %v2937 = vpop.f32.mrb[0].mxu0
  %v2938 = vadd.f32 0.0, %v2937
  %v2939 = vpop.f32.mrb[0].mxu0
  %v2940 = vadd.f32 0.0, %v2939
  %2941 = vmatprep.mubr.bf16.mxu0 %v2131
  %2942 = vmatmul.mubr.bf16.gmra.mrb[0].mxu0 %v2130
  %v2943 = vpop.f32.mrb[0].mxu0
  %v2944 = vadd.f32 0.0, %v2943
  %v2945 = vpop.f32.mrb[0].mxu0
  %v2946 = vadd.f32 0.0, %v2945
  %v2947 = vpop.f32.mrb[0].mxu0
  %v2948 = vadd.f32 0.0, %v2947
  %v2949 = vpop.f32.mrb[0].mxu0
  %v2950 = vadd.f32 0.0, %v2949
  %2951 = vmatprep.mubr.bf16.mxu0 %v2137
  %2952 = vmatmul.mubr.bf16.gmra.mrb[0].mxu0 %v2136
  %v2953 = vpop.f32.mrb[0].mxu0
  %v2954 = vadd.f32 0.0, %v2953
  %v2955 = vpop.f32.mrb[0].mxu0
  %v2956 = vadd.f32 0.0, %v2955
  %v2957 = vpop.f32.mrb[0].mxu0
  %v2958 = vadd.f32 0.0, %v2957
  %v2959 = vpop.f32.mrb[0].mxu0
  %v2960 = vadd.f32 0.0, %v2959
  %2961 = vmatprep.mubr.bf16.mxu0 %v2143
  %2962 = vmatmul.mubr.bf16.gmra.mrb[0].mxu0 %v2142
  %v2963 = vpop.f32.mrb[0].mxu0
  %v2964 = vadd.f32 0.0, %v2963
  %v2965 = vpop.f32.mrb[0].mxu0
  %v2966 = vadd.f32 0.0, %v2965
  %v2967 = vpop.f32.mrb[0].mxu0
  %v2968 = vadd.f32 0.0, %v2967
  %v2969 = vpop.f32.mrb[0].mxu0
  %v2970 = vadd.f32 0.0, %v2969
  %2971 = vmatprep.mubr.bf16.mxu0 %v2149
  %2972 = vmatmul.mubr.bf16.gmra.mrb[0].mxu0 %v2148
  %v2973 = vpop.f32.mrb[0].mxu0
  %v2974 = vadd.f32 0.0, %v2973
  %v2975 = vpop.f32.mrb[0].mxu0
  %v2976 = vadd.f32 0.0, %v2975
  %v2977 = vpop.f32.mrb[0].mxu0
  %v2978 = vadd.f32 0.0, %v2977
  %v2979 = vpop.f32.mrb[0].mxu0
  %v2980 = vadd.f32 0.0, %v2979
  %2981 = vmatprep.mubr.bf16.mxu0 %v2155
  %2982 = vmatmul.mubr.bf16.gmra.mrb[0].mxu0 %v2154
  %v2983 = vpop.f32.mrb[0].mxu0
  %v2984 = vadd.f32 0.0, %v2983
  %v2985 = vpop.f32.mrb[0].mxu0
  %v2986 = vadd.f32 0.0, %v2985
  %v2987 = vpop.f32.mrb[0].mxu0
  %v2988 = vadd.f32 0.0, %v2987
  %v2989 = vpop.f32.mrb[0].mxu0
  %v2990 = vadd.f32 0.0, %v2989
  %2991 = vmatprep.mubr.bf16.mxu0 %v2161
  %2992 = vmatmul.mubr.bf16.gmra.mrb[0].mxu0 %v2160
  %v2993 = vpop.f32.mrb[0].mxu0
  %v2994 = vadd.f32 0.0, %v2993
  %v2995 = vpop.f32.mrb[0].mxu0
  %v2996 = vadd.f32 0.0, %v2995
  %v2997 = vpop.f32.mrb[0].mxu0
  %v2998 = vadd.f32 0.0, %v2997
  %v2999 = vpop.f32.mrb[0].mxu0
  %v3000 = vadd.f32 0.0, %v2999
  %3001 = vmatprep.mubr.bf16.mxu0 %v2167
  %3002 = vmatmul.mubr.bf16.gmra.mrb[0].mxu0 %v2166
  %v3003 = vpop.f32.mrb[0].mxu0
  %v3004 = vadd.f32 0.0, %v3003
  %v3005 = vpop.f32.mrb[0].mxu0
  %v3006 = vadd.f32 0.0, %v3005
  %v3007 = vpop.f32.mrb[0].mxu0
  %v3008 = vadd.f32 0.0, %v3007
  %v3009 = vpop.f32.mrb[0].mxu0
  %v3010 = vadd.f32 0.0, %v3009
  %3011 = vmatprep.mubr.bf16.mxu0 %v2173
  %3012 = vmatmul.mubr.bf16.gmra.mrb[0].mxu0 %v2172
  %v3013 = vpop.f32.mrb[0].mxu0
  %v3014 = vadd.f32 0.0, %v3013
  %v3015 = vpop.f32.mrb[0].mxu0
  %v3016 = vadd.f32 0.0, %v3015
  %v3017 = vpop.f32.mrb[0].mxu0
  %v3018 = vadd.f32 0.0, %v3017
  %v3019 = vpop.f32.mrb[0].mxu0
  %v3020 = vadd.f32 0.0, %v3019
  %3021 = vdwg.mxu0
  %3022 = vmatprep.subr.bf16.mxu0 %v1041
  %3023 = vmatpush1.bf16.msra.mxu0 %v1040
  %3024 = vmatprep.subr.bf16.mxu0 %v1043
  %3025 = vmatpush1.bf16.msra.mxu0 %v1042
  %3026 = vmatprep.subr.bf16.mxu0 %v1045
  %3027 = vmatpush1.bf16.msra.mxu0 %v1044
  %3028 = vmatprep.subr.bf16.mxu0 %v1047
  %3029 = vmatpush1.bf16.msra.mxu0 %v1046
  %3030 = vmatprep.subr.bf16.mxu0 %v1049
  %3031 = vmatpush1.bf16.msra.mxu0 %v1048
  %3032 = vmatprep.subr.bf16.mxu0 %v1051
  %3033 = vmatpush1.bf16.msra.mxu0 %v1050
  %3034 = vmatprep.subr.bf16.mxu0 %v1053
  %3035 = vmatpush1.bf16.msra.mxu0 %v1052
  %3036 = vmatprep.subr.bf16.mxu0 %v1055
  %3037 = vmatpush1.bf16.msra.mxu0 %v1054
  %3038 = vmatprep.subr.bf16.mxu0 %v1057
  %3039 = vmatpush1.bf16.msra.mxu0 %v1056
  %3040 = vmatprep.subr.bf16.mxu0 %v1059
  %3041 = vmatpush1.bf16.msra.mxu0 %v1058
  %3042 = vmatprep.subr.bf16.mxu0 %v1061
  %3043 = vmatpush1.bf16.msra.mxu0 %v1060
  %3044 = vmatprep.subr.bf16.mxu0 %v1063
  %3045 = vmatpush1.bf16.msra.mxu0 %v1062
  %3046 = vmatprep.subr.bf16.mxu0 %v1065
  %3047 = vmatpush1.bf16.msra.mxu0 %v1064
  %3048 = vmatprep.subr.bf16.mxu0 %v1067
  %3049 = vmatpush1.bf16.msra.mxu0 %v1066
  %3050 = vmatprep.subr.bf16.mxu0 %v1069
  %3051 = vmatpush1.bf16.msra.mxu0 %v1068
  %3052 = vmatprep.subr.bf16.mxu0 %v1071
  %3053 = vmatpush1.bf16.msra.mxu0 %v1070
  %3054 = vmatprep.mubr.bf16.mxu0 %v1911
  %3055 = vmatmul.mubr.bf16.gmra.mrb[0].mxu0 %v1910
  %v3056 = vpop.f32.mrb[0].mxu0
  %v3057 = vadd.f32 %v2574, %v3056
  %v3058 = vpop.f32.mrb[0].mxu0
  %v3059 = vadd.f32 %v2576, %v3058
  %v3060 = vpop.f32.mrb[0].mxu0
  %v3061 = vadd.f32 %v2578, %v3060
  %v3062 = vpop.f32.mrb[0].mxu0
  %v3063 = vadd.f32 %v2580, %v3062
  %3064 = vmatprep.mubr.bf16.mxu0 %v1917
  %3065 = vmatmul.mubr.bf16.gmra.mrb[0].mxu0 %v1916
  %v3066 = vpop.f32.mrb[0].mxu0
  %v3067 = vadd.f32 %v2584, %v3066
  %v3068 = vpop.f32.mrb[0].mxu0
  %v3069 = vadd.f32 %v2586, %v3068
  %v3070 = vpop.f32.mrb[0].mxu0
  %v3071 = vadd.f32 %v2588, %v3070
  %v3072 = vpop.f32.mrb[0].mxu0
  %v3073 = vadd.f32 %v2590, %v3072
  %3074 = vmatprep.mubr.bf16.mxu0 %v1923
  %3075 = vmatmul.mubr.bf16.gmra.mrb[0].mxu0 %v1922
  %v3076 = vpop.f32.mrb[0].mxu0
  %v3077 = vadd.f32 %v2594, %v3076
  %v3078 = vpop.f32.mrb[0].mxu0
  %v3079 = vadd.f32 %v2596, %v3078
  %v3080 = vpop.f32.mrb[0].mxu0
  %v3081 = vadd.f32 %v2598, %v3080
  %v3082 = vpop.f32.mrb[0].mxu0
  %v3083 = vadd.f32 %v2600, %v3082
  %3084 = vmatprep.mubr.bf16.mxu0 %v1929
  %3085 = vmatmul.mubr.bf16.gmra.mrb[0].mxu0 %v1928
  %v3086 = vpop.f32.mrb[0].mxu0
  %v3087 = vadd.f32 %v2604, %v3086
  %v3088 = vpop.f32.mrb[0].mxu0
  %v3089 = vadd.f32 %v2606, %v3088
  %v3090 = vpop.f32.mrb[0].mxu0
  %v3091 = vadd.f32 %v2608, %v3090
  %v3092 = vpop.f32.mrb[0].mxu0
  %v3093 = vadd.f32 %v2610, %v3092
  %3094 = vmatprep.mubr.bf16.mxu0 %v1935
  %3095 = vmatmul.mubr.bf16.gmra.mrb[0].mxu0 %v1934
  %v3096 = vpop.f32.mrb[0].mxu0
  %v3097 = vadd.f32 %v2614, %v3096
  %v3098 = vpop.f32.mrb[0].mxu0
  %v3099 = vadd.f32 %v2616, %v3098
  %v3100 = vpop.f32.mrb[0].mxu0
  %v3101 = vadd.f32 %v2618, %v3100
  %v3102 = vpop.f32.mrb[0].mxu0
  %v3103 = vadd.f32 %v2620, %v3102
  %3104 = vmatprep.mubr.bf16.mxu0 %v1941
  %3105 = vmatmul.mubr.bf16.gmra.mrb[0].mxu0 %v1940
  %v3106 = vpop.f32.mrb[0].mxu0
  %v3107 = vadd.f32 %v2624, %v3106
  %v3108 = vpop.f32.mrb[0].mxu0
  %v3109 = vadd.f32 %v2626, %v3108
  %v3110 = vpop.f32.mrb[0].mxu0
  %v3111 = vadd.f32 %v2628, %v3110
  %v3112 = vpop.f32.mrb[0].mxu0
  %v3113 = vadd.f32 %v2630, %v3112
  %3114 = vmatprep.mubr.bf16.mxu0 %v1947
  %3115 = vmatmul.mubr.bf16.gmra.mrb[0].mxu0 %v1946
  %v3116 = vpop.f32.mrb[0].mxu0
  %v3117 = vadd.f32 %v2634, %v3116
  %v3118 = vpop.f32.mrb[0].mxu0
  %v3119 = vadd.f32 %v2636, %v3118
  %v3120 = vpop.f32.mrb[0].mxu0
  %v3121 = vadd.f32 %v2638, %v3120
  %v3122 = vpop.f32.mrb[0].mxu0
  %v3123 = vadd.f32 %v2640, %v3122
  %3124 = vmatprep.mubr.bf16.mxu0 %v1953
  %3125 = vmatmul.mubr.bf16.gmra.mrb[0].mxu0 %v1952
  %v3126 = vpop.f32.mrb[0].mxu0
  %v3127 = vadd.f32 %v2644, %v3126
  %v3128 = vpop.f32.mrb[0].mxu0
  %v3129 = vadd.f32 %v2646, %v3128
  %v3130 = vpop.f32.mrb[0].mxu0
  %v3131 = vadd.f32 %v2648, %v3130
  %v3132 = vpop.f32.mrb[0].mxu0
  %v3133 = vadd.f32 %v2650, %v3132
  %3134 = vmatprep.mubr.bf16.mxu0 %v1959
  %3135 = vmatmul.mubr.bf16.gmra.mrb[0].mxu0 %v1958
  %v3136 = vpop.f32.mrb[0].mxu0
  %v3137 = vadd.f32 %v2654, %v3136
  %v3138 = vpop.f32.mrb[0].mxu0
  %v3139 = vadd.f32 %v2656, %v3138
  %v3140 = vpop.f32.mrb[0].mxu0
  %v3141 = vadd.f32 %v2658, %v3140
  %v3142 = vpop.f32.mrb[0].mxu0
  %v3143 = vadd.f32 %v2660, %v3142
  %3144 = vmatprep.mubr.bf16.mxu0 %v1965
  %3145 = vmatmul.mubr.bf16.gmra.mrb[0].mxu0 %v1964
  %v3146 = vpop.f32.mrb[0].mxu0
  %v3147 = vadd.f32 %v2664, %v3146
  %v3148 = vpop.f32.mrb[0].mxu0
  %v3149 = vadd.f32 %v2666, %v3148
  %v3150 = vpop.f32.mrb[0].mxu0
  %v3151 = vadd.f32 %v2668, %v3150
  %v3152 = vpop.f32.mrb[0].mxu0
  %v3153 = vadd.f32 %v2670, %v3152
  %3154 = vmatprep.mubr.bf16.mxu0 %v1971
  %3155 = vmatmul.mubr.bf16.gmra.mrb[0].mxu0 %v1970
  %v3156 = vpop.f32.mrb[0].mxu0
  %v3157 = vadd.f32 %v2674, %v3156
  %v3158 = vpop.f32.mrb[0].mxu0
  %v3159 = vadd.f32 %v2676, %v3158
  %v3160 = vpop.f32.mrb[0].mxu0
  %v3161 = vadd.f32 %v2678, %v3160
  %v3162 = vpop.f32.mrb[0].mxu0
  %v3163 = vadd.f32 %v2680, %v3162
  %3164 = vmatprep.mubr.bf16.mxu0 %v1977
  %3165 = vmatmul.mubr.bf16.gmra.mrb[0].mxu0 %v1976
  %v3166 = vpop.f32.mrb[0].mxu0
  %v3167 = vadd.f32 %v2684, %v3166
  %v3168 = vpop.f32.mrb[0].mxu0
  %v3169 = vadd.f32 %v2686, %v3168
  %v3170 = vpop.f32.mrb[0].mxu0
  %v3171 = vadd.f32 %v2688, %v3170
  %v3172 = vpop.f32.mrb[0].mxu0
  %v3173 = vadd.f32 %v2690, %v3172
  %3174 = vmatprep.mubr.bf16.mxu0 %v1983
  %3175 = vmatmul.mubr.bf16.gmra.mrb[0].mxu0 %v1982
  %v3176 = vpop.f32.mrb[0].mxu0
  %v3177 = vadd.f32 %v2694, %v3176
  %v3178 = vpop.f32.mrb[0].mxu0
  %v3179 = vadd.f32 %v2696, %v3178
  %v3180 = vpop.f32.mrb[0].mxu0
  %v3181 = vadd.f32 %v2698, %v3180
  %v3182 = vpop.f32.mrb[0].mxu0
  %v3183 = vadd.f32 %v2700, %v3182
  %3184 = vmatprep.mubr.bf16.mxu0 %v1989
  %3185 = vmatmul.mubr.bf16.gmra.mrb[0].mxu0 %v1988
  %v3186 = vpop.f32.mrb[0].mxu0
  %v3187 = vadd.f32 %v2704, %v3186
  %v3188 = vpop.f32.mrb[0].mxu0
  %v3189 = vadd.f32 %v2706, %v3188
  %v3190 = vpop.f32.mrb[0].mxu0
  %v3191 = vadd.f32 %v2708, %v3190
  %v3192 = vpop.f32.mrb[0].mxu0
  %v3193 = vadd.f32 %v2710, %v3192
  %3194 = vmatprep.mubr.bf16.mxu0 %v1995
  %3195 = vmatmul.mubr.bf16.gmra.mrb[0].mxu0 %v1994
  %v3196 = vpop.f32.mrb[0].mxu0
  %v3197 = vadd.f32 %v2714, %v3196
  %v3198 = vpop.f32.mrb[0].mxu0
  %v3199 = vadd.f32 %v2716, %v3198
  %v3200 = vpop.f32.mrb[0].mxu0
  %v3201 = vadd.f32 %v2718, %v3200
  %v3202 = vpop.f32.mrb[0].mxu0
  %v3203 = vadd.f32 %v2720, %v3202
  %3204 = vmatprep.mubr.bf16.mxu0 %v2001
  %3205 = vmatmul.mubr.bf16.gmra.mrb[0].mxu0 %v2000
  %v3206 = vpop.f32.mrb[0].mxu0
  %v3207 = vadd.f32 %v2724, %v3206
  %v3208 = vpop.f32.mrb[0].mxu0
  %v3209 = vadd.f32 %v2726, %v3208
  %v3210 = vpop.f32.mrb[0].mxu0
  %v3211 = vadd.f32 %v2728, %v3210
  %v3212 = vpop.f32.mrb[0].mxu0
  %v3213 = vadd.f32 %v2730, %v3212
  %3214 = vmatprep.mubr.bf16.mxu0 %v2007
  %3215 = vmatmul.mubr.bf16.gmra.mrb[0].mxu0 %v2006
  %v3216 = vpop.f32.mrb[0].mxu0
  %v3217 = vadd.f32 %v2734, %v3216
  %v3218 = vpop.f32.mrb[0].mxu0
  %v3219 = vadd.f32 %v2736, %v3218
  %v3220 = vpop.f32.mrb[0].mxu0
  %v3221 = vadd.f32 %v2738, %v3220
  %v3222 = vpop.f32.mrb[0].mxu0
  %v3223 = vadd.f32 %v2740, %v3222
  %3224 = vmatprep.mubr.bf16.mxu0 %v2013
  %3225 = vmatmul.mubr.bf16.gmra.mrb[0].mxu0 %v2012
  %v3226 = vpop.f32.mrb[0].mxu0
  %v3227 = vadd.f32 %v2744, %v3226
  %v3228 = vpop.f32.mrb[0].mxu0
  %v3229 = vadd.f32 %v2746, %v3228
  %v3230 = vpop.f32.mrb[0].mxu0
  %v3231 = vadd.f32 %v2748, %v3230
  %v3232 = vpop.f32.mrb[0].mxu0
  %v3233 = vadd.f32 %v2750, %v3232
  %3234 = vmatprep.mubr.bf16.mxu0 %v2019
  %3235 = vmatmul.mubr.bf16.gmra.mrb[0].mxu0 %v2018
  %v3236 = vpop.f32.mrb[0].mxu0
  %v3237 = vadd.f32 %v2754, %v3236
  %v3238 = vpop.f32.mrb[0].mxu0
  %v3239 = vadd.f32 %v2756, %v3238
  %v3240 = vpop.f32.mrb[0].mxu0
  %v3241 = vadd.f32 %v2758, %v3240
  %v3242 = vpop.f32.mrb[0].mxu0
  %v3243 = vadd.f32 %v2760, %v3242
  %3244 = vmatprep.mubr.bf16.mxu0 %v2025
  %3245 = vmatmul.mubr.bf16.gmra.mrb[0].mxu0 %v2024
  %v3246 = vpop.f32.mrb[0].mxu0
  %v3247 = vadd.f32 %v2764, %v3246
  %v3248 = vpop.f32.mrb[0].mxu0
  %v3249 = vadd.f32 %v2766, %v3248
  %v3250 = vpop.f32.mrb[0].mxu0
  %v3251 = vadd.f32 %v2768, %v3250
  %v3252 = vpop.f32.mrb[0].mxu0
  %v3253 = vadd.f32 %v2770, %v3252
  %3254 = vmatprep.mubr.bf16.mxu0 %v2031
  %3255 = vmatmul.mubr.bf16.gmra.mrb[0].mxu0 %v2030
  %v3256 = vpop.f32.mrb[0].mxu0
  %v3257 = vadd.f32 %v2774, %v3256
  %v3258 = vpop.f32.mrb[0].mxu0
  %v3259 = vadd.f32 %v2776, %v3258
  %v3260 = vpop.f32.mrb[0].mxu0
  %v3261 = vadd.f32 %v2778, %v3260
  %v3262 = vpop.f32.mrb[0].mxu0
  %v3263 = vadd.f32 %v2780, %v3262
  %3264 = vmatprep.mubr.bf16.mxu0 %v2037
  %3265 = vmatmul.mubr.bf16.gmra.mrb[0].mxu0 %v2036
  %v3266 = vpop.f32.mrb[0].mxu0
  %v3267 = vadd.f32 %v2784, %v3266
  %v3268 = vpop.f32.mrb[0].mxu0
  %v3269 = vadd.f32 %v2786, %v3268
  %v3270 = vpop.f32.mrb[0].mxu0
  %v3271 = vadd.f32 %v2788, %v3270
  %v3272 = vpop.f32.mrb[0].mxu0
  %v3273 = vadd.f32 %v2790, %v3272
  %3274 = vmatprep.mubr.bf16.mxu0 %v2043
  %3275 = vmatmul.mubr.bf16.gmra.mrb[0].mxu0 %v2042
  %v3276 = vpop.f32.mrb[0].mxu0
  %v3277 = vadd.f32 %v2794, %v3276
  %v3278 = vpop.f32.mrb[0].mxu0
  %v3279 = vadd.f32 %v2796, %v3278
  %v3280 = vpop.f32.mrb[0].mxu0
  %v3281 = vadd.f32 %v2798, %v3280
  %v3282 = vpop.f32.mrb[0].mxu0
  %v3283 = vadd.f32 %v2800, %v3282
  %3284 = vmatprep.mubr.bf16.mxu0 %v2049
  %3285 = vmatmul.mubr.bf16.gmra.mrb[0].mxu0 %v2048
  %v3286 = vpop.f32.mrb[0].mxu0
  %v3287 = vadd.f32 %v2804, %v3286
  %v3288 = vpop.f32.mrb[0].mxu0
  %v3289 = vadd.f32 %v2806, %v3288
  %v3290 = vpop.f32.mrb[0].mxu0
  %v3291 = vadd.f32 %v2808, %v3290
  %v3292 = vpop.f32.mrb[0].mxu0
  %v3293 = vadd.f32 %v2810, %v3292
  %3294 = vmatprep.mubr.bf16.mxu0 %v2055
  %3295 = vmatmul.mubr.bf16.gmra.mrb[0].mxu0 %v2054
  %v3296 = vpop.f32.mrb[0].mxu0
  %v3297 = vadd.f32 %v2814, %v3296
  %v3298 = vpop.f32.mrb[0].mxu0
  %v3299 = vadd.f32 %v2816, %v3298
  %v3300 = vpop.f32.mrb[0].mxu0
  %v3301 = vadd.f32 %v2818, %v3300
  %v3302 = vpop.f32.mrb[0].mxu0
  %v3303 = vadd.f32 %v2820, %v3302
  %3304 = vmatprep.mubr.bf16.mxu0 %v2061
  %3305 = vmatmul.mubr.bf16.gmra.mrb[0].mxu0 %v2060
  %v3306 = vpop.f32.mrb[0].mxu0
  %v3307 = vadd.f32 %v2824, %v3306
  %v3308 = vpop.f32.mrb[0].mxu0
  %v3309 = vadd.f32 %v2826, %v3308
  %v3310 = vpop.f32.mrb[0].mxu0
  %v3311 = vadd.f32 %v2828, %v3310
  %v3312 = vpop.f32.mrb[0].mxu0
  %v3313 = vadd.f32 %v2830, %v3312
  %3314 = vmatprep.mubr.bf16.mxu0 %v2067
  %3315 = vmatmul.mubr.bf16.gmra.mrb[0].mxu0 %v2066
  %v3316 = vpop.f32.mrb[0].mxu0
  %v3317 = vadd.f32 %v2834, %v3316
  %v3318 = vpop.f32.mrb[0].mxu0
  %v3319 = vadd.f32 %v2836, %v3318
  %v3320 = vpop.f32.mrb[0].mxu0
  %v3321 = vadd.f32 %v2838, %v3320
  %v3322 = vpop.f32.mrb[0].mxu0
  %v3323 = vadd.f32 %v2840, %v3322
  %3324 = vmatprep.mubr.bf16.mxu0 %v2073
  %3325 = vmatmul.mubr.bf16.gmra.mrb[0].mxu0 %v2072
  %v3326 = vpop.f32.mrb[0].mxu0
  %v3327 = vadd.f32 %v2844, %v3326
  %v3328 = vpop.f32.mrb[0].mxu0
  %v3329 = vadd.f32 %v2846, %v3328
  %v3330 = vpop.f32.mrb[0].mxu0
  %v3331 = vadd.f32 %v2848, %v3330
  %v3332 = vpop.f32.mrb[0].mxu0
  %v3333 = vadd.f32 %v2850, %v3332
  %3334 = vmatprep.mubr.bf16.mxu0 %v2079
  %3335 = vmatmul.mubr.bf16.gmra.mrb[0].mxu0 %v2078
  %v3336 = vpop.f32.mrb[0].mxu0
  %v3337 = vadd.f32 %v2854, %v3336
  %v3338 = vpop.f32.mrb[0].mxu0
  %v3339 = vadd.f32 %v2856, %v3338
  %v3340 = vpop.f32.mrb[0].mxu0
  %v3341 = vadd.f32 %v2858, %v3340
  %v3342 = vpop.f32.mrb[0].mxu0
  %v3343 = vadd.f32 %v2860, %v3342
  %3344 = vmatprep.mubr.bf16.mxu0 %v2085
  %3345 = vmatmul.mubr.bf16.gmra.mrb[0].mxu0 %v2084
  %v3346 = vpop.f32.mrb[0].mxu0
  %v3347 = vadd.f32 %v2864, %v3346
  %v3348 = vpop.f32.mrb[0].mxu0
  %v3349 = vadd.f32 %v2866, %v3348
  %v3350 = vpop.f32.mrb[0].mxu0
  %v3351 = vadd.f32 %v2868, %v3350
  %v3352 = vpop.f32.mrb[0].mxu0
  %v3353 = vadd.f32 %v2870, %v3352
  %3354 = vmatprep.mubr.bf16.mxu0 %v2091
  %3355 = vmatmul.mubr.bf16.gmra.mrb[0].mxu0 %v2090
  %v3356 = vpop.f32.mrb[0].mxu0
  %v3357 = vadd.f32 %v2874, %v3356
  %v3358 = vpop.f32.mrb[0].mxu0
  %v3359 = vadd.f32 %v2876, %v3358
  %v3360 = vpop.f32.mrb[0].mxu0
  %v3361 = vadd.f32 %v2878, %v3360
  %v3362 = vpop.f32.mrb[0].mxu0
  %v3363 = vadd.f32 %v2880, %v3362
  %3364 = vmatprep.mubr.bf16.mxu0 %v2097
  %3365 = vmatmul.mubr.bf16.gmra.mrb[0].mxu0 %v2096
  %v3366 = vpop.f32.mrb[0].mxu0
  %v3367 = vadd.f32 %v2884, %v3366
  %v3368 = vpop.f32.mrb[0].mxu0
  %v3369 = vadd.f32 %v2886, %v3368
  %v3370 = vpop.f32.mrb[0].mxu0
  %v3371 = vadd.f32 %v2888, %v3370
  %v3372 = vpop.f32.mrb[0].mxu0
  %v3373 = vadd.f32 %v2890, %v3372
  %3374 = vmatprep.mubr.bf16.mxu0 %v2103
  %3375 = vmatmul.mubr.bf16.gmra.mrb[0].mxu0 %v2102
  %v3376 = vpop.f32.mrb[0].mxu0
  %v3377 = vadd.f32 %v2894, %v3376
  %v3378 = vpop.f32.mrb[0].mxu0
  %v3379 = vadd.f32 %v2896, %v3378
  %v3380 = vpop.f32.mrb[0].mxu0
  %v3381 = vadd.f32 %v2898, %v3380
  %v3382 = vpop.f32.mrb[0].mxu0
  %v3383 = vadd.f32 %v2900, %v3382
  %3384 = vmatprep.mubr.bf16.mxu0 %v2109
  %3385 = vmatmul.mubr.bf16.gmra.mrb[0].mxu0 %v2108
  %v3386 = vpop.f32.mrb[0].mxu0
  %v3387 = vadd.f32 %v2904, %v3386
  %v3388 = vpop.f32.mrb[0].mxu0
  %v3389 = vadd.f32 %v2906, %v3388
  %v3390 = vpop.f32.mrb[0].mxu0
  %v3391 = vadd.f32 %v2908, %v3390
  %v3392 = vpop.f32.mrb[0].mxu0
  %v3393 = vadd.f32 %v2910, %v3392
  %3394 = vmatprep.mubr.bf16.mxu0 %v2115
  %3395 = vmatmul.mubr.bf16.gmra.mrb[0].mxu0 %v2114
  %v3396 = vpop.f32.mrb[0].mxu0
  %v3397 = vadd.f32 %v2914, %v3396
  %v3398 = vpop.f32.mrb[0].mxu0
  %v3399 = vadd.f32 %v2916, %v3398
  %v3400 = vpop.f32.mrb[0].mxu0
  %v3401 = vadd.f32 %v2918, %v3400
  %v3402 = vpop.f32.mrb[0].mxu0
  %v3403 = vadd.f32 %v2920, %v3402
  %3404 = vmatprep.mubr.bf16.mxu0 %v2121
  %3405 = vmatmul.mubr.bf16.gmra.mrb[0].mxu0 %v2120
  %v3406 = vpop.f32.mrb[0].mxu0
  %v3407 = vadd.f32 %v2924, %v3406
  %v3408 = vpop.f32.mrb[0].mxu0
  %v3409 = vadd.f32 %v2926, %v3408
  %v3410 = vpop.f32.mrb[0].mxu0
  %v3411 = vadd.f32 %v2928, %v3410
  %v3412 = vpop.f32.mrb[0].mxu0
  %v3413 = vadd.f32 %v2930, %v3412
  %3414 = vmatprep.mubr.bf16.mxu0 %v2127
  %3415 = vmatmul.mubr.bf16.gmra.mrb[0].mxu0 %v2126
  %v3416 = vpop.f32.mrb[0].mxu0
  %v3417 = vadd.f32 %v2934, %v3416
  %v3418 = vpop.f32.mrb[0].mxu0
  %v3419 = vadd.f32 %v2936, %v3418
  %v3420 = vpop.f32.mrb[0].mxu0
  %v3421 = vadd.f32 %v2938, %v3420
  %v3422 = vpop.f32.mrb[0].mxu0
  %v3423 = vadd.f32 %v2940, %v3422
  %3424 = vmatprep.mubr.bf16.mxu0 %v2133
  %3425 = vmatmul.mubr.bf16.gmra.mrb[0].mxu0 %v2132
  %v3426 = vpop.f32.mrb[0].mxu0
  %v3427 = vadd.f32 %v2944, %v3426
  %v3428 = vpop.f32.mrb[0].mxu0
  %v3429 = vadd.f32 %v2946, %v3428
  %v3430 = vpop.f32.mrb[0].mxu0
  %v3431 = vadd.f32 %v2948, %v3430
  %v3432 = vpop.f32.mrb[0].mxu0
  %v3433 = vadd.f32 %v2950, %v3432
  %3434 = vmatprep.mubr.bf16.mxu0 %v2139
  %3435 = vmatmul.mubr.bf16.gmra.mrb[0].mxu0 %v2138
  %v3436 = vpop.f32.mrb[0].mxu0
  %v3437 = vadd.f32 %v2954, %v3436
  %v3438 = vpop.f32.mrb[0].mxu0
  %v3439 = vadd.f32 %v2956, %v3438
  %v3440 = vpop.f32.mrb[0].mxu0
  %v3441 = vadd.f32 %v2958, %v3440
  %v3442 = vpop.f32.mrb[0].mxu0
  %v3443 = vadd.f32 %v2960, %v3442
  %3444 = vmatprep.mubr.bf16.mxu0 %v2145
  %3445 = vmatmul.mubr.bf16.gmra.mrb[0].mxu0 %v2144
  %v3446 = vpop.f32.mrb[0].mxu0
  %v3447 = vadd.f32 %v2964, %v3446
  %v3448 = vpop.f32.mrb[0].mxu0
  %v3449 = vadd.f32 %v2966, %v3448
  %v3450 = vpop.f32.mrb[0].mxu0
  %v3451 = vadd.f32 %v2968, %v3450
  %v3452 = vpop.f32.mrb[0].mxu0
  %v3453 = vadd.f32 %v2970, %v3452
  %3454 = vmatprep.mubr.bf16.mxu0 %v2151
  %3455 = vmatmul.mubr.bf16.gmra.mrb[0].mxu0 %v2150
  %v3456 = vpop.f32.mrb[0].mxu0
  %v3457 = vadd.f32 %v2974, %v3456
  %v3458 = vpop.f32.mrb[0].mxu0
  %v3459 = vadd.f32 %v2976, %v3458
  %v3460 = vpop.f32.mrb[0].mxu0
  %v3461 = vadd.f32 %v2978, %v3460
  %v3462 = vpop.f32.mrb[0].mxu0
  %v3463 = vadd.f32 %v2980, %v3462
  %3464 = vmatprep.mubr.bf16.mxu0 %v2157
  %3465 = vmatmul.mubr.bf16.gmra.mrb[0].mxu0 %v2156
  %v3466 = vpop.f32.mrb[0].mxu0
  %v3467 = vadd.f32 %v2984, %v3466
  %v3468 = vpop.f32.mrb[0].mxu0
  %v3469 = vadd.f32 %v2986, %v3468
  %v3470 = vpop.f32.mrb[0].mxu0
  %v3471 = vadd.f32 %v2988, %v3470
  %v3472 = vpop.f32.mrb[0].mxu0
  %v3473 = vadd.f32 %v2990, %v3472
  %3474 = vmatprep.mubr.bf16.mxu0 %v2163
  %3475 = vmatmul.mubr.bf16.gmra.mrb[0].mxu0 %v2162
  %v3476 = vpop.f32.mrb[0].mxu0
  %v3477 = vadd.f32 %v2994, %v3476
  %v3478 = vpop.f32.mrb[0].mxu0
  %v3479 = vadd.f32 %v2996, %v3478
  %v3480 = vpop.f32.mrb[0].mxu0
  %v3481 = vadd.f32 %v2998, %v3480
  %v3482 = vpop.f32.mrb[0].mxu0
  %v3483 = vadd.f32 %v3000, %v3482
  %3484 = vmatprep.mubr.bf16.mxu0 %v2169
  %3485 = vmatmul.mubr.bf16.gmra.mrb[0].mxu0 %v2168
  %v3486 = vpop.f32.mrb[0].mxu0
  %v3487 = vadd.f32 %v3004, %v3486
  %v3488 = vpop.f32.mrb[0].mxu0
  %v3489 = vadd.f32 %v3006, %v3488
  %v3490 = vpop.f32.mrb[0].mxu0
  %v3491 = vadd.f32 %v3008, %v3490
  %v3492 = vpop.f32.mrb[0].mxu0
  %v3493 = vadd.f32 %v3010, %v3492
  %3494 = vmatprep.mubr.bf16.mxu0 %v2175
  %3495 = vmatmul.mubr.bf16.gmra.mrb[0].mxu0 %v2174
  %v3496 = vpop.f32.mrb[0].mxu0
  %v3497 = vadd.f32 %v3014, %v3496
  %v3498 = vpop.f32.mrb[0].mxu0
  %v3499 = vadd.f32 %v3016, %v3498
  %v3500 = vpop.f32.mrb[0].mxu0
  %v3501 = vadd.f32 %v3018, %v3500
  %v3502 = vpop.f32.mrb[0].mxu0
  %v3503 = vadd.f32 %v3020, %v3502
  %3504 = vdwg.mxu0
  %3505 = vmatprep.subr.bf16.mxu0 %v1073
  %3506 = vmatpush1.bf16.msra.mxu0 %v1072
  %3507 = vmatprep.subr.bf16.mxu0 %v1075
  %3508 = vmatpush1.bf16.msra.mxu0 %v1074
  %3509 = vmatprep.subr.bf16.mxu0 %v1077
  %3510 = vmatpush1.bf16.msra.mxu0 %v1076
  %3511 = vmatprep.subr.bf16.mxu0 %v1079
  %3512 = vmatpush1.bf16.msra.mxu0 %v1078
  %3513 = vmatprep.subr.bf16.mxu0 %v1081
  %3514 = vmatpush1.bf16.msra.mxu0 %v1080
  %3515 = vmatprep.subr.bf16.mxu0 %v1083
  %3516 = vmatpush1.bf16.msra.mxu0 %v1082
  %3517 = vmatprep.subr.bf16.mxu0 %v1085
  %3518 = vmatpush1.bf16.msra.mxu0 %v1084
  %3519 = vmatprep.subr.bf16.mxu0 %v1087
  %3520 = vmatpush1.bf16.msra.mxu0 %v1086
  %3521 = vmatprep.subr.bf16.mxu0 %v1089
  %3522 = vmatpush1.bf16.msra.mxu0 %v1088
  %3523 = vmatprep.subr.bf16.mxu0 %v1091
  %3524 = vmatpush1.bf16.msra.mxu0 %v1090
  %3525 = vmatprep.subr.bf16.mxu0 %v1093
  %3526 = vmatpush1.bf16.msra.mxu0 %v1092
  %3527 = vmatprep.subr.bf16.mxu0 %v1095
  %3528 = vmatpush1.bf16.msra.mxu0 %v1094
  %3529 = vmatprep.subr.bf16.mxu0 %v1097
  %3530 = vmatpush1.bf16.msra.mxu0 %v1096
  %3531 = vmatprep.subr.bf16.mxu0 0
  %3532 = vmatpush1.bf16.msra.mxu0 0
  %3533 = vmatprep.subr.bf16.mxu0 0
  %3534 = vmatpush1.bf16.msra.mxu0 0
  %3535 = vmatprep.subr.bf16.mxu0 0
  %3536 = vmatpush1.bf16.msra.mxu0 0
  %3537 = vmatprep.mubr.bf16.mxu0 %v2405
  %3538 = vmatmul.mubr.bf16.gmra.mrb[0].mxu0 %v1912
  %v3539 = vpop.f32.mrb[0].mxu0
  %v3540 = vadd.f32 %v3057, %v3539
  %v3541 = vpop.f32.mrb[0].mxu0
  %v3542 = vadd.f32 %v3059, %v3541
  %v3543 = vpop.f32.mrb[0].mxu0
  %v3544 = vadd.f32 %v3061, %v3543
  %v3545 = vpop.f32.mrb[0].mxu0
  %v3546 = vadd.f32 %v3063, %v3545
  %3547 = vmatprep.mubr.bf16.mxu0 %v2408
  %3548 = vmatmul.mubr.bf16.gmra.mrb[0].mxu0 %v1918
  %v3549 = vpop.f32.mrb[0].mxu0
  %v3550 = vadd.f32 %v3067, %v3549
  %v3551 = vpop.f32.mrb[0].mxu0
  %v3552 = vadd.f32 %v3069, %v3551
  %v3553 = vpop.f32.mrb[0].mxu0
  %v3554 = vadd.f32 %v3071, %v3553
  %v3555 = vpop.f32.mrb[0].mxu0
  %v3556 = vadd.f32 %v3073, %v3555
  %3557 = vmatprep.mubr.bf16.mxu0 %v2411
  %3558 = vmatmul.mubr.bf16.gmra.mrb[0].mxu0 %v1924
  %v3559 = vpop.f32.mrb[0].mxu0
  %v3560 = vadd.f32 %v3077, %v3559
  %v3561 = vpop.f32.mrb[0].mxu0
  %v3562 = vadd.f32 %v3079, %v3561
  %v3563 = vpop.f32.mrb[0].mxu0
  %v3564 = vadd.f32 %v3081, %v3563
  %v3565 = vpop.f32.mrb[0].mxu0
  %v3566 = vadd.f32 %v3083, %v3565
  %3567 = vmatprep.mubr.bf16.mxu0 %v2414
  %3568 = vmatmul.mubr.bf16.gmra.mrb[0].mxu0 %v1930
  %v3569 = vpop.f32.mrb[0].mxu0
  %v3570 = vadd.f32 %v3087, %v3569
  %v3571 = vpop.f32.mrb[0].mxu0
  %v3572 = vadd.f32 %v3089, %v3571
  %v3573 = vpop.f32.mrb[0].mxu0
  %v3574 = vadd.f32 %v3091, %v3573
  %v3575 = vpop.f32.mrb[0].mxu0
  %v3576 = vadd.f32 %v3093, %v3575
  %3577 = vmatprep.mubr.bf16.mxu0 %v2417
  %3578 = vmatmul.mubr.bf16.gmra.mrb[0].mxu0 %v1936
  %v3579 = vpop.f32.mrb[0].mxu0
  %v3580 = vadd.f32 %v3097, %v3579
  %v3581 = vpop.f32.mrb[0].mxu0
  %v3582 = vadd.f32 %v3099, %v3581
  %v3583 = vpop.f32.mrb[0].mxu0
  %v3584 = vadd.f32 %v3101, %v3583
  %v3585 = vpop.f32.mrb[0].mxu0
  %v3586 = vadd.f32 %v3103, %v3585
  %3587 = vmatprep.mubr.bf16.mxu0 %v2420
  %3588 = vmatmul.mubr.bf16.gmra.mrb[0].mxu0 %v1942
  %v3589 = vpop.f32.mrb[0].mxu0
  %v3590 = vadd.f32 %v3107, %v3589
  %v3591 = vpop.f32.mrb[0].mxu0
  %v3592 = vadd.f32 %v3109, %v3591
  %v3593 = vpop.f32.mrb[0].mxu0
  %v3594 = vadd.f32 %v3111, %v3593
  %v3595 = vpop.f32.mrb[0].mxu0
  %v3596 = vadd.f32 %v3113, %v3595
  %3597 = vmatprep.mubr.bf16.mxu0 %v2423
  %3598 = vmatmul.mubr.bf16.gmra.mrb[0].mxu0 %v1948
  %v3599 = vpop.f32.mrb[0].mxu0
  %v3600 = vadd.f32 %v3117, %v3599
  %v3601 = vpop.f32.mrb[0].mxu0
  %v3602 = vadd.f32 %v3119, %v3601
  %v3603 = vpop.f32.mrb[0].mxu0
  %v3604 = vadd.f32 %v3121, %v3603
  %v3605 = vpop.f32.mrb[0].mxu0
  %v3606 = vadd.f32 %v3123, %v3605
  %3607 = vmatprep.mubr.bf16.mxu0 %v2426
  %3608 = vmatmul.mubr.bf16.gmra.mrb[0].mxu0 %v1954
  %v3609 = vpop.f32.mrb[0].mxu0
  %v3610 = vadd.f32 %v3127, %v3609
  %v3611 = vpop.f32.mrb[0].mxu0
  %v3612 = vadd.f32 %v3129, %v3611
  %v3613 = vpop.f32.mrb[0].mxu0
  %v3614 = vadd.f32 %v3131, %v3613
  %v3615 = vpop.f32.mrb[0].mxu0
  %v3616 = vadd.f32 %v3133, %v3615
  %3617 = vmatprep.mubr.bf16.mxu0 %v2429
  %3618 = vmatmul.mubr.bf16.gmra.mrb[0].mxu0 %v1960
  %v3619 = vpop.f32.mrb[0].mxu0
  %v3620 = vadd.f32 %v3137, %v3619
  %v3621 = vpop.f32.mrb[0].mxu0
  %v3622 = vadd.f32 %v3139, %v3621
  %v3623 = vpop.f32.mrb[0].mxu0
  %v3624 = vadd.f32 %v3141, %v3623
  %v3625 = vpop.f32.mrb[0].mxu0
  %v3626 = vadd.f32 %v3143, %v3625
  %3627 = vmatprep.mubr.bf16.mxu0 %v2432
  %3628 = vmatmul.mubr.bf16.gmra.mrb[0].mxu0 %v1966
  %v3629 = vpop.f32.mrb[0].mxu0
  %v3630 = vadd.f32 %v3147, %v3629
  %v3631 = vpop.f32.mrb[0].mxu0
  %v3632 = vadd.f32 %v3149, %v3631
  %v3633 = vpop.f32.mrb[0].mxu0
  %v3634 = vadd.f32 %v3151, %v3633
  %v3635 = vpop.f32.mrb[0].mxu0
  %v3636 = vadd.f32 %v3153, %v3635
  %3637 = vmatprep.mubr.bf16.mxu0 %v2435
  %3638 = vmatmul.mubr.bf16.gmra.mrb[0].mxu0 %v1972
  %v3639 = vpop.f32.mrb[0].mxu0
  %v3640 = vadd.f32 %v3157, %v3639
  %v3641 = vpop.f32.mrb[0].mxu0
  %v3642 = vadd.f32 %v3159, %v3641
  %v3643 = vpop.f32.mrb[0].mxu0
  %v3644 = vadd.f32 %v3161, %v3643
  %v3645 = vpop.f32.mrb[0].mxu0
  %v3646 = vadd.f32 %v3163, %v3645
  %3647 = vmatprep.mubr.bf16.mxu0 %v2438
  %3648 = vmatmul.mubr.bf16.gmra.mrb[0].mxu0 %v1978
  %v3649 = vpop.f32.mrb[0].mxu0
  %v3650 = vadd.f32 %v3167, %v3649
  %v3651 = vpop.f32.mrb[0].mxu0
  %v3652 = vadd.f32 %v3169, %v3651
  %v3653 = vpop.f32.mrb[0].mxu0
  %v3654 = vadd.f32 %v3171, %v3653
  %v3655 = vpop.f32.mrb[0].mxu0
  %v3656 = vadd.f32 %v3173, %v3655
  %3657 = vmatprep.mubr.bf16.mxu0 %v2441
  %3658 = vmatmul.mubr.bf16.gmra.mrb[0].mxu0 %v1984
  %v3659 = vpop.f32.mrb[0].mxu0
  %v3660 = vadd.f32 %v3177, %v3659
  %v3661 = vpop.f32.mrb[0].mxu0
  %v3662 = vadd.f32 %v3179, %v3661
  %v3663 = vpop.f32.mrb[0].mxu0
  %v3664 = vadd.f32 %v3181, %v3663
  %v3665 = vpop.f32.mrb[0].mxu0
  %v3666 = vadd.f32 %v3183, %v3665
  %3667 = vmatprep.mubr.bf16.mxu0 %v2444
  %3668 = vmatmul.mubr.bf16.gmra.mrb[0].mxu0 %v1990
  %v3669 = vpop.f32.mrb[0].mxu0
  %v3670 = vadd.f32 %v3187, %v3669
  %v3671 = vpop.f32.mrb[0].mxu0
  %v3672 = vadd.f32 %v3189, %v3671
  %v3673 = vpop.f32.mrb[0].mxu0
  %v3674 = vadd.f32 %v3191, %v3673
  %v3675 = vpop.f32.mrb[0].mxu0
  %v3676 = vadd.f32 %v3193, %v3675
  %3677 = vmatprep.mubr.bf16.mxu0 %v2447
  %3678 = vmatmul.mubr.bf16.gmra.mrb[0].mxu0 %v1996
  %v3679 = vpop.f32.mrb[0].mxu0
  %v3680 = vadd.f32 %v3197, %v3679
  %v3681 = vpop.f32.mrb[0].mxu0
  %v3682 = vadd.f32 %v3199, %v3681
  %v3683 = vpop.f32.mrb[0].mxu0
  %v3684 = vadd.f32 %v3201, %v3683
  %v3685 = vpop.f32.mrb[0].mxu0
  %v3686 = vadd.f32 %v3203, %v3685
  %3687 = vmatprep.mubr.bf16.mxu0 %v2450
  %3688 = vmatmul.mubr.bf16.gmra.mrb[0].mxu0 %v2002
  %v3689 = vpop.f32.mrb[0].mxu0
  %v3690 = vadd.f32 %v3207, %v3689
  %v3691 = vpop.f32.mrb[0].mxu0
  %v3692 = vadd.f32 %v3209, %v3691
  %v3693 = vpop.f32.mrb[0].mxu0
  %v3694 = vadd.f32 %v3211, %v3693
  %v3695 = vpop.f32.mrb[0].mxu0
  %v3696 = vadd.f32 %v3213, %v3695
  %3697 = vmatprep.mubr.bf16.mxu0 %v2453
  %3698 = vmatmul.mubr.bf16.gmra.mrb[0].mxu0 %v2008
  %v3699 = vpop.f32.mrb[0].mxu0
  %v3700 = vadd.f32 %v3217, %v3699
  %v3701 = vpop.f32.mrb[0].mxu0
  %v3702 = vadd.f32 %v3219, %v3701
  %v3703 = vpop.f32.mrb[0].mxu0
  %v3704 = vadd.f32 %v3221, %v3703
  %v3705 = vpop.f32.mrb[0].mxu0
  %v3706 = vadd.f32 %v3223, %v3705
  %3707 = vmatprep.mubr.bf16.mxu0 %v2456
  %3708 = vmatmul.mubr.bf16.gmra.mrb[0].mxu0 %v2014
  %v3709 = vpop.f32.mrb[0].mxu0
  %v3710 = vadd.f32 %v3227, %v3709
  %v3711 = vpop.f32.mrb[0].mxu0
  %v3712 = vadd.f32 %v3229, %v3711
  %v3713 = vpop.f32.mrb[0].mxu0
  %v3714 = vadd.f32 %v3231, %v3713
  %v3715 = vpop.f32.mrb[0].mxu0
  %v3716 = vadd.f32 %v3233, %v3715
  %3717 = vmatprep.mubr.bf16.mxu0 %v2459
  %3718 = vmatmul.mubr.bf16.gmra.mrb[0].mxu0 %v2020
  %v3719 = vpop.f32.mrb[0].mxu0
  %v3720 = vadd.f32 %v3237, %v3719
  %v3721 = vpop.f32.mrb[0].mxu0
  %v3722 = vadd.f32 %v3239, %v3721
  %v3723 = vpop.f32.mrb[0].mxu0
  %v3724 = vadd.f32 %v3241, %v3723
  %v3725 = vpop.f32.mrb[0].mxu0
  %v3726 = vadd.f32 %v3243, %v3725
  %3727 = vmatprep.mubr.bf16.mxu0 %v2462
  %3728 = vmatmul.mubr.bf16.gmra.mrb[0].mxu0 %v2026
  %v3729 = vpop.f32.mrb[0].mxu0
  %v3730 = vadd.f32 %v3247, %v3729
  %v3731 = vpop.f32.mrb[0].mxu0
  %v3732 = vadd.f32 %v3249, %v3731
  %v3733 = vpop.f32.mrb[0].mxu0
  %v3734 = vadd.f32 %v3251, %v3733
  %v3735 = vpop.f32.mrb[0].mxu0
  %v3736 = vadd.f32 %v3253, %v3735
  %3737 = vmatprep.mubr.bf16.mxu0 %v2465
  %3738 = vmatmul.mubr.bf16.gmra.mrb[0].mxu0 %v2032
  %v3739 = vpop.f32.mrb[0].mxu0
  %v3740 = vadd.f32 %v3257, %v3739
  %v3741 = vpop.f32.mrb[0].mxu0
  %v3742 = vadd.f32 %v3259, %v3741
  %v3743 = vpop.f32.mrb[0].mxu0
  %v3744 = vadd.f32 %v3261, %v3743
  %v3745 = vpop.f32.mrb[0].mxu0
  %v3746 = vadd.f32 %v3263, %v3745
  %3747 = vmatprep.mubr.bf16.mxu0 %v2468
  %3748 = vmatmul.mubr.bf16.gmra.mrb[0].mxu0 %v2038
  %v3749 = vpop.f32.mrb[0].mxu0
  %v3750 = vadd.f32 %v3267, %v3749
  %v3751 = vpop.f32.mrb[0].mxu0
  %v3752 = vadd.f32 %v3269, %v3751
  %v3753 = vpop.f32.mrb[0].mxu0
  %v3754 = vadd.f32 %v3271, %v3753
  %v3755 = vpop.f32.mrb[0].mxu0
  %v3756 = vadd.f32 %v3273, %v3755
  %3757 = vmatprep.mubr.bf16.mxu0 %v2471
  %3758 = vmatmul.mubr.bf16.gmra.mrb[0].mxu0 %v2044
  %v3759 = vpop.f32.mrb[0].mxu0
  %v3760 = vadd.f32 %v3277, %v3759
  %v3761 = vpop.f32.mrb[0].mxu0
  %v3762 = vadd.f32 %v3279, %v3761
  %v3763 = vpop.f32.mrb[0].mxu0
  %v3764 = vadd.f32 %v3281, %v3763
  %v3765 = vpop.f32.mrb[0].mxu0
  %v3766 = vadd.f32 %v3283, %v3765
  %3767 = vmatprep.mubr.bf16.mxu0 %v2474
  %3768 = vmatmul.mubr.bf16.gmra.mrb[0].mxu0 %v2050
  %v3769 = vpop.f32.mrb[0].mxu0
  %v3770 = vadd.f32 %v3287, %v3769
  %v3771 = vpop.f32.mrb[0].mxu0
  %v3772 = vadd.f32 %v3289, %v3771
  %v3773 = vpop.f32.mrb[0].mxu0
  %v3774 = vadd.f32 %v3291, %v3773
  %v3775 = vpop.f32.mrb[0].mxu0
  %v3776 = vadd.f32 %v3293, %v3775
  %3777 = vmatprep.mubr.bf16.mxu0 %v2477
  %3778 = vmatmul.mubr.bf16.gmra.mrb[0].mxu0 %v2056
  %v3779 = vpop.f32.mrb[0].mxu0
  %v3780 = vadd.f32 %v3297, %v3779
  %v3781 = vpop.f32.mrb[0].mxu0
  %v3782 = vadd.f32 %v3299, %v3781
  %v3783 = vpop.f32.mrb[0].mxu0
  %v3784 = vadd.f32 %v3301, %v3783
  %v3785 = vpop.f32.mrb[0].mxu0
  %v3786 = vadd.f32 %v3303, %v3785
  %3787 = vmatprep.mubr.bf16.mxu0 %v2480
  %3788 = vmatmul.mubr.bf16.gmra.mrb[0].mxu0 %v2062
  %v3789 = vpop.f32.mrb[0].mxu0
  %v3790 = vadd.f32 %v3307, %v3789
  %v3791 = vpop.f32.mrb[0].mxu0
  %v3792 = vadd.f32 %v3309, %v3791
  %v3793 = vpop.f32.mrb[0].mxu0
  %v3794 = vadd.f32 %v3311, %v3793
  %v3795 = vpop.f32.mrb[0].mxu0
  %v3796 = vadd.f32 %v3313, %v3795
  %3797 = vmatprep.mubr.bf16.mxu0 %v2483
  %3798 = vmatmul.mubr.bf16.gmra.mrb[0].mxu0 %v2068
  %v3799 = vpop.f32.mrb[0].mxu0
  %v3800 = vadd.f32 %v3317, %v3799
  %v3801 = vpop.f32.mrb[0].mxu0
  %v3802 = vadd.f32 %v3319, %v3801
  %v3803 = vpop.f32.mrb[0].mxu0
  %v3804 = vadd.f32 %v3321, %v3803
  %v3805 = vpop.f32.mrb[0].mxu0
  %v3806 = vadd.f32 %v3323, %v3805
  %3807 = vmatprep.mubr.bf16.mxu0 %v2486
  %3808 = vmatmul.mubr.bf16.gmra.mrb[0].mxu0 %v2074
  %v3809 = vpop.f32.mrb[0].mxu0
  %v3810 = vadd.f32 %v3327, %v3809
  %v3811 = vpop.f32.mrb[0].mxu0
  %v3812 = vadd.f32 %v3329, %v3811
  %v3813 = vpop.f32.mrb[0].mxu0
  %v3814 = vadd.f32 %v3331, %v3813
  %v3815 = vpop.f32.mrb[0].mxu0
  %v3816 = vadd.f32 %v3333, %v3815
  %3817 = vmatprep.mubr.bf16.mxu0 %v2489
  %3818 = vmatmul.mubr.bf16.gmra.mrb[0].mxu0 %v2080
  %v3819 = vpop.f32.mrb[0].mxu0
  %v3820 = vadd.f32 %v3337, %v3819
  %v3821 = vpop.f32.mrb[0].mxu0
  %v3822 = vadd.f32 %v3339, %v3821
  %v3823 = vpop.f32.mrb[0].mxu0
  %v3824 = vadd.f32 %v3341, %v3823
  %v3825 = vpop.f32.mrb[0].mxu0
  %v3826 = vadd.f32 %v3343, %v3825
  %3827 = vmatprep.mubr.bf16.mxu0 %v2492
  %3828 = vmatmul.mubr.bf16.gmra.mrb[0].mxu0 %v2086
  %v3829 = vpop.f32.mrb[0].mxu0
  %v3830 = vadd.f32 %v3347, %v3829
  %v3831 = vpop.f32.mrb[0].mxu0
  %v3832 = vadd.f32 %v3349, %v3831
  %v3833 = vpop.f32.mrb[0].mxu0
  %v3834 = vadd.f32 %v3351, %v3833
  %v3835 = vpop.f32.mrb[0].mxu0
  %v3836 = vadd.f32 %v3353, %v3835
  %3837 = vmatprep.mubr.bf16.mxu0 %v2495
  %3838 = vmatmul.mubr.bf16.gmra.mrb[0].mxu0 %v2092
  %v3839 = vpop.f32.mrb[0].mxu0
  %v3840 = vadd.f32 %v3357, %v3839
  %v3841 = vpop.f32.mrb[0].mxu0
  %v3842 = vadd.f32 %v3359, %v3841
  %v3843 = vpop.f32.mrb[0].mxu0
  %v3844 = vadd.f32 %v3361, %v3843
  %v3845 = vpop.f32.mrb[0].mxu0
  %v3846 = vadd.f32 %v3363, %v3845
  %3847 = vmatprep.mubr.bf16.mxu0 %v2498
  %3848 = vmatmul.mubr.bf16.gmra.mrb[0].mxu0 %v2098
  %v3849 = vpop.f32.mrb[0].mxu0
  %v3850 = vadd.f32 %v3367, %v3849
  %v3851 = vpop.f32.mrb[0].mxu0
  %v3852 = vadd.f32 %v3369, %v3851
  %v3853 = vpop.f32.mrb[0].mxu0
  %v3854 = vadd.f32 %v3371, %v3853
  %v3855 = vpop.f32.mrb[0].mxu0
  %v3856 = vadd.f32 %v3373, %v3855
  %3857 = vmatprep.mubr.bf16.mxu0 %v2501
  %3858 = vmatmul.mubr.bf16.gmra.mrb[0].mxu0 %v2104
  %v3859 = vpop.f32.mrb[0].mxu0
  %v3860 = vadd.f32 %v3377, %v3859
  %v3861 = vpop.f32.mrb[0].mxu0
  %v3862 = vadd.f32 %v3379, %v3861
  %v3863 = vpop.f32.mrb[0].mxu0
  %v3864 = vadd.f32 %v3381, %v3863
  %v3865 = vpop.f32.mrb[0].mxu0
  %v3866 = vadd.f32 %v3383, %v3865
  %3867 = vmatprep.mubr.bf16.mxu0 %v2504
  %3868 = vmatmul.mubr.bf16.gmra.mrb[0].mxu0 %v2110
  %v3869 = vpop.f32.mrb[0].mxu0
  %v3870 = vadd.f32 %v3387, %v3869
  %v3871 = vpop.f32.mrb[0].mxu0
  %v3872 = vadd.f32 %v3389, %v3871
  %v3873 = vpop.f32.mrb[0].mxu0
  %v3874 = vadd.f32 %v3391, %v3873
  %v3875 = vpop.f32.mrb[0].mxu0
  %v3876 = vadd.f32 %v3393, %v3875
  %3877 = vmatprep.mubr.bf16.mxu0 %v2507
  %3878 = vmatmul.mubr.bf16.gmra.mrb[0].mxu0 %v2116
  %v3879 = vpop.f32.mrb[0].mxu0
  %v3880 = vadd.f32 %v3397, %v3879
  %v3881 = vpop.f32.mrb[0].mxu0
  %v3882 = vadd.f32 %v3399, %v3881
  %v3883 = vpop.f32.mrb[0].mxu0
  %v3884 = vadd.f32 %v3401, %v3883
  %v3885 = vpop.f32.mrb[0].mxu0
  %v3886 = vadd.f32 %v3403, %v3885
  %3887 = vmatprep.mubr.bf16.mxu0 %v2510
  %3888 = vmatmul.mubr.bf16.gmra.mrb[0].mxu0 %v2122
  %v3889 = vpop.f32.mrb[0].mxu0
  %v3890 = vadd.f32 %v3407, %v3889
  %v3891 = vpop.f32.mrb[0].mxu0
  %v3892 = vadd.f32 %v3409, %v3891
  %v3893 = vpop.f32.mrb[0].mxu0
  %v3894 = vadd.f32 %v3411, %v3893
  %v3895 = vpop.f32.mrb[0].mxu0
  %v3896 = vadd.f32 %v3413, %v3895
  %3897 = vmatprep.mubr.bf16.mxu0 %v2513
  %3898 = vmatmul.mubr.bf16.gmra.mrb[0].mxu0 %v2128
  %v3899 = vpop.f32.mrb[0].mxu0
  %v3900 = vadd.f32 %v3417, %v3899
  %v3901 = vpop.f32.mrb[0].mxu0
  %v3902 = vadd.f32 %v3419, %v3901
  %v3903 = vpop.f32.mrb[0].mxu0
  %v3904 = vadd.f32 %v3421, %v3903
  %v3905 = vpop.f32.mrb[0].mxu0
  %v3906 = vadd.f32 %v3423, %v3905
  %3907 = vmatprep.mubr.bf16.mxu0 %v2516
  %3908 = vmatmul.mubr.bf16.gmra.mrb[0].mxu0 %v2134
  %v3909 = vpop.f32.mrb[0].mxu0
  %v3910 = vadd.f32 %v3427, %v3909
  %v3911 = vpop.f32.mrb[0].mxu0
  %v3912 = vadd.f32 %v3429, %v3911
  %v3913 = vpop.f32.mrb[0].mxu0
  %v3914 = vadd.f32 %v3431, %v3913
  %v3915 = vpop.f32.mrb[0].mxu0
  %v3916 = vadd.f32 %v3433, %v3915
  %3917 = vmatprep.mubr.bf16.mxu0 %v2519
  %3918 = vmatmul.mubr.bf16.gmra.mrb[0].mxu0 %v2140
  %v3919 = vpop.f32.mrb[0].mxu0
  %v3920 = vadd.f32 %v3437, %v3919
  %v3921 = vpop.f32.mrb[0].mxu0
  %v3922 = vadd.f32 %v3439, %v3921
  %v3923 = vpop.f32.mrb[0].mxu0
  %v3924 = vadd.f32 %v3441, %v3923
  %v3925 = vpop.f32.mrb[0].mxu0
  %v3926 = vadd.f32 %v3443, %v3925
  %3927 = vmatprep.mubr.bf16.mxu0 %v2522
  %3928 = vmatmul.mubr.bf16.gmra.mrb[0].mxu0 %v2146
  %v3929 = vpop.f32.mrb[0].mxu0
  %v3930 = vadd.f32 %v3447, %v3929
  %v3931 = vpop.f32.mrb[0].mxu0
  %v3932 = vadd.f32 %v3449, %v3931
  %v3933 = vpop.f32.mrb[0].mxu0
  %v3934 = vadd.f32 %v3451, %v3933
  %v3935 = vpop.f32.mrb[0].mxu0
  %v3936 = vadd.f32 %v3453, %v3935
  %3937 = vmatprep.mubr.bf16.mxu0 %v2525
  %3938 = vmatmul.mubr.bf16.gmra.mrb[0].mxu0 %v2152
  %v3939 = vpop.f32.mrb[0].mxu0
  %v3940 = vadd.f32 %v3457, %v3939
  %v3941 = vpop.f32.mrb[0].mxu0
  %v3942 = vadd.f32 %v3459, %v3941
  %v3943 = vpop.f32.mrb[0].mxu0
  %v3944 = vadd.f32 %v3461, %v3943
  %v3945 = vpop.f32.mrb[0].mxu0
  %v3946 = vadd.f32 %v3463, %v3945
  %3947 = vmatprep.mubr.bf16.mxu0 %v2528
  %3948 = vmatmul.mubr.bf16.gmra.mrb[0].mxu0 %v2158
  %v3949 = vpop.f32.mrb[0].mxu0
  %v3950 = vadd.f32 %v3467, %v3949
  %v3951 = vpop.f32.mrb[0].mxu0
  %v3952 = vadd.f32 %v3469, %v3951
  %v3953 = vpop.f32.mrb[0].mxu0
  %v3954 = vadd.f32 %v3471, %v3953
  %v3955 = vpop.f32.mrb[0].mxu0
  %v3956 = vadd.f32 %v3473, %v3955
  %3957 = vmatprep.mubr.bf16.mxu0 %v2531
  %3958 = vmatmul.mubr.bf16.gmra.mrb[0].mxu0 %v2164
  %v3959 = vpop.f32.mrb[0].mxu0
  %v3960 = vadd.f32 %v3477, %v3959
  %v3961 = vpop.f32.mrb[0].mxu0
  %v3962 = vadd.f32 %v3479, %v3961
  %v3963 = vpop.f32.mrb[0].mxu0
  %v3964 = vadd.f32 %v3481, %v3963
  %v3965 = vpop.f32.mrb[0].mxu0
  %v3966 = vadd.f32 %v3483, %v3965
  %3967 = vmatprep.mubr.bf16.mxu0 %v2534
  %3968 = vmatmul.mubr.bf16.gmra.mrb[0].mxu0 %v2170
  %v3969 = vpop.f32.mrb[0].mxu0
  %v3970 = vadd.f32 %v3487, %v3969
  %v3971 = vpop.f32.mrb[0].mxu0
  %v3972 = vadd.f32 %v3489, %v3971
  %v3973 = vpop.f32.mrb[0].mxu0
  %v3974 = vadd.f32 %v3491, %v3973
  %v3975 = vpop.f32.mrb[0].mxu0
  %v3976 = vadd.f32 %v3493, %v3975
  %3977 = vmatprep.mubr.bf16.mxu0 %v2537
  %3978 = vmatmul.mubr.bf16.gmra.mrb[0].mxu0 %v2176
  %v3979 = vpop.f32.mrb[0].mxu0
  %v3980 = vadd.f32 %v3497, %v3979
  %v3981 = vpop.f32.mrb[0].mxu0
  %v3982 = vadd.f32 %v3499, %v3981
  %v3983 = vpop.f32.mrb[0].mxu0
  %v3984 = vadd.f32 %v3501, %v3983
  %v3985 = vpop.f32.mrb[0].mxu0
  %v3986 = vadd.f32 %v3503, %v3985
  %3987 = vdwg.mxu0
  %vm3988 = vcmask 556032
  %v3989 = vsel %vm3988, %v3542, 0.0
  %v3990 = vadd.f32 %v3540, %v3989
  %3991 = vadd.xlane.f32.xlu0 %v3990
  %v3992 = vpop.xlane.xlu0 %3991
  %v3993 = vsel %vm3988, %v3546, 0.0
  %v3994 = vadd.f32 %v3544, %v3993
  %3995 = vadd.xlane.f32.xlu0 %v3994
  %v3996 = vpop.xlane.xlu0 %3995
  %v3997 = vsel %vm3988, %v3552, 0.0
  %v3998 = vadd.f32 %v3550, %v3997
  %3999 = vadd.xlane.f32.xlu0 %v3998
  %v4000 = vpop.xlane.xlu0 %3999
  %v4001 = vsel %vm3988, %v3556, 0.0
  %v4002 = vadd.f32 %v3554, %v4001
  %4003 = vadd.xlane.f32.xlu0 %v4002
  %v4004 = vpop.xlane.xlu0 %4003
  %v4005 = vsel %vm3988, %v3562, 0.0
  %v4006 = vadd.f32 %v3560, %v4005
  %4007 = vadd.xlane.f32.xlu0 %v4006
  %v4008 = vpop.xlane.xlu0 %4007
  %v4009 = vsel %vm3988, %v3566, 0.0
  %v4010 = vadd.f32 %v3564, %v4009
  %4011 = vadd.xlane.f32.xlu0 %v4010
  %v4012 = vpop.xlane.xlu0 %4011
  %v4013 = vsel %vm3988, %v3572, 0.0
  %v4014 = vadd.f32 %v3570, %v4013
  %4015 = vadd.xlane.f32.xlu0 %v4014
  %v4016 = vpop.xlane.xlu0 %4015
  %v4017 = vsel %vm3988, %v3576, 0.0
  %v4018 = vadd.f32 %v3574, %v4017
  %4019 = vadd.xlane.f32.xlu0 %v4018
  %v4020 = vpop.xlane.xlu0 %4019
  %v4021 = vsel %vm3988, %v3582, 0.0
  %v4022 = vadd.f32 %v3580, %v4021
  %4023 = vadd.xlane.f32.xlu0 %v4022
  %v4024 = vpop.xlane.xlu0 %4023
  %v4025 = vsel %vm3988, %v3586, 0.0
  %v4026 = vadd.f32 %v3584, %v4025
  %4027 = vadd.xlane.f32.xlu0 %v4026
  %v4028 = vpop.xlane.xlu0 %4027
  %v4029 = vsel %vm3988, %v3592, 0.0
  %v4030 = vadd.f32 %v3590, %v4029
  %4031 = vadd.xlane.f32.xlu0 %v4030
  %v4032 = vpop.xlane.xlu0 %4031
  %v4033 = vsel %vm3988, %v3596, 0.0
  %v4034 = vadd.f32 %v3594, %v4033
  %4035 = vadd.xlane.f32.xlu0 %v4034
  %v4036 = vpop.xlane.xlu0 %4035
  %v4037 = vsel %vm3988, %v3602, 0.0
  %v4038 = vadd.f32 %v3600, %v4037
  %4039 = vadd.xlane.f32.xlu0 %v4038
  %v4040 = vpop.xlane.xlu0 %4039
  %v4041 = vsel %vm3988, %v3606, 0.0
  %v4042 = vadd.f32 %v3604, %v4041
  %4043 = vadd.xlane.f32.xlu0 %v4042
  %v4044 = vpop.xlane.xlu0 %4043
  %v4045 = vsel %vm3988, %v3612, 0.0
  %v4046 = vadd.f32 %v3610, %v4045
  %4047 = vadd.xlane.f32.xlu0 %v4046
  %v4048 = vpop.xlane.xlu0 %4047
  %v4049 = vsel %vm3988, %v3616, 0.0
  %v4050 = vadd.f32 %v3614, %v4049
  %4051 = vadd.xlane.f32.xlu0 %v4050
  %v4052 = vpop.xlane.xlu0 %4051
  %v4053 = vsel %vm3988, %v3622, 0.0
  %v4054 = vadd.f32 %v3620, %v4053
  %4055 = vadd.xlane.f32.xlu0 %v4054
  %v4056 = vpop.xlane.xlu0 %4055
  %v4057 = vsel %vm3988, %v3626, 0.0
  %v4058 = vadd.f32 %v3624, %v4057
  %4059 = vadd.xlane.f32.xlu0 %v4058
  %v4060 = vpop.xlane.xlu0 %4059
  %v4061 = vsel %vm3988, %v3632, 0.0
  %v4062 = vadd.f32 %v3630, %v4061
  %4063 = vadd.xlane.f32.xlu0 %v4062
  %v4064 = vpop.xlane.xlu0 %4063
  %v4065 = vsel %vm3988, %v3636, 0.0
  %v4066 = vadd.f32 %v3634, %v4065
  %4067 = vadd.xlane.f32.xlu0 %v4066
  %v4068 = vpop.xlane.xlu0 %4067
  %v4069 = vsel %vm3988, %v3642, 0.0
  %v4070 = vadd.f32 %v3640, %v4069
  %4071 = vadd.xlane.f32.xlu0 %v4070
  %v4072 = vpop.xlane.xlu0 %4071
  %v4073 = vsel %vm3988, %v3646, 0.0
  %v4074 = vadd.f32 %v3644, %v4073
  %4075 = vadd.xlane.f32.xlu0 %v4074
  %v4076 = vpop.xlane.xlu0 %4075
  %v4077 = vsel %vm3988, %v3652, 0.0
  %v4078 = vadd.f32 %v3650, %v4077
  %4079 = vadd.xlane.f32.xlu0 %v4078
  %v4080 = vpop.xlane.xlu0 %4079
  %v4081 = vsel %vm3988, %v3656, 0.0
  %v4082 = vadd.f32 %v3654, %v4081
  %4083 = vadd.xlane.f32.xlu0 %v4082
  %v4084 = vpop.xlane.xlu0 %4083
  %v4085 = vsel %vm3988, %v3662, 0.0
  %v4086 = vadd.f32 %v3660, %v4085
  %4087 = vadd.xlane.f32.xlu0 %v4086
  %v4088 = vpop.xlane.xlu0 %4087
  %v4089 = vsel %vm3988, %v3666, 0.0
  %v4090 = vadd.f32 %v3664, %v4089
  %4091 = vadd.xlane.f32.xlu0 %v4090
  %v4092 = vpop.xlane.xlu0 %4091
  %v4093 = vsel %vm3988, %v3672, 0.0
  %v4094 = vadd.f32 %v3670, %v4093
  %4095 = vadd.xlane.f32.xlu0 %v4094
  %v4096 = vpop.xlane.xlu0 %4095
  %v4097 = vsel %vm3988, %v3676, 0.0
  %v4098 = vadd.f32 %v3674, %v4097
  %4099 = vadd.xlane.f32.xlu0 %v4098
  %v4100 = vpop.xlane.xlu0 %4099
  %v4101 = vsel %vm3988, %v3682, 0.0
  %v4102 = vadd.f32 %v3680, %v4101
  %4103 = vadd.xlane.f32.xlu0 %v4102
  %v4104 = vpop.xlane.xlu0 %4103
  %v4105 = vsel %vm3988, %v3686, 0.0
  %v4106 = vadd.f32 %v3684, %v4105
  %4107 = vadd.xlane.f32.xlu0 %v4106
  %v4108 = vpop.xlane.xlu0 %4107
  %v4109 = vsel %vm3988, %v3692, 0.0
  %v4110 = vadd.f32 %v3690, %v4109
  %4111 = vadd.xlane.f32.xlu0 %v4110
  %v4112 = vpop.xlane.xlu0 %4111
  %v4113 = vsel %vm3988, %v3696, 0.0
  %v4114 = vadd.f32 %v3694, %v4113
  %4115 = vadd.xlane.f32.xlu0 %v4114
  %v4116 = vpop.xlane.xlu0 %4115
  %v4117 = vsel %vm3988, %v3702, 0.0
  %v4118 = vadd.f32 %v3700, %v4117
  %4119 = vadd.xlane.f32.xlu0 %v4118
  %v4120 = vpop.xlane.xlu0 %4119
  %v4121 = vsel %vm3988, %v3706, 0.0
  %v4122 = vadd.f32 %v3704, %v4121
  %4123 = vadd.xlane.f32.xlu0 %v4122
  %v4124 = vpop.xlane.xlu0 %4123
  %v4125 = vsel %vm3988, %v3712, 0.0
  %v4126 = vadd.f32 %v3710, %v4125
  %4127 = vadd.xlane.f32.xlu0 %v4126
  %v4128 = vpop.xlane.xlu0 %4127
  %v4129 = vsel %vm3988, %v3716, 0.0
  %v4130 = vadd.f32 %v3714, %v4129
  %4131 = vadd.xlane.f32.xlu0 %v4130
  %v4132 = vpop.xlane.xlu0 %4131
  %v4133 = vsel %vm3988, %v3722, 0.0
  %v4134 = vadd.f32 %v3720, %v4133
  %4135 = vadd.xlane.f32.xlu0 %v4134
  %v4136 = vpop.xlane.xlu0 %4135
  %v4137 = vsel %vm3988, %v3726, 0.0
  %v4138 = vadd.f32 %v3724, %v4137
  %4139 = vadd.xlane.f32.xlu0 %v4138
  %v4140 = vpop.xlane.xlu0 %4139
  %v4141 = vsel %vm3988, %v3732, 0.0
  %v4142 = vadd.f32 %v3730, %v4141
  %4143 = vadd.xlane.f32.xlu0 %v4142
  %v4144 = vpop.xlane.xlu0 %4143
  %v4145 = vsel %vm3988, %v3736, 0.0
  %v4146 = vadd.f32 %v3734, %v4145
  %4147 = vadd.xlane.f32.xlu0 %v4146
  %v4148 = vpop.xlane.xlu0 %4147
  %v4149 = vsel %vm3988, %v3742, 0.0
  %v4150 = vadd.f32 %v3740, %v4149
  %4151 = vadd.xlane.f32.xlu0 %v4150
  %v4152 = vpop.xlane.xlu0 %4151
  %v4153 = vsel %vm3988, %v3746, 0.0
  %v4154 = vadd.f32 %v3744, %v4153
  %4155 = vadd.xlane.f32.xlu0 %v4154
  %v4156 = vpop.xlane.xlu0 %4155
  %v4157 = vsel %vm3988, %v3752, 0.0
  %v4158 = vadd.f32 %v3750, %v4157
  %4159 = vadd.xlane.f32.xlu0 %v4158
  %v4160 = vpop.xlane.xlu0 %4159
  %v4161 = vsel %vm3988, %v3756, 0.0
  %v4162 = vadd.f32 %v3754, %v4161
  %4163 = vadd.xlane.f32.xlu0 %v4162
  %v4164 = vpop.xlane.xlu0 %4163
  %v4165 = vsel %vm3988, %v3762, 0.0
  %v4166 = vadd.f32 %v3760, %v4165
  %4167 = vadd.xlane.f32.xlu0 %v4166
  %v4168 = vpop.xlane.xlu0 %4167
  %v4169 = vsel %vm3988, %v3766, 0.0
  %v4170 = vadd.f32 %v3764, %v4169
  %4171 = vadd.xlane.f32.xlu0 %v4170
  %v4172 = vpop.xlane.xlu0 %4171
  %v4173 = vsel %vm3988, %v3772, 0.0
  %v4174 = vadd.f32 %v3770, %v4173
  %4175 = vadd.xlane.f32.xlu0 %v4174
  %v4176 = vpop.xlane.xlu0 %4175
  %v4177 = vsel %vm3988, %v3776, 0.0
  %v4178 = vadd.f32 %v3774, %v4177
  %4179 = vadd.xlane.f32.xlu0 %v4178
  %v4180 = vpop.xlane.xlu0 %4179
  %v4181 = vsel %vm3988, %v3782, 0.0
  %v4182 = vadd.f32 %v3780, %v4181
  %4183 = vadd.xlane.f32.xlu0 %v4182
  %v4184 = vpop.xlane.xlu0 %4183
  %v4185 = vsel %vm3988, %v3786, 0.0
  %v4186 = vadd.f32 %v3784, %v4185
  %4187 = vadd.xlane.f32.xlu0 %v4186
  %v4188 = vpop.xlane.xlu0 %4187
  %v4189 = vsel %vm3988, %v3792, 0.0
  %v4190 = vadd.f32 %v3790, %v4189
  %4191 = vadd.xlane.f32.xlu0 %v4190
  %v4192 = vpop.xlane.xlu0 %4191
  %v4193 = vsel %vm3988, %v3796, 0.0
  %v4194 = vadd.f32 %v3794, %v4193
  %4195 = vadd.xlane.f32.xlu0 %v4194
  %v4196 = vpop.xlane.xlu0 %4195
  %v4197 = vsel %vm3988, %v3802, 0.0
  %v4198 = vadd.f32 %v3800, %v4197
  %4199 = vadd.xlane.f32.xlu0 %v4198
  %v4200 = vpop.xlane.xlu0 %4199
  %v4201 = vsel %vm3988, %v3806, 0.0
  %v4202 = vadd.f32 %v3804, %v4201
  %4203 = vadd.xlane.f32.xlu0 %v4202
  %v4204 = vpop.xlane.xlu0 %4203
  %v4205 = vsel %vm3988, %v3812, 0.0
  %v4206 = vadd.f32 %v3810, %v4205
  %4207 = vadd.xlane.f32.xlu0 %v4206
  %v4208 = vpop.xlane.xlu0 %4207
  %v4209 = vsel %vm3988, %v3816, 0.0
  %v4210 = vadd.f32 %v3814, %v4209
  %4211 = vadd.xlane.f32.xlu0 %v4210
  %v4212 = vpop.xlane.xlu0 %4211
  %v4213 = vsel %vm3988, %v3822, 0.0
  %v4214 = vadd.f32 %v3820, %v4213
  %4215 = vadd.xlane.f32.xlu0 %v4214
  %v4216 = vpop.xlane.xlu0 %4215
  %v4217 = vsel %vm3988, %v3826, 0.0
  %v4218 = vadd.f32 %v3824, %v4217
  %4219 = vadd.xlane.f32.xlu0 %v4218
  %v4220 = vpop.xlane.xlu0 %4219
  %v4221 = vsel %vm3988, %v3832, 0.0
  %v4222 = vadd.f32 %v3830, %v4221
  %4223 = vadd.xlane.f32.xlu0 %v4222
  %v4224 = vpop.xlane.xlu0 %4223
  %v4225 = vsel %vm3988, %v3836, 0.0
  %v4226 = vadd.f32 %v3834, %v4225
  %4227 = vadd.xlane.f32.xlu0 %v4226
  %v4228 = vpop.xlane.xlu0 %4227
  %v4229 = vsel %vm3988, %v3842, 0.0
  %v4230 = vadd.f32 %v3840, %v4229
  %4231 = vadd.xlane.f32.xlu0 %v4230
  %v4232 = vpop.xlane.xlu0 %4231
  %v4233 = vsel %vm3988, %v3846, 0.0
  %v4234 = vadd.f32 %v3844, %v4233
  %4235 = vadd.xlane.f32.xlu0 %v4234
  %v4236 = vpop.xlane.xlu0 %4235
  %v4237 = vsel %vm3988, %v3852, 0.0
  %v4238 = vadd.f32 %v3850, %v4237
  %4239 = vadd.xlane.f32.xlu0 %v4238
  %v4240 = vpop.xlane.xlu0 %4239
  %v4241 = vsel %vm3988, %v3856, 0.0
  %v4242 = vadd.f32 %v3854, %v4241
  %4243 = vadd.xlane.f32.xlu0 %v4242
  %v4244 = vpop.xlane.xlu0 %4243
  %v4245 = vsel %vm3988, %v3862, 0.0
  %v4246 = vadd.f32 %v3860, %v4245
  %4247 = vadd.xlane.f32.xlu0 %v4246
  %v4248 = vpop.xlane.xlu0 %4247
  %v4249 = vsel %vm3988, %v3866, 0.0
  %v4250 = vadd.f32 %v3864, %v4249
  %4251 = vadd.xlane.f32.xlu0 %v4250
  %v4252 = vpop.xlane.xlu0 %4251
  %v4253 = vsel %vm3988, %v3872, 0.0
  %v4254 = vadd.f32 %v3870, %v4253
  %4255 = vadd.xlane.f32.xlu0 %v4254
  %v4256 = vpop.xlane.xlu0 %4255
  %v4257 = vsel %vm3988, %v3876, 0.0
  %v4258 = vadd.f32 %v3874, %v4257
  %4259 = vadd.xlane.f32.xlu0 %v4258
  %v4260 = vpop.xlane.xlu0 %4259
  %v4261 = vsel %vm3988, %v3882, 0.0
  %v4262 = vadd.f32 %v3880, %v4261
  %4263 = vadd.xlane.f32.xlu0 %v4262
  %v4264 = vpop.xlane.xlu0 %4263
  %v4265 = vsel %vm3988, %v3886, 0.0
  %v4266 = vadd.f32 %v3884, %v4265
  %4267 = vadd.xlane.f32.xlu0 %v4266
  %v4268 = vpop.xlane.xlu0 %4267
  %v4269 = vsel %vm3988, %v3892, 0.0
  %v4270 = vadd.f32 %v3890, %v4269
  %4271 = vadd.xlane.f32.xlu0 %v4270
  %v4272 = vpop.xlane.xlu0 %4271
  %v4273 = vsel %vm3988, %v3896, 0.0
  %v4274 = vadd.f32 %v3894, %v4273
  %4275 = vadd.xlane.f32.xlu0 %v4274
  %v4276 = vpop.xlane.xlu0 %4275
  %v4277 = vsel %vm3988, %v3902, 0.0
  %v4278 = vadd.f32 %v3900, %v4277
  %4279 = vadd.xlane.f32.xlu0 %v4278
  %v4280 = vpop.xlane.xlu0 %4279
  %v4281 = vsel %vm3988, %v3906, 0.0
  %v4282 = vadd.f32 %v3904, %v4281
  %4283 = vadd.xlane.f32.xlu0 %v4282
  %v4284 = vpop.xlane.xlu0 %4283
  %v4285 = vsel %vm3988, %v3912, 0.0
  %v4286 = vadd.f32 %v3910, %v4285
  %4287 = vadd.xlane.f32.xlu0 %v4286
  %v4288 = vpop.xlane.xlu0 %4287
  %v4289 = vsel %vm3988, %v3916, 0.0
  %v4290 = vadd.f32 %v3914, %v4289
  %4291 = vadd.xlane.f32.xlu0 %v4290
  %v4292 = vpop.xlane.xlu0 %4291
  %v4293 = vsel %vm3988, %v3922, 0.0
  %v4294 = vadd.f32 %v3920, %v4293
  %4295 = vadd.xlane.f32.xlu0 %v4294
  %v4296 = vpop.xlane.xlu0 %4295
  %v4297 = vsel %vm3988, %v3926, 0.0
  %v4298 = vadd.f32 %v3924, %v4297
  %4299 = vadd.xlane.f32.xlu0 %v4298
  %v4300 = vpop.xlane.xlu0 %4299
  %v4301 = vsel %vm3988, %v3932, 0.0
  %v4302 = vadd.f32 %v3930, %v4301
  %4303 = vadd.xlane.f32.xlu0 %v4302
  %v4304 = vpop.xlane.xlu0 %4303
  %v4305 = vsel %vm3988, %v3936, 0.0
  %v4306 = vadd.f32 %v3934, %v4305
  %4307 = vadd.xlane.f32.xlu0 %v4306
  %v4308 = vpop.xlane.xlu0 %4307
  %v4309 = vsel %vm3988, %v3942, 0.0
  %v4310 = vadd.f32 %v3940, %v4309
  %4311 = vadd.xlane.f32.xlu0 %v4310
  %v4312 = vpop.xlane.xlu0 %4311
  %v4313 = vsel %vm3988, %v3946, 0.0
  %v4314 = vadd.f32 %v3944, %v4313
  %4315 = vadd.xlane.f32.xlu0 %v4314
  %v4316 = vpop.xlane.xlu0 %4315
  %v4317 = vsel %vm3988, %v3952, 0.0
  %v4318 = vadd.f32 %v3950, %v4317
  %4319 = vadd.xlane.f32.xlu0 %v4318
  %v4320 = vpop.xlane.xlu0 %4319
  %v4321 = vsel %vm3988, %v3956, 0.0
  %v4322 = vadd.f32 %v3954, %v4321
  %4323 = vadd.xlane.f32.xlu0 %v4322
  %v4324 = vpop.xlane.xlu0 %4323
  %v4325 = vsel %vm3988, %v3962, 0.0
  %v4326 = vadd.f32 %v3960, %v4325
  %4327 = vadd.xlane.f32.xlu0 %v4326
  %v4328 = vpop.xlane.xlu0 %4327
  %v4329 = vsel %vm3988, %v3966, 0.0
  %v4330 = vadd.f32 %v3964, %v4329
  %4331 = vadd.xlane.f32.xlu0 %v4330
  %v4332 = vpop.xlane.xlu0 %4331
  %v4333 = vsel %vm3988, %v3972, 0.0
  %v4334 = vadd.f32 %v3970, %v4333
  %4335 = vadd.xlane.f32.xlu0 %v4334
  %v4336 = vpop.xlane.xlu0 %4335
  %v4337 = vsel %vm3988, %v3976, 0.0
  %v4338 = vadd.f32 %v3974, %v4337
  %4339 = vadd.xlane.f32.xlu0 %v4338
  %v4340 = vpop.xlane.xlu0 %4339
  %v4341 = vsel %vm3988, %v3982, 0.0
  %v4342 = vadd.f32 %v3980, %v4341
  %4343 = vadd.xlane.f32.xlu0 %v4342
  %v4344 = vpop.xlane.xlu0 %4343
  %v4345 = vsel %vm3988, %v3986, 0.0
  %v4346 = vadd.f32 %v3984, %v4345
  %4347 = vadd.xlane.f32.xlu0 %v4346
  %v4348 = vpop.xlane.xlu0 %4347
  %v4349 = vmul.f32 %v3992, 0.0051020407
  %v4350 = vmul.f32 %v3996, 0.0051020407
  %v4351 = vmul.f32 %v4000, 0.0051020407
  %v4352 = vmul.f32 %v4004, 0.0051020407
  %v4353 = vmul.f32 %v4008, 0.0051020407
  %v4354 = vmul.f32 %v4012, 0.0051020407
  %v4355 = vmul.f32 %v4016, 0.0051020407
  %v4356 = vmul.f32 %v4020, 0.0051020407
  %v4357 = vmul.f32 %v4024, 0.0051020407
  %v4358 = vmul.f32 %v4028, 0.0051020407
  %v4359 = vmul.f32 %v4032, 0.0051020407
  %v4360 = vmul.f32 %v4036, 0.0051020407
  %v4361 = vmul.f32 %v4040, 0.0051020407
  %v4362 = vmul.f32 %v4044, 0.0051020407
  %v4363 = vmul.f32 %v4048, 0.0051020407
  %v4364 = vmul.f32 %v4052, 0.0051020407
  %v4365 = vmul.f32 %v4056, 0.0051020407
  %v4366 = vmul.f32 %v4060, 0.0051020407
  %v4367 = vmul.f32 %v4064, 0.0051020407
  %v4368 = vmul.f32 %v4068, 0.0051020407
  %v4369 = vmul.f32 %v4072, 0.0051020407
  %v4370 = vmul.f32 %v4076, 0.0051020407
  %v4371 = vmul.f32 %v4080, 0.0051020407
  %v4372 = vmul.f32 %v4084, 0.0051020407
  %v4373 = vmul.f32 %v4088, 0.0051020407
  %v4374 = vmul.f32 %v4092, 0.0051020407
  %v4375 = vmul.f32 %v4096, 0.0051020407
  %v4376 = vmul.f32 %v4100, 0.0051020407
  %v4377 = vmul.f32 %v4104, 0.0051020407
  %v4378 = vmul.f32 %v4108, 0.0051020407
  %v4379 = vmul.f32 %v4112, 0.0051020407
  %v4380 = vmul.f32 %v4116, 0.0051020407
  %v4381 = vmul.f32 %v4120, 0.0051020407
  %v4382 = vmul.f32 %v4124, 0.0051020407
  %v4383 = vmul.f32 %v4128, 0.0051020407
  %v4384 = vmul.f32 %v4132, 0.0051020407
  %v4385 = vmul.f32 %v4136, 0.0051020407
  %v4386 = vmul.f32 %v4140, 0.0051020407
  %v4387 = vmul.f32 %v4144, 0.0051020407
  %v4388 = vmul.f32 %v4148, 0.0051020407
  %v4389 = vmul.f32 %v4152, 0.0051020407
  %v4390 = vmul.f32 %v4156, 0.0051020407
  %v4391 = vmul.f32 %v4160, 0.0051020407
  %v4392 = vmul.f32 %v4164, 0.0051020407
  %v4393 = vmul.f32 %v4168, 0.0051020407
  %v4394 = vmul.f32 %v4172, 0.0051020407
  %v4395 = vmul.f32 %v4176, 0.0051020407
  %v4396 = vmul.f32 %v4180, 0.0051020407
  %v4397 = vmul.f32 %v4184, 0.0051020407
  %v4398 = vmul.f32 %v4188, 0.0051020407
  %v4399 = vmul.f32 %v4192, 0.0051020407
  %v4400 = vmul.f32 %v4196, 0.0051020407
  %v4401 = vmul.f32 %v4200, 0.0051020407
  %v4402 = vmul.f32 %v4204, 0.0051020407
  %v4403 = vmul.f32 %v4208, 0.0051020407
  %v4404 = vmul.f32 %v4212, 0.0051020407
  %v4405 = vmul.f32 %v4216, 0.0051020407
  %v4406 = vmul.f32 %v4220, 0.0051020407
  %v4407 = vmul.f32 %v4224, 0.0051020407
  %v4408 = vmul.f32 %v4228, 0.0051020407
  %v4409 = vmul.f32 %v4232, 0.0051020407
  %v4410 = vmul.f32 %v4236, 0.0051020407
  %v4411 = vmul.f32 %v4240, 0.0051020407
  %v4412 = vmul.f32 %v4244, 0.0051020407
  %v4413 = vmul.f32 %v4248, 0.0051020407
  %v4414 = vmul.f32 %v4252, 0.0051020407
  %v4415 = vmul.f32 %v4256, 0.0051020407
  %v4416 = vmul.f32 %v4260, 0.0051020407
  %v4417 = vmul.f32 %v4264, 0.0051020407
  %v4418 = vmul.f32 %v4268, 0.0051020407
  %v4419 = vmul.f32 %v4272, 0.0051020407
  %v4420 = vmul.f32 %v4276, 0.0051020407
  %v4421 = vmul.f32 %v4280, 0.0051020407
  %v4422 = vmul.f32 %v4284, 0.0051020407
  %v4423 = vmul.f32 %v4288, 0.0051020407
  %v4424 = vmul.f32 %v4292, 0.0051020407
  %v4425 = vmul.f32 %v4296, 0.0051020407
  %v4426 = vmul.f32 %v4300, 0.0051020407
  %v4427 = vmul.f32 %v4304, 0.0051020407
  %v4428 = vmul.f32 %v4308, 0.0051020407
  %v4429 = vmul.f32 %v4312, 0.0051020407
  %v4430 = vmul.f32 %v4316, 0.0051020407
  %v4431 = vmul.f32 %v4320, 0.0051020407
  %v4432 = vmul.f32 %v4324, 0.0051020407
  %v4433 = vmul.f32 %v4328, 0.0051020407
  %v4434 = vmul.f32 %v4332, 0.0051020407
  %v4435 = vmul.f32 %v4336, 0.0051020407
  %v4436 = vmul.f32 %v4340, 0.0051020407
  %v4437 = vmul.f32 %v4344, 0.0051020407
  %v4438 = vmul.f32 %v4348, 0.0051020407
  %v4439 = vsub.f32 %v3540, %v4349
  %v4440 = vsub.f32 %v3542, %v4349
  %v4441 = vsub.f32 %v3544, %v4350
  %v4442 = vsub.f32 %v3546, %v4350
  %v4443 = vsub.f32 %v3550, %v4351
  %v4444 = vsub.f32 %v3552, %v4351
  %v4445 = vsub.f32 %v3554, %v4352
  %v4446 = vsub.f32 %v3556, %v4352
  %v4447 = vsub.f32 %v3560, %v4353
  %v4448 = vsub.f32 %v3562, %v4353
  %v4449 = vsub.f32 %v3564, %v4354
  %v4450 = vsub.f32 %v3566, %v4354
  %v4451 = vsub.f32 %v3570, %v4355
  %v4452 = vsub.f32 %v3572, %v4355
  %v4453 = vsub.f32 %v3574, %v4356
  %v4454 = vsub.f32 %v3576, %v4356
  %v4455 = vsub.f32 %v3580, %v4357
  %v4456 = vsub.f32 %v3582, %v4357
  %v4457 = vsub.f32 %v3584, %v4358
  %v4458 = vsub.f32 %v3586, %v4358
  %v4459 = vsub.f32 %v3590, %v4359
  %v4460 = vsub.f32 %v3592, %v4359
  %v4461 = vsub.f32 %v3594, %v4360
  %v4462 = vsub.f32 %v3596, %v4360
  %v4463 = vsub.f32 %v3600, %v4361
  %v4464 = vsub.f32 %v3602, %v4361
  %v4465 = vsub.f32 %v3604, %v4362
  %v4466 = vsub.f32 %v3606, %v4362
  %v4467 = vsub.f32 %v3610, %v4363
  %v4468 = vsub.f32 %v3612, %v4363
  %v4469 = vsub.f32 %v3614, %v4364
  %v4470 = vsub.f32 %v3616, %v4364
  %v4471 = vsub.f32 %v3620, %v4365
  %v4472 = vsub.f32 %v3622, %v4365
  %v4473 = vsub.f32 %v3624, %v4366
  %v4474 = vsub.f32 %v3626, %v4366
  %v4475 = vsub.f32 %v3630, %v4367
  %v4476 = vsub.f32 %v3632, %v4367
  %v4477 = vsub.f32 %v3634, %v4368
  %v4478 = vsub.f32 %v3636, %v4368
  %v4479 = vsub.f32 %v3640, %v4369
  %v4480 = vsub.f32 %v3642, %v4369
  %v4481 = vsub.f32 %v3644, %v4370
  %v4482 = vsub.f32 %v3646, %v4370
  %v4483 = vsub.f32 %v3650, %v4371
  %v4484 = vsub.f32 %v3652, %v4371
  %v4485 = vsub.f32 %v3654, %v4372
  %v4486 = vsub.f32 %v3656, %v4372
  %v4487 = vsub.f32 %v3660, %v4373
  %v4488 = vsub.f32 %v3662, %v4373
  %v4489 = vsub.f32 %v3664, %v4374
  %v4490 = vsub.f32 %v3666, %v4374
  %v4491 = vsub.f32 %v3670, %v4375
  %v4492 = vsub.f32 %v3672, %v4375
  %v4493 = vsub.f32 %v3674, %v4376
  %v4494 = vsub.f32 %v3676, %v4376
  %v4495 = vsub.f32 %v3680, %v4377
  %v4496 = vsub.f32 %v3682, %v4377
  %v4497 = vsub.f32 %v3684, %v4378
  %v4498 = vsub.f32 %v3686, %v4378
  %v4499 = vsub.f32 %v3690, %v4379
  %v4500 = vsub.f32 %v3692, %v4379
  %v4501 = vsub.f32 %v3694, %v4380
  %v4502 = vsub.f32 %v3696, %v4380
  %v4503 = vsub.f32 %v3700, %v4381
  %v4504 = vsub.f32 %v3702, %v4381
  %v4505 = vsub.f32 %v3704, %v4382
  %v4506 = vsub.f32 %v3706, %v4382
  %v4507 = vsub.f32 %v3710, %v4383
  %v4508 = vsub.f32 %v3712, %v4383
  %v4509 = vsub.f32 %v3714, %v4384
  %v4510 = vsub.f32 %v3716, %v4384
  %v4511 = vsub.f32 %v3720, %v4385
  %v4512 = vsub.f32 %v3722, %v4385
  %v4513 = vsub.f32 %v3724, %v4386
  %v4514 = vsub.f32 %v3726, %v4386
  %v4515 = vsub.f32 %v3730, %v4387
  %v4516 = vsub.f32 %v3732, %v4387
  %v4517 = vsub.f32 %v3734, %v4388
  %v4518 = vsub.f32 %v3736, %v4388
  %v4519 = vsub.f32 %v3740, %v4389
  %v4520 = vsub.f32 %v3742, %v4389
  %v4521 = vsub.f32 %v3744, %v4390
  %v4522 = vsub.f32 %v3746, %v4390
  %v4523 = vsub.f32 %v3750, %v4391
  %v4524 = vsub.f32 %v3752, %v4391
  %v4525 = vsub.f32 %v3754, %v4392
  %v4526 = vsub.f32 %v3756, %v4392
  %v4527 = vsub.f32 %v3760, %v4393
  %v4528 = vsub.f32 %v3762, %v4393
  %v4529 = vsub.f32 %v3764, %v4394
  %v4530 = vsub.f32 %v3766, %v4394
  %v4531 = vsub.f32 %v3770, %v4395
  %v4532 = vsub.f32 %v3772, %v4395
  %v4533 = vsub.f32 %v3774, %v4396
  %v4534 = vsub.f32 %v3776, %v4396
  %v4535 = vsub.f32 %v3780, %v4397
  %v4536 = vsub.f32 %v3782, %v4397
  %v4537 = vsub.f32 %v3784, %v4398
  %v4538 = vsub.f32 %v3786, %v4398
  %v4539 = vsub.f32 %v3790, %v4399
  %v4540 = vsub.f32 %v3792, %v4399
  %v4541 = vsub.f32 %v3794, %v4400
  %v4542 = vsub.f32 %v3796, %v4400
  %v4543 = vsub.f32 %v3800, %v4401
  %v4544 = vsub.f32 %v3802, %v4401
  %v4545 = vsub.f32 %v3804, %v4402
  %v4546 = vsub.f32 %v3806, %v4402
  %v4547 = vsub.f32 %v3810, %v4403
  %v4548 = vsub.f32 %v3812, %v4403
  %v4549 = vsub.f32 %v3814, %v4404
  %v4550 = vsub.f32 %v3816, %v4404
  %v4551 = vsub.f32 %v3820, %v4405
  %v4552 = vsub.f32 %v3822, %v4405
  %v4553 = vsub.f32 %v3824, %v4406
  %v4554 = vsub.f32 %v3826, %v4406
  %v4555 = vsub.f32 %v3830, %v4407
  %v4556 = vsub.f32 %v3832, %v4407
  %v4557 = vsub.f32 %v3834, %v4408
  %v4558 = vsub.f32 %v3836, %v4408
  %v4559 = vsub.f32 %v3840, %v4409
  %v4560 = vsub.f32 %v3842, %v4409
  %v4561 = vsub.f32 %v3844, %v4410
  %v4562 = vsub.f32 %v3846, %v4410
  %v4563 = vsub.f32 %v3850, %v4411
  %v4564 = vsub.f32 %v3852, %v4411
  %v4565 = vsub.f32 %v3854, %v4412
  %v4566 = vsub.f32 %v3856, %v4412
  %v4567 = vsub.f32 %v3860, %v4413
  %v4568 = vsub.f32 %v3862, %v4413
  %v4569 = vsub.f32 %v3864, %v4414
  %v4570 = vsub.f32 %v3866, %v4414
  %v4571 = vsub.f32 %v3870, %v4415
  %v4572 = vsub.f32 %v3872, %v4415
  %v4573 = vsub.f32 %v3874, %v4416
  %v4574 = vsub.f32 %v3876, %v4416
  %v4575 = vsub.f32 %v3880, %v4417
  %v4576 = vsub.f32 %v3882, %v4417
  %v4577 = vsub.f32 %v3884, %v4418
  %v4578 = vsub.f32 %v3886, %v4418
  %v4579 = vsub.f32 %v3890, %v4419
  %v4580 = vsub.f32 %v3892, %v4419
  %v4581 = vsub.f32 %v3894, %v4420
  %v4582 = vsub.f32 %v3896, %v4420
  %v4583 = vsub.f32 %v3900, %v4421
  %v4584 = vsub.f32 %v3902, %v4421
  %v4585 = vsub.f32 %v3904, %v4422
  %v4586 = vsub.f32 %v3906, %v4422
  %v4587 = vsub.f32 %v3910, %v4423
  %v4588 = vsub.f32 %v3912, %v4423
  %v4589 = vsub.f32 %v3914, %v4424
  %v4590 = vsub.f32 %v3916, %v4424
  %v4591 = vsub.f32 %v3920, %v4425
  %v4592 = vsub.f32 %v3922, %v4425
  %v4593 = vsub.f32 %v3924, %v4426
  %v4594 = vsub.f32 %v3926, %v4426
  %v4595 = vsub.f32 %v3930, %v4427
  %v4596 = vsub.f32 %v3932, %v4427
  %v4597 = vsub.f32 %v3934, %v4428
  %v4598 = vsub.f32 %v3936, %v4428
  %v4599 = vsub.f32 %v3940, %v4429
  %v4600 = vsub.f32 %v3942, %v4429
  %v4601 = vsub.f32 %v3944, %v4430
  %v4602 = vsub.f32 %v3946, %v4430
  %v4603 = vsub.f32 %v3950, %v4431
  %v4604 = vsub.f32 %v3952, %v4431
  %v4605 = vsub.f32 %v3954, %v4432
  %v4606 = vsub.f32 %v3956, %v4432
  %v4607 = vsub.f32 %v3960, %v4433
  %v4608 = vsub.f32 %v3962, %v4433
  %v4609 = vsub.f32 %v3964, %v4434
  %v4610 = vsub.f32 %v3966, %v4434
  %v4611 = vsub.f32 %v3970, %v4435
  %v4612 = vsub.f32 %v3972, %v4435
  %v4613 = vsub.f32 %v3974, %v4436
  %v4614 = vsub.f32 %v3976, %v4436
  %v4615 = vsub.f32 %v3980, %v4437
  %v4616 = vsub.f32 %v3982, %v4437
  %v4617 = vsub.f32 %v3984, %v4438
  %v4618 = vsub.f32 %v3986, %v4438
  %v4619 = vmul.f32 %v4439, %v4439
  %v4620 = vmul.f32 %v4440, %v4440
  %v4621 = vmul.f32 %v4441, %v4441
  %v4622 = vmul.f32 %v4442, %v4442
  %v4623 = vmul.f32 %v4443, %v4443
  %v4624 = vmul.f32 %v4444, %v4444
  %v4625 = vmul.f32 %v4445, %v4445
  %v4626 = vmul.f32 %v4446, %v4446
  %v4627 = vmul.f32 %v4447, %v4447
  %v4628 = vmul.f32 %v4448, %v4448
  %v4629 = vmul.f32 %v4449, %v4449
  %v4630 = vmul.f32 %v4450, %v4450
  %v4631 = vmul.f32 %v4451, %v4451
  %v4632 = vmul.f32 %v4452, %v4452
  %v4633 = vmul.f32 %v4453, %v4453
  %v4634 = vmul.f32 %v4454, %v4454
  %v4635 = vmul.f32 %v4455, %v4455
  %v4636 = vmul.f32 %v4456, %v4456
  %v4637 = vmul.f32 %v4457, %v4457
  %v4638 = vmul.f32 %v4458, %v4458
  %v4639 = vmul.f32 %v4459, %v4459
  %v4640 = vmul.f32 %v4460, %v4460
  %v4641 = vmul.f32 %v4461, %v4461
  %v4642 = vmul.f32 %v4462, %v4462
  %v4643 = vmul.f32 %v4463, %v4463
  %v4644 = vmul.f32 %v4464, %v4464
  %v4645 = vmul.f32 %v4465, %v4465
  %v4646 = vmul.f32 %v4466, %v4466
  %v4647 = vmul.f32 %v4467, %v4467
  %v4648 = vmul.f32 %v4468, %v4468
  %v4649 = vmul.f32 %v4469, %v4469
  %v4650 = vmul.f32 %v4470, %v4470
  %v4651 = vmul.f32 %v4471, %v4471
  %v4652 = vmul.f32 %v4472, %v4472
  %v4653 = vmul.f32 %v4473, %v4473
  %v4654 = vmul.f32 %v4474, %v4474
  %v4655 = vmul.f32 %v4475, %v4475
  %v4656 = vmul.f32 %v4476, %v4476
  %v4657 = vmul.f32 %v4477, %v4477
  %v4658 = vmul.f32 %v4478, %v4478
  %v4659 = vmul.f32 %v4479, %v4479
  %v4660 = vmul.f32 %v4480, %v4480
  %v4661 = vmul.f32 %v4481, %v4481
  %v4662 = vmul.f32 %v4482, %v4482
  %v4663 = vmul.f32 %v4483, %v4483
  %v4664 = vmul.f32 %v4484, %v4484
  %v4665 = vmul.f32 %v4485, %v4485
  %v4666 = vmul.f32 %v4486, %v4486
  %v4667 = vmul.f32 %v4487, %v4487
  %v4668 = vmul.f32 %v4488, %v4488
  %v4669 = vmul.f32 %v4489, %v4489
  %v4670 = vmul.f32 %v4490, %v4490
  %v4671 = vmul.f32 %v4491, %v4491
  %v4672 = vmul.f32 %v4492, %v4492
  %v4673 = vmul.f32 %v4493, %v4493
  %v4674 = vmul.f32 %v4494, %v4494
  %v4675 = vmul.f32 %v4495, %v4495
  %v4676 = vmul.f32 %v4496, %v4496
  %v4677 = vmul.f32 %v4497, %v4497
  %v4678 = vmul.f32 %v4498, %v4498
  %v4679 = vmul.f32 %v4499, %v4499
  %v4680 = vmul.f32 %v4500, %v4500
  %v4681 = vmul.f32 %v4501, %v4501
  %v4682 = vmul.f32 %v4502, %v4502
  %v4683 = vmul.f32 %v4503, %v4503
  %v4684 = vmul.f32 %v4504, %v4504
  %v4685 = vmul.f32 %v4505, %v4505
  %v4686 = vmul.f32 %v4506, %v4506
  %v4687 = vmul.f32 %v4507, %v4507
  %v4688 = vmul.f32 %v4508, %v4508
  %v4689 = vmul.f32 %v4509, %v4509
  %v4690 = vmul.f32 %v4510, %v4510
  %v4691 = vmul.f32 %v4511, %v4511
  %v4692 = vmul.f32 %v4512, %v4512
  %v4693 = vmul.f32 %v4513, %v4513
  %v4694 = vmul.f32 %v4514, %v4514
  %v4695 = vmul.f32 %v4515, %v4515
  %v4696 = vmul.f32 %v4516, %v4516
  %v4697 = vmul.f32 %v4517, %v4517
  %v4698 = vmul.f32 %v4518, %v4518
  %v4699 = vmul.f32 %v4519, %v4519
  %v4700 = vmul.f32 %v4520, %v4520
  %v4701 = vmul.f32 %v4521, %v4521
  %v4702 = vmul.f32 %v4522, %v4522
  %v4703 = vmul.f32 %v4523, %v4523
  %v4704 = vmul.f32 %v4524, %v4524
  %v4705 = vmul.f32 %v4525, %v4525
  %v4706 = vmul.f32 %v4526, %v4526
  %v4707 = vmul.f32 %v4527, %v4527
  %v4708 = vmul.f32 %v4528, %v4528
  %v4709 = vmul.f32 %v4529, %v4529
  %v4710 = vmul.f32 %v4530, %v4530
  %v4711 = vmul.f32 %v4531, %v4531
  %v4712 = vmul.f32 %v4532, %v4532
  %v4713 = vmul.f32 %v4533, %v4533
  %v4714 = vmul.f32 %v4534, %v4534
  %v4715 = vmul.f32 %v4535, %v4535
  %v4716 = vmul.f32 %v4536, %v4536
  %v4717 = vmul.f32 %v4537, %v4537
  %v4718 = vmul.f32 %v4538, %v4538
  %v4719 = vmul.f32 %v4539, %v4539
  %v4720 = vmul.f32 %v4540, %v4540
  %v4721 = vmul.f32 %v4541, %v4541
  %v4722 = vmul.f32 %v4542, %v4542
  %v4723 = vmul.f32 %v4543, %v4543
  %v4724 = vmul.f32 %v4544, %v4544
  %v4725 = vmul.f32 %v4545, %v4545
  %v4726 = vmul.f32 %v4546, %v4546
  %v4727 = vmul.f32 %v4547, %v4547
  %v4728 = vmul.f32 %v4548, %v4548
  %v4729 = vmul.f32 %v4549, %v4549
  %v4730 = vmul.f32 %v4550, %v4550
  %v4731 = vmul.f32 %v4551, %v4551
  %v4732 = vmul.f32 %v4552, %v4552
  %v4733 = vmul.f32 %v4553, %v4553
  %v4734 = vmul.f32 %v4554, %v4554
  %v4735 = vmul.f32 %v4555, %v4555
  %v4736 = vmul.f32 %v4556, %v4556
  %v4737 = vmul.f32 %v4557, %v4557
  %v4738 = vmul.f32 %v4558, %v4558
  %v4739 = vmul.f32 %v4559, %v4559
  %v4740 = vmul.f32 %v4560, %v4560
  %v4741 = vmul.f32 %v4561, %v4561
  %v4742 = vmul.f32 %v4562, %v4562
  %v4743 = vmul.f32 %v4563, %v4563
  %v4744 = vmul.f32 %v4564, %v4564
  %v4745 = vmul.f32 %v4565, %v4565
  %v4746 = vmul.f32 %v4566, %v4566
  %v4747 = vmul.f32 %v4567, %v4567
  %v4748 = vmul.f32 %v4568, %v4568
  %v4749 = vmul.f32 %v4569, %v4569
  %v4750 = vmul.f32 %v4570, %v4570
  %v4751 = vmul.f32 %v4571, %v4571
  %v4752 = vmul.f32 %v4572, %v4572
  %v4753 = vmul.f32 %v4573, %v4573
  %v4754 = vmul.f32 %v4574, %v4574
  %v4755 = vmul.f32 %v4575, %v4575
  %v4756 = vmul.f32 %v4576, %v4576
  %v4757 = vmul.f32 %v4577, %v4577
  %v4758 = vmul.f32 %v4578, %v4578
  %v4759 = vmul.f32 %v4579, %v4579
  %v4760 = vmul.f32 %v4580, %v4580
  %v4761 = vmul.f32 %v4581, %v4581
  %v4762 = vmul.f32 %v4582, %v4582
  %v4763 = vmul.f32 %v4583, %v4583
  %v4764 = vmul.f32 %v4584, %v4584
  %v4765 = vmul.f32 %v4585, %v4585
  %v4766 = vmul.f32 %v4586, %v4586
  %v4767 = vmul.f32 %v4587, %v4587
  %v4768 = vmul.f32 %v4588, %v4588
  %v4769 = vmul.f32 %v4589, %v4589
  %v4770 = vmul.f32 %v4590, %v4590
  %v4771 = vmul.f32 %v4591, %v4591
  %v4772 = vmul.f32 %v4592, %v4592
  %v4773 = vmul.f32 %v4593, %v4593
  %v4774 = vmul.f32 %v4594, %v4594
  %v4775 = vmul.f32 %v4595, %v4595
  %v4776 = vmul.f32 %v4596, %v4596
  %v4777 = vmul.f32 %v4597, %v4597
  %v4778 = vmul.f32 %v4598, %v4598
  %v4779 = vmul.f32 %v4599, %v4599
  %v4780 = vmul.f32 %v4600, %v4600
  %v4781 = vmul.f32 %v4601, %v4601
  %v4782 = vmul.f32 %v4602, %v4602
  %v4783 = vmul.f32 %v4603, %v4603
  %v4784 = vmul.f32 %v4604, %v4604
  %v4785 = vmul.f32 %v4605, %v4605
  %v4786 = vmul.f32 %v4606, %v4606
  %v4787 = vmul.f32 %v4607, %v4607
  %v4788 = vmul.f32 %v4608, %v4608
  %v4789 = vmul.f32 %v4609, %v4609
  %v4790 = vmul.f32 %v4610, %v4610
  %v4791 = vmul.f32 %v4611, %v4611
  %v4792 = vmul.f32 %v4612, %v4612
  %v4793 = vmul.f32 %v4613, %v4613
  %v4794 = vmul.f32 %v4614, %v4614
  %v4795 = vmul.f32 %v4615, %v4615
  %v4796 = vmul.f32 %v4616, %v4616
  %v4797 = vmul.f32 %v4617, %v4617
  %v4798 = vmul.f32 %v4618, %v4618
  %v4799 = vsel %vm3988, %v4620, 0.0
  %v4800 = vadd.f32 %v4619, %v4799
  %4801 = vadd.xlane.f32.xlu0 %v4800
  %v4802 = vpop.xlane.xlu0 %4801
  %v4803 = vsel %vm3988, %v4622, 0.0
  %v4804 = vadd.f32 %v4621, %v4803
  %4805 = vadd.xlane.f32.xlu0 %v4804
  %v4806 = vpop.xlane.xlu0 %4805
  %v4807 = vsel %vm3988, %v4624, 0.0
  %v4808 = vadd.f32 %v4623, %v4807
  %4809 = vadd.xlane.f32.xlu0 %v4808
  %v4810 = vpop.xlane.xlu0 %4809
  %v4811 = vsel %vm3988, %v4626, 0.0
  %v4812 = vadd.f32 %v4625, %v4811
  %4813 = vadd.xlane.f32.xlu0 %v4812
  %v4814 = vpop.xlane.xlu0 %4813
  %v4815 = vsel %vm3988, %v4628, 0.0
  %v4816 = vadd.f32 %v4627, %v4815
  %4817 = vadd.xlane.f32.xlu0 %v4816
  %v4818 = vpop.xlane.xlu0 %4817
  %v4819 = vsel %vm3988, %v4630, 0.0
  %v4820 = vadd.f32 %v4629, %v4819
  %4821 = vadd.xlane.f32.xlu0 %v4820
  %v4822 = vpop.xlane.xlu0 %4821
  %v4823 = vsel %vm3988, %v4632, 0.0
  %v4824 = vadd.f32 %v4631, %v4823
  %4825 = vadd.xlane.f32.xlu0 %v4824
  %v4826 = vpop.xlane.xlu0 %4825
  %v4827 = vsel %vm3988, %v4634, 0.0
  %v4828 = vadd.f32 %v4633, %v4827
  %4829 = vadd.xlane.f32.xlu0 %v4828
  %v4830 = vpop.xlane.xlu0 %4829
  %v4831 = vsel %vm3988, %v4636, 0.0
  %v4832 = vadd.f32 %v4635, %v4831
  %4833 = vadd.xlane.f32.xlu0 %v4832
  %v4834 = vpop.xlane.xlu0 %4833
  %v4835 = vsel %vm3988, %v4638, 0.0
  %v4836 = vadd.f32 %v4637, %v4835
  %4837 = vadd.xlane.f32.xlu0 %v4836
  %v4838 = vpop.xlane.xlu0 %4837
  %v4839 = vsel %vm3988, %v4640, 0.0
  %v4840 = vadd.f32 %v4639, %v4839
  %4841 = vadd.xlane.f32.xlu0 %v4840
  %v4842 = vpop.xlane.xlu0 %4841
  %v4843 = vsel %vm3988, %v4642, 0.0
  %v4844 = vadd.f32 %v4641, %v4843
  %4845 = vadd.xlane.f32.xlu0 %v4844
  %v4846 = vpop.xlane.xlu0 %4845
  %v4847 = vsel %vm3988, %v4644, 0.0
  %v4848 = vadd.f32 %v4643, %v4847
  %4849 = vadd.xlane.f32.xlu0 %v4848
  %v4850 = vpop.xlane.xlu0 %4849
  %v4851 = vsel %vm3988, %v4646, 0.0
  %v4852 = vadd.f32 %v4645, %v4851
  %4853 = vadd.xlane.f32.xlu0 %v4852
  %v4854 = vpop.xlane.xlu0 %4853
  %v4855 = vsel %vm3988, %v4648, 0.0
  %v4856 = vadd.f32 %v4647, %v4855
  %4857 = vadd.xlane.f32.xlu0 %v4856
  %v4858 = vpop.xlane.xlu0 %4857
  %v4859 = vsel %vm3988, %v4650, 0.0
  %v4860 = vadd.f32 %v4649, %v4859
  %4861 = vadd.xlane.f32.xlu0 %v4860
  %v4862 = vpop.xlane.xlu0 %4861
  %v4863 = vsel %vm3988, %v4652, 0.0
  %v4864 = vadd.f32 %v4651, %v4863
  %4865 = vadd.xlane.f32.xlu0 %v4864
  %v4866 = vpop.xlane.xlu0 %4865
  %v4867 = vsel %vm3988, %v4654, 0.0
  %v4868 = vadd.f32 %v4653, %v4867
  %4869 = vadd.xlane.f32.xlu0 %v4868
  %v4870 = vpop.xlane.xlu0 %4869
  %v4871 = vsel %vm3988, %v4656, 0.0
  %v4872 = vadd.f32 %v4655, %v4871
  %4873 = vadd.xlane.f32.xlu0 %v4872
  %v4874 = vpop.xlane.xlu0 %4873
  %v4875 = vsel %vm3988, %v4658, 0.0
  %v4876 = vadd.f32 %v4657, %v4875
  %4877 = vadd.xlane.f32.xlu0 %v4876
  %v4878 = vpop.xlane.xlu0 %4877
  %v4879 = vsel %vm3988, %v4660, 0.0
  %v4880 = vadd.f32 %v4659, %v4879
  %4881 = vadd.xlane.f32.xlu0 %v4880
  %v4882 = vpop.xlane.xlu0 %4881
  %v4883 = vsel %vm3988, %v4662, 0.0
  %v4884 = vadd.f32 %v4661, %v4883
  %4885 = vadd.xlane.f32.xlu0 %v4884
  %v4886 = vpop.xlane.xlu0 %4885
  %v4887 = vsel %vm3988, %v4664, 0.0
  %v4888 = vadd.f32 %v4663, %v4887
  %4889 = vadd.xlane.f32.xlu0 %v4888
  %v4890 = vpop.xlane.xlu0 %4889
  %v4891 = vsel %vm3988, %v4666, 0.0
  %v4892 = vadd.f32 %v4665, %v4891
  %4893 = vadd.xlane.f32.xlu0 %v4892
  %v4894 = vpop.xlane.xlu0 %4893
  %v4895 = vsel %vm3988, %v4668, 0.0
  %v4896 = vadd.f32 %v4667, %v4895
  %4897 = vadd.xlane.f32.xlu0 %v4896
  %v4898 = vpop.xlane.xlu0 %4897
  %v4899 = vsel %vm3988, %v4670, 0.0
  %v4900 = vadd.f32 %v4669, %v4899
  %4901 = vadd.xlane.f32.xlu0 %v4900
  %v4902 = vpop.xlane.xlu0 %4901
  %v4903 = vsel %vm3988, %v4672, 0.0
  %v4904 = vadd.f32 %v4671, %v4903
  %4905 = vadd.xlane.f32.xlu0 %v4904
  %v4906 = vpop.xlane.xlu0 %4905
  %v4907 = vsel %vm3988, %v4674, 0.0
  %v4908 = vadd.f32 %v4673, %v4907
  %4909 = vadd.xlane.f32.xlu0 %v4908
  %v4910 = vpop.xlane.xlu0 %4909
  %v4911 = vsel %vm3988, %v4676, 0.0
  %v4912 = vadd.f32 %v4675, %v4911
  %4913 = vadd.xlane.f32.xlu0 %v4912
  %v4914 = vpop.xlane.xlu0 %4913
  %v4915 = vsel %vm3988, %v4678, 0.0
  %v4916 = vadd.f32 %v4677, %v4915
  %4917 = vadd.xlane.f32.xlu0 %v4916
  %v4918 = vpop.xlane.xlu0 %4917
  %v4919 = vsel %vm3988, %v4680, 0.0
  %v4920 = vadd.f32 %v4679, %v4919
  %4921 = vadd.xlane.f32.xlu0 %v4920
  %v4922 = vpop.xlane.xlu0 %4921
  %v4923 = vsel %vm3988, %v4682, 0.0
  %v4924 = vadd.f32 %v4681, %v4923
  %4925 = vadd.xlane.f32.xlu0 %v4924
  %v4926 = vpop.xlane.xlu0 %4925
  %v4927 = vsel %vm3988, %v4684, 0.0
  %v4928 = vadd.f32 %v4683, %v4927
  %4929 = vadd.xlane.f32.xlu0 %v4928
  %v4930 = vpop.xlane.xlu0 %4929
  %v4931 = vsel %vm3988, %v4686, 0.0
  %v4932 = vadd.f32 %v4685, %v4931
  %4933 = vadd.xlane.f32.xlu0 %v4932
  %v4934 = vpop.xlane.xlu0 %4933
  %v4935 = vsel %vm3988, %v4688, 0.0
  %v4936 = vadd.f32 %v4687, %v4935
  %4937 = vadd.xlane.f32.xlu0 %v4936
  %v4938 = vpop.xlane.xlu0 %4937
  %v4939 = vsel %vm3988, %v4690, 0.0
  %v4940 = vadd.f32 %v4689, %v4939
  %4941 = vadd.xlane.f32.xlu0 %v4940
  %v4942 = vpop.xlane.xlu0 %4941
  %v4943 = vsel %vm3988, %v4692, 0.0
  %v4944 = vadd.f32 %v4691, %v4943
  %4945 = vadd.xlane.f32.xlu0 %v4944
  %v4946 = vpop.xlane.xlu0 %4945
  %v4947 = vsel %vm3988, %v4694, 0.0
  %v4948 = vadd.f32 %v4693, %v4947
  %4949 = vadd.xlane.f32.xlu0 %v4948
  %v4950 = vpop.xlane.xlu0 %4949
  %v4951 = vsel %vm3988, %v4696, 0.0
  %v4952 = vadd.f32 %v4695, %v4951
  %4953 = vadd.xlane.f32.xlu0 %v4952
  %v4954 = vpop.xlane.xlu0 %4953
  %v4955 = vsel %vm3988, %v4698, 0.0
  %v4956 = vadd.f32 %v4697, %v4955
  %4957 = vadd.xlane.f32.xlu0 %v4956
  %v4958 = vpop.xlane.xlu0 %4957
  %v4959 = vsel %vm3988, %v4700, 0.0
  %v4960 = vadd.f32 %v4699, %v4959
  %4961 = vadd.xlane.f32.xlu0 %v4960
  %v4962 = vpop.xlane.xlu0 %4961
  %v4963 = vsel %vm3988, %v4702, 0.0
  %v4964 = vadd.f32 %v4701, %v4963
  %4965 = vadd.xlane.f32.xlu0 %v4964
  %v4966 = vpop.xlane.xlu0 %4965
  %v4967 = vsel %vm3988, %v4704, 0.0
  %v4968 = vadd.f32 %v4703, %v4967
  %4969 = vadd.xlane.f32.xlu0 %v4968
  %v4970 = vpop.xlane.xlu0 %4969
  %v4971 = vsel %vm3988, %v4706, 0.0
  %v4972 = vadd.f32 %v4705, %v4971
  %4973 = vadd.xlane.f32.xlu0 %v4972
  %v4974 = vpop.xlane.xlu0 %4973
  %v4975 = vsel %vm3988, %v4708, 0.0
  %v4976 = vadd.f32 %v4707, %v4975
  %4977 = vadd.xlane.f32.xlu0 %v4976
  %v4978 = vpop.xlane.xlu0 %4977
  %v4979 = vsel %vm3988, %v4710, 0.0
  %v4980 = vadd.f32 %v4709, %v4979
  %4981 = vadd.xlane.f32.xlu0 %v4980
  %v4982 = vpop.xlane.xlu0 %4981
  %v4983 = vsel %vm3988, %v4712, 0.0
  %v4984 = vadd.f32 %v4711, %v4983
  %4985 = vadd.xlane.f32.xlu0 %v4984
  %v4986 = vpop.xlane.xlu0 %4985
  %v4987 = vsel %vm3988, %v4714, 0.0
  %v4988 = vadd.f32 %v4713, %v4987
  %4989 = vadd.xlane.f32.xlu0 %v4988
  %v4990 = vpop.xlane.xlu0 %4989
  %v4991 = vsel %vm3988, %v4716, 0.0
  %v4992 = vadd.f32 %v4715, %v4991
  %4993 = vadd.xlane.f32.xlu0 %v4992
  %v4994 = vpop.xlane.xlu0 %4993
  %v4995 = vsel %vm3988, %v4718, 0.0
  %v4996 = vadd.f32 %v4717, %v4995
  %4997 = vadd.xlane.f32.xlu0 %v4996
  %v4998 = vpop.xlane.xlu0 %4997
  %v4999 = vsel %vm3988, %v4720, 0.0
  %v5000 = vadd.f32 %v4719, %v4999
  %5001 = vadd.xlane.f32.xlu0 %v5000
  %v5002 = vpop.xlane.xlu0 %5001
  %v5003 = vsel %vm3988, %v4722, 0.0
  %v5004 = vadd.f32 %v4721, %v5003
  %5005 = vadd.xlane.f32.xlu0 %v5004
  %v5006 = vpop.xlane.xlu0 %5005
  %v5007 = vsel %vm3988, %v4724, 0.0
  %v5008 = vadd.f32 %v4723, %v5007
  %5009 = vadd.xlane.f32.xlu0 %v5008
  %v5010 = vpop.xlane.xlu0 %5009
  %v5011 = vsel %vm3988, %v4726, 0.0
  %v5012 = vadd.f32 %v4725, %v5011
  %5013 = vadd.xlane.f32.xlu0 %v5012
  %v5014 = vpop.xlane.xlu0 %5013
  %v5015 = vsel %vm3988, %v4728, 0.0
  %v5016 = vadd.f32 %v4727, %v5015
  %5017 = vadd.xlane.f32.xlu0 %v5016
  %v5018 = vpop.xlane.xlu0 %5017
  %v5019 = vsel %vm3988, %v4730, 0.0
  %v5020 = vadd.f32 %v4729, %v5019
  %5021 = vadd.xlane.f32.xlu0 %v5020
  %v5022 = vpop.xlane.xlu0 %5021
  %v5023 = vsel %vm3988, %v4732, 0.0
  %v5024 = vadd.f32 %v4731, %v5023
  %5025 = vadd.xlane.f32.xlu0 %v5024
  %v5026 = vpop.xlane.xlu0 %5025
  %v5027 = vsel %vm3988, %v4734, 0.0
  %v5028 = vadd.f32 %v4733, %v5027
  %5029 = vadd.xlane.f32.xlu0 %v5028
  %v5030 = vpop.xlane.xlu0 %5029
  %v5031 = vsel %vm3988, %v4736, 0.0
  %v5032 = vadd.f32 %v4735, %v5031
  %5033 = vadd.xlane.f32.xlu0 %v5032
  %v5034 = vpop.xlane.xlu0 %5033
  %v5035 = vsel %vm3988, %v4738, 0.0
  %v5036 = vadd.f32 %v4737, %v5035
  %5037 = vadd.xlane.f32.xlu0 %v5036
  %v5038 = vpop.xlane.xlu0 %5037
  %v5039 = vsel %vm3988, %v4740, 0.0
  %v5040 = vadd.f32 %v4739, %v5039
  %5041 = vadd.xlane.f32.xlu0 %v5040
  %v5042 = vpop.xlane.xlu0 %5041
  %v5043 = vsel %vm3988, %v4742, 0.0
  %v5044 = vadd.f32 %v4741, %v5043
  %5045 = vadd.xlane.f32.xlu0 %v5044
  %v5046 = vpop.xlane.xlu0 %5045
  %v5047 = vsel %vm3988, %v4744, 0.0
  %v5048 = vadd.f32 %v4743, %v5047
  %5049 = vadd.xlane.f32.xlu0 %v5048
  %v5050 = vpop.xlane.xlu0 %5049
  %v5051 = vsel %vm3988, %v4746, 0.0
  %v5052 = vadd.f32 %v4745, %v5051
  %5053 = vadd.xlane.f32.xlu0 %v5052
  %v5054 = vpop.xlane.xlu0 %5053
  %v5055 = vsel %vm3988, %v4748, 0.0
  %v5056 = vadd.f32 %v4747, %v5055
  %5057 = vadd.xlane.f32.xlu0 %v5056
  %v5058 = vpop.xlane.xlu0 %5057
  %v5059 = vsel %vm3988, %v4750, 0.0
  %v5060 = vadd.f32 %v4749, %v5059
  %5061 = vadd.xlane.f32.xlu0 %v5060
  %v5062 = vpop.xlane.xlu0 %5061
  %v5063 = vsel %vm3988, %v4752, 0.0
  %v5064 = vadd.f32 %v4751, %v5063
  %5065 = vadd.xlane.f32.xlu0 %v5064
  %v5066 = vpop.xlane.xlu0 %5065
  %v5067 = vsel %vm3988, %v4754, 0.0
  %v5068 = vadd.f32 %v4753, %v5067
  %5069 = vadd.xlane.f32.xlu0 %v5068
  %v5070 = vpop.xlane.xlu0 %5069
  %v5071 = vsel %vm3988, %v4756, 0.0
  %v5072 = vadd.f32 %v4755, %v5071
  %5073 = vadd.xlane.f32.xlu0 %v5072
  %v5074 = vpop.xlane.xlu0 %5073
  %v5075 = vsel %vm3988, %v4758, 0.0
  %v5076 = vadd.f32 %v4757, %v5075
  %5077 = vadd.xlane.f32.xlu0 %v5076
  %v5078 = vpop.xlane.xlu0 %5077
  %v5079 = vsel %vm3988, %v4760, 0.0
  %v5080 = vadd.f32 %v4759, %v5079
  %5081 = vadd.xlane.f32.xlu0 %v5080
  %v5082 = vpop.xlane.xlu0 %5081
  %v5083 = vsel %vm3988, %v4762, 0.0
  %v5084 = vadd.f32 %v4761, %v5083
  %5085 = vadd.xlane.f32.xlu0 %v5084
  %v5086 = vpop.xlane.xlu0 %5085
  %v5087 = vsel %vm3988, %v4764, 0.0
  %v5088 = vadd.f32 %v4763, %v5087
  %5089 = vadd.xlane.f32.xlu0 %v5088
  %v5090 = vpop.xlane.xlu0 %5089
  %v5091 = vsel %vm3988, %v4766, 0.0
  %v5092 = vadd.f32 %v4765, %v5091
  %5093 = vadd.xlane.f32.xlu0 %v5092
  %v5094 = vpop.xlane.xlu0 %5093
  %v5095 = vsel %vm3988, %v4768, 0.0
  %v5096 = vadd.f32 %v4767, %v5095
  %5097 = vadd.xlane.f32.xlu0 %v5096
  %v5098 = vpop.xlane.xlu0 %5097
  %v5099 = vsel %vm3988, %v4770, 0.0
  %v5100 = vadd.f32 %v4769, %v5099
  %5101 = vadd.xlane.f32.xlu0 %v5100
  %v5102 = vpop.xlane.xlu0 %5101
  %v5103 = vsel %vm3988, %v4772, 0.0
  %v5104 = vadd.f32 %v4771, %v5103
  %5105 = vadd.xlane.f32.xlu0 %v5104
  %v5106 = vpop.xlane.xlu0 %5105
  %v5107 = vsel %vm3988, %v4774, 0.0
  %v5108 = vadd.f32 %v4773, %v5107
  %5109 = vadd.xlane.f32.xlu0 %v5108
  %v5110 = vpop.xlane.xlu0 %5109
  %v5111 = vsel %vm3988, %v4776, 0.0
  %v5112 = vadd.f32 %v4775, %v5111
  %5113 = vadd.xlane.f32.xlu0 %v5112
  %v5114 = vpop.xlane.xlu0 %5113
  %v5115 = vsel %vm3988, %v4778, 0.0
  %v5116 = vadd.f32 %v4777, %v5115
  %5117 = vadd.xlane.f32.xlu0 %v5116
  %v5118 = vpop.xlane.xlu0 %5117
  %v5119 = vsel %vm3988, %v4780, 0.0
  %v5120 = vadd.f32 %v4779, %v5119
  %5121 = vadd.xlane.f32.xlu0 %v5120
  %v5122 = vpop.xlane.xlu0 %5121
  %v5123 = vsel %vm3988, %v4782, 0.0
  %v5124 = vadd.f32 %v4781, %v5123
  %5125 = vadd.xlane.f32.xlu0 %v5124
  %v5126 = vpop.xlane.xlu0 %5125
  %v5127 = vsel %vm3988, %v4784, 0.0
  %v5128 = vadd.f32 %v4783, %v5127
  %5129 = vadd.xlane.f32.xlu0 %v5128
  %v5130 = vpop.xlane.xlu0 %5129
  %v5131 = vsel %vm3988, %v4786, 0.0
  %v5132 = vadd.f32 %v4785, %v5131
  %5133 = vadd.xlane.f32.xlu0 %v5132
  %v5134 = vpop.xlane.xlu0 %5133
  %v5135 = vsel %vm3988, %v4788, 0.0
  %v5136 = vadd.f32 %v4787, %v5135
  %5137 = vadd.xlane.f32.xlu0 %v5136
  %v5138 = vpop.xlane.xlu0 %5137
  %v5139 = vsel %vm3988, %v4790, 0.0
  %v5140 = vadd.f32 %v4789, %v5139
  %5141 = vadd.xlane.f32.xlu0 %v5140
  %v5142 = vpop.xlane.xlu0 %5141
  %v5143 = vsel %vm3988, %v4792, 0.0
  %v5144 = vadd.f32 %v4791, %v5143
  %5145 = vadd.xlane.f32.xlu0 %v5144
  %v5146 = vpop.xlane.xlu0 %5145
  %v5147 = vsel %vm3988, %v4794, 0.0
  %v5148 = vadd.f32 %v4793, %v5147
  %5149 = vadd.xlane.f32.xlu0 %v5148
  %v5150 = vpop.xlane.xlu0 %5149
  %v5151 = vsel %vm3988, %v4796, 0.0
  %v5152 = vadd.f32 %v4795, %v5151
  %5153 = vadd.xlane.f32.xlu0 %v5152
  %v5154 = vpop.xlane.xlu0 %5153
  %v5155 = vsel %vm3988, %v4798, 0.0
  %v5156 = vadd.f32 %v4797, %v5155
  %5157 = vadd.xlane.f32.xlu0 %v5156
  %v5158 = vpop.xlane.xlu0 %5157
  %v5159 = vmul.f32 %v4802, 0.0051020407
  %v5160 = vmul.f32 %v4806, 0.0051020407
  %v5161 = vmul.f32 %v4810, 0.0051020407
  %v5162 = vmul.f32 %v4814, 0.0051020407
  %v5163 = vmul.f32 %v4818, 0.0051020407
  %v5164 = vmul.f32 %v4822, 0.0051020407
  %v5165 = vmul.f32 %v4826, 0.0051020407
  %v5166 = vmul.f32 %v4830, 0.0051020407
  %v5167 = vmul.f32 %v4834, 0.0051020407
  %v5168 = vmul.f32 %v4838, 0.0051020407
  %v5169 = vmul.f32 %v4842, 0.0051020407
  %v5170 = vmul.f32 %v4846, 0.0051020407
  %v5171 = vmul.f32 %v4850, 0.0051020407
  %v5172 = vmul.f32 %v4854, 0.0051020407
  %v5173 = vmul.f32 %v4858, 0.0051020407
  %v5174 = vmul.f32 %v4862, 0.0051020407
  %v5175 = vmul.f32 %v4866, 0.0051020407
  %v5176 = vmul.f32 %v4870, 0.0051020407
  %v5177 = vmul.f32 %v4874, 0.0051020407
  %v5178 = vmul.f32 %v4878, 0.0051020407
  %v5179 = vmul.f32 %v4882, 0.0051020407
  %v5180 = vmul.f32 %v4886, 0.0051020407
  %v5181 = vmul.f32 %v4890, 0.0051020407
  %v5182 = vmul.f32 %v4894, 0.0051020407
  %v5183 = vmul.f32 %v4898, 0.0051020407
  %v5184 = vmul.f32 %v4902, 0.0051020407
  %v5185 = vmul.f32 %v4906, 0.0051020407
  %v5186 = vmul.f32 %v4910, 0.0051020407
  %v5187 = vmul.f32 %v4914, 0.0051020407
  %v5188 = vmul.f32 %v4918, 0.0051020407
  %v5189 = vmul.f32 %v4922, 0.0051020407
  %v5190 = vmul.f32 %v4926, 0.0051020407
  %v5191 = vmul.f32 %v4930, 0.0051020407
  %v5192 = vmul.f32 %v4934, 0.0051020407
  %v5193 = vmul.f32 %v4938, 0.0051020407
  %v5194 = vmul.f32 %v4942, 0.0051020407
  %v5195 = vmul.f32 %v4946, 0.0051020407
  %v5196 = vmul.f32 %v4950, 0.0051020407
  %v5197 = vmul.f32 %v4954, 0.0051020407
  %v5198 = vmul.f32 %v4958, 0.0051020407
  %v5199 = vmul.f32 %v4962, 0.0051020407
  %v5200 = vmul.f32 %v4966, 0.0051020407
  %v5201 = vmul.f32 %v4970, 0.0051020407
  %v5202 = vmul.f32 %v4974, 0.0051020407
  %v5203 = vmul.f32 %v4978, 0.0051020407
  %v5204 = vmul.f32 %v4982, 0.0051020407
  %v5205 = vmul.f32 %v4986, 0.0051020407
  %v5206 = vmul.f32 %v4990, 0.0051020407
  %v5207 = vmul.f32 %v4994, 0.0051020407
  %v5208 = vmul.f32 %v4998, 0.0051020407
  %v5209 = vmul.f32 %v5002, 0.0051020407
  %v5210 = vmul.f32 %v5006, 0.0051020407
  %v5211 = vmul.f32 %v5010, 0.0051020407
  %v5212 = vmul.f32 %v5014, 0.0051020407
  %v5213 = vmul.f32 %v5018, 0.0051020407
  %v5214 = vmul.f32 %v5022, 0.0051020407
  %v5215 = vmul.f32 %v5026, 0.0051020407
  %v5216 = vmul.f32 %v5030, 0.0051020407
  %v5217 = vmul.f32 %v5034, 0.0051020407
  %v5218 = vmul.f32 %v5038, 0.0051020407
  %v5219 = vmul.f32 %v5042, 0.0051020407
  %v5220 = vmul.f32 %v5046, 0.0051020407
  %v5221 = vmul.f32 %v5050, 0.0051020407
  %v5222 = vmul.f32 %v5054, 0.0051020407
  %v5223 = vmul.f32 %v5058, 0.0051020407
  %v5224 = vmul.f32 %v5062, 0.0051020407
  %v5225 = vmul.f32 %v5066, 0.0051020407
  %v5226 = vmul.f32 %v5070, 0.0051020407
  %v5227 = vmul.f32 %v5074, 0.0051020407
  %v5228 = vmul.f32 %v5078, 0.0051020407
  %v5229 = vmul.f32 %v5082, 0.0051020407
  %v5230 = vmul.f32 %v5086, 0.0051020407
  %v5231 = vmul.f32 %v5090, 0.0051020407
  %v5232 = vmul.f32 %v5094, 0.0051020407
  %v5233 = vmul.f32 %v5098, 0.0051020407
  %v5234 = vmul.f32 %v5102, 0.0051020407
  %v5235 = vmul.f32 %v5106, 0.0051020407
  %v5236 = vmul.f32 %v5110, 0.0051020407
  %v5237 = vmul.f32 %v5114, 0.0051020407
  %v5238 = vmul.f32 %v5118, 0.0051020407
  %v5239 = vmul.f32 %v5122, 0.0051020407
  %v5240 = vmul.f32 %v5126, 0.0051020407
  %v5241 = vmul.f32 %v5130, 0.0051020407
  %v5242 = vmul.f32 %v5134, 0.0051020407
  %v5243 = vmul.f32 %v5138, 0.0051020407
  %v5244 = vmul.f32 %v5142, 0.0051020407
  %v5245 = vmul.f32 %v5146, 0.0051020407
  %v5246 = vmul.f32 %v5150, 0.0051020407
  %v5247 = vmul.f32 %v5154, 0.0051020407
  %v5248 = vmul.f32 %v5158, 0.0051020407
  %v5249 = vld [vmem:[%s3] sm:$0xff]
  %v5250 = vld [vmem:[%s3 + $0x8] sm:$0xff]
  %v5251 = vld [vmem:[%s3 + $0x10] sm:$0xff]
  %v5252 = vld [vmem:[%s3 + $0x18] sm:$0xff]
  %v5253 = vld [vmem:[%s3 + $0x20] sm:$0xff]
  %v5254 = vld [vmem:[%s3 + $0x28] sm:$0xff]
  %v5255 = vld [vmem:[%s3 + $0x30] sm:$0xff]
  %v5256 = vld [vmem:[%s3 + $0x38] sm:$0xff]
  %v5257 = vld [vmem:[%s3 + $0x40] sm:$0xff]
  %v5258 = vld [vmem:[%s3 + $0x48] sm:$0xff]
  %v5259 = vld [vmem:[%s3 + $0x50] sm:$0xff]
  %v5260 = vld [vmem:[%s3 + $0x58] sm:$0xff]
  %v5261 = vld [vmem:[%s3 + $0x60] sm:$0xff]
  %v5262 = vld [vmem:[%s3 + $0x68] sm:$0xff]
  %v5263 = vld [vmem:[%s3 + $0x70] sm:$0xff]
  %v5264 = vld [vmem:[%s3 + $0x78] sm:$0xff]
  %v5265 = vld [vmem:[%s3 + $0x80] sm:$0xff]
  %v5266 = vld [vmem:[%s3 + $0x88] sm:$0xff]
  %v5267 = vld [vmem:[%s3 + $0x90] sm:$0xff]
  %v5268 = vld [vmem:[%s3 + $0x98] sm:$0xff]
  %v5269 = vld [vmem:[%s3 + $0xa0] sm:$0xff]
  %v5270 = vld [vmem:[%s3 + $0xa8] sm:$0xff]
  %v5271 = vld [vmem:[%s3 + $0xb0] sm:$0xff]
  %v5272 = vld [vmem:[%s3 + $0xb8] sm:$0xff]
  %v5273 = vld [vmem:[%s3 + $0xc0] sm:$0xff]
  %v5274 = vld [vmem:[%s3 + $0xc8] sm:$0xff]
  %v5275 = vld [vmem:[%s3 + $0xd0] sm:$0xff]
  %v5276 = vld [vmem:[%s3 + $0xd8] sm:$0xff]
  %v5277 = vld [vmem:[%s3 + $0xe0] sm:$0xff]
  %v5278 = vld [vmem:[%s3 + $0xe8] sm:$0xff]
  %v5279 = vld [vmem:[%s3 + $0xf0] sm:$0xff]
  %v5280 = vld [vmem:[%s3 + $0xf8] sm:$0xff]
  %v5281 = vld [vmem:[%s3 + $0x100] sm:$0xff]
  %v5282 = vld [vmem:[%s3 + $0x108] sm:$0xff]
  %v5283 = vld [vmem:[%s3 + $0x110] sm:$0xff]
  %v5284 = vld [vmem:[%s3 + $0x118] sm:$0xff]
  %v5285 = vld [vmem:[%s3 + $0x120] sm:$0xff]
  %v5286 = vld [vmem:[%s3 + $0x128] sm:$0xff]
  %v5287 = vld [vmem:[%s3 + $0x130] sm:$0xff]
  %v5288 = vld [vmem:[%s3 + $0x138] sm:$0xff]
  %v5289 = vld [vmem:[%s3 + $0x140] sm:$0xff]
  %v5290 = vld [vmem:[%s3 + $0x148] sm:$0xff]
  %v5291 = vld [vmem:[%s3 + $0x150] sm:$0xff]
  %v5292 = vld [vmem:[%s3 + $0x158] sm:$0xff]
  %v5293 = vld [vmem:[%s3 + $0x160] sm:$0xff]
  %v5294 = vld [vmem:[%s3 + $0x168] sm:$0xff]
  %v5295 = vld [vmem:[%s3 + $0x170] sm:$0xff]
  %v5296 = vld [vmem:[%s3 + $0x178] sm:$0xff]
  %v5297 = vld [vmem:[%s3 + $0x180] sm:$0xff]
  %v5298 = vld [vmem:[%s3 + $0x188] sm:$0xff]
  %v5299 = vld [vmem:[%s3 + $0x190] sm:$0xff]
  %v5300 = vld [vmem:[%s3 + $0x198] sm:$0xff]
  %v5301 = vld [vmem:[%s3 + $0x1a0] sm:$0xff]
  %v5302 = vld [vmem:[%s3 + $0x1a8] sm:$0xff]
  %v5303 = vld [vmem:[%s3 + $0x1b0] sm:$0xff]
  %v5304 = vld [vmem:[%s3 + $0x1b8] sm:$0xff]
  %v5305 = vld [vmem:[%s3 + $0x1c0] sm:$0xff]
  %v5306 = vld [vmem:[%s3 + $0x1c8] sm:$0xff]
  %v5307 = vld [vmem:[%s3 + $0x1d0] sm:$0xff]
  %v5308 = vld [vmem:[%s3 + $0x1d8] sm:$0xff]
  %v5309 = vld [vmem:[%s3 + $0x1e0] sm:$0xff]
  %v5310 = vld [vmem:[%s3 + $0x1e8] sm:$0xff]
  %v5311 = vld [vmem:[%s3 + $0x1f0] sm:$0xff]
  %v5312 = vld [vmem:[%s3 + $0x1f8] sm:$0xff]
  %v5313 = vld [vmem:[%s3 + $0x200] sm:$0xff]
  %v5314 = vld [vmem:[%s3 + $0x208] sm:$0xff]
  %v5315 = vld [vmem:[%s3 + $0x210] sm:$0xff]
  %v5316 = vld [vmem:[%s3 + $0x218] sm:$0xff]
  %v5317 = vld [vmem:[%s3 + $0x220] sm:$0xff]
  %v5318 = vld [vmem:[%s3 + $0x228] sm:$0xff]
  %v5319 = vld [vmem:[%s3 + $0x230] sm:$0xff]
  %v5320 = vld [vmem:[%s3 + $0x238] sm:$0xff]
  %v5321 = vld [vmem:[%s3 + $0x240] sm:$0xff]
  %v5322 = vld [vmem:[%s3 + $0x248] sm:$0xff]
  %v5323 = vld [vmem:[%s3 + $0x250] sm:$0xff]
  %v5324 = vld [vmem:[%s3 + $0x258] sm:$0xff]
  %v5325 = vld [vmem:[%s3 + $0x260] sm:$0xff]
  %v5326 = vld [vmem:[%s3 + $0x268] sm:$0xff]
  %v5327 = vld [vmem:[%s3 + $0x270] sm:$0xff]
  %v5328 = vld [vmem:[%s3 + $0x278] sm:$0xff]
  %v5329 = vld [vmem:[%s3 + $0x280] sm:$0xff]
  %v5330 = vld [vmem:[%s3 + $0x288] sm:$0xff]
  %v5331 = vld [vmem:[%s3 + $0x290] sm:$0xff]
  %v5332 = vld [vmem:[%s3 + $0x298] sm:$0xff]
  %v5333 = vld [vmem:[%s3 + $0x2a0] sm:$0xff]
  %v5334 = vld [vmem:[%s3 + $0x2a8] sm:$0xff]
  %v5335 = vld [vmem:[%s3 + $0x2b0] sm:$0xff]
  %v5336 = vld [vmem:[%s3 + $0x2b8] sm:$0xff]
  %v5337 = vld [vmem:[%s3 + $0x2c0] sm:$0xff]
  %v5338 = vld [vmem:[%s3 + $0x2c8] sm:$0xff]
  %v5339 = vadd.f32 %v5159, 1e-05
  %v5340 = vadd.f32 %v5160, 1e-05
  %v5341 = vadd.f32 %v5161, 1e-05
  %v5342 = vadd.f32 %v5162, 1e-05
  %v5343 = vadd.f32 %v5163, 1e-05
  %v5344 = vadd.f32 %v5164, 1e-05
  %v5345 = vadd.f32 %v5165, 1e-05
  %v5346 = vadd.f32 %v5166, 1e-05
  %v5347 = vadd.f32 %v5167, 1e-05
  %v5348 = vadd.f32 %v5168, 1e-05
  %v5349 = vadd.f32 %v5169, 1e-05
  %v5350 = vadd.f32 %v5170, 1e-05
  %v5351 = vadd.f32 %v5171, 1e-05
  %v5352 = vadd.f32 %v5172, 1e-05
  %v5353 = vadd.f32 %v5173, 1e-05
  %v5354 = vadd.f32 %v5174, 1e-05
  %v5355 = vadd.f32 %v5175, 1e-05
  %v5356 = vadd.f32 %v5176, 1e-05
  %v5357 = vadd.f32 %v5177, 1e-05
  %v5358 = vadd.f32 %v5178, 1e-05
  %v5359 = vadd.f32 %v5179, 1e-05
  %v5360 = vadd.f32 %v5180, 1e-05
  %v5361 = vadd.f32 %v5181, 1e-05
  %v5362 = vadd.f32 %v5182, 1e-05
  %v5363 = vadd.f32 %v5183, 1e-05
  %v5364 = vadd.f32 %v5184, 1e-05
  %v5365 = vadd.f32 %v5185, 1e-05
  %v5366 = vadd.f32 %v5186, 1e-05
  %v5367 = vadd.f32 %v5187, 1e-05
  %v5368 = vadd.f32 %v5188, 1e-05
  %v5369 = vadd.f32 %v5189, 1e-05
  %v5370 = vadd.f32 %v5190, 1e-05
  %v5371 = vadd.f32 %v5191, 1e-05
  %v5372 = vadd.f32 %v5192, 1e-05
  %v5373 = vadd.f32 %v5193, 1e-05
  %v5374 = vadd.f32 %v5194, 1e-05
  %v5375 = vadd.f32 %v5195, 1e-05
  %v5376 = vadd.f32 %v5196, 1e-05
  %v5377 = vadd.f32 %v5197, 1e-05
  %v5378 = vadd.f32 %v5198, 1e-05
  %v5379 = vadd.f32 %v5199, 1e-05
  %v5380 = vadd.f32 %v5200, 1e-05
  %v5381 = vadd.f32 %v5201, 1e-05
  %v5382 = vadd.f32 %v5202, 1e-05
  %v5383 = vadd.f32 %v5203, 1e-05
  %v5384 = vadd.f32 %v5204, 1e-05
  %v5385 = vadd.f32 %v5205, 1e-05
  %v5386 = vadd.f32 %v5206, 1e-05
  %v5387 = vadd.f32 %v5207, 1e-05
  %v5388 = vadd.f32 %v5208, 1e-05
  %v5389 = vadd.f32 %v5209, 1e-05
  %v5390 = vadd.f32 %v5210, 1e-05
  %v5391 = vadd.f32 %v5211, 1e-05
  %v5392 = vadd.f32 %v5212, 1e-05
  %v5393 = vadd.f32 %v5213, 1e-05
  %v5394 = vadd.f32 %v5214, 1e-05
  %v5395 = vadd.f32 %v5215, 1e-05
  %v5396 = vadd.f32 %v5216, 1e-05
  %v5397 = vadd.f32 %v5217, 1e-05
  %v5398 = vadd.f32 %v5218, 1e-05
  %v5399 = vadd.f32 %v5219, 1e-05
  %v5400 = vadd.f32 %v5220, 1e-05
  %v5401 = vadd.f32 %v5221, 1e-05
  %v5402 = vadd.f32 %v5222, 1e-05
  %v5403 = vadd.f32 %v5223, 1e-05
  %v5404 = vadd.f32 %v5224, 1e-05
  %v5405 = vadd.f32 %v5225, 1e-05
  %v5406 = vadd.f32 %v5226, 1e-05
  %v5407 = vadd.f32 %v5227, 1e-05
  %v5408 = vadd.f32 %v5228, 1e-05
  %v5409 = vadd.f32 %v5229, 1e-05
  %v5410 = vadd.f32 %v5230, 1e-05
  %v5411 = vadd.f32 %v5231, 1e-05
  %v5412 = vadd.f32 %v5232, 1e-05
  %v5413 = vadd.f32 %v5233, 1e-05
  %v5414 = vadd.f32 %v5234, 1e-05
  %v5415 = vadd.f32 %v5235, 1e-05
  %v5416 = vadd.f32 %v5236, 1e-05
  %v5417 = vadd.f32 %v5237, 1e-05
  %v5418 = vadd.f32 %v5238, 1e-05
  %v5419 = vadd.f32 %v5239, 1e-05
  %v5420 = vadd.f32 %v5240, 1e-05
  %v5421 = vadd.f32 %v5241, 1e-05
  %v5422 = vadd.f32 %v5242, 1e-05
  %v5423 = vadd.f32 %v5243, 1e-05
  %v5424 = vadd.f32 %v5244, 1e-05
  %v5425 = vadd.f32 %v5245, 1e-05
  %v5426 = vadd.f32 %v5246, 1e-05
  %v5427 = vadd.f32 %v5247, 1e-05
  %v5428 = vadd.f32 %v5248, 1e-05
  %v5429 = vrsqrt.pop %v5339
  %v5430 = vrsqrt.pop %v5340
  %v5431 = vrsqrt.pop %v5341
  %v5432 = vrsqrt.pop %v5342
  %v5433 = vrsqrt.pop %v5343
  %v5434 = vrsqrt.pop %v5344
  %v5435 = vrsqrt.pop %v5345
  %v5436 = vrsqrt.pop %v5346
  %v5437 = vrsqrt.pop %v5347
  %v5438 = vrsqrt.pop %v5348
  %v5439 = vrsqrt.pop %v5349
  %v5440 = vrsqrt.pop %v5350
  %v5441 = vrsqrt.pop %v5351
  %v5442 = vrsqrt.pop %v5352
  %v5443 = vrsqrt.pop %v5353
  %v5444 = vrsqrt.pop %v5354
  %v5445 = vrsqrt.pop %v5355
  %v5446 = vrsqrt.pop %v5356
  %v5447 = vrsqrt.pop %v5357
  %v5448 = vrsqrt.pop %v5358
  %v5449 = vrsqrt.pop %v5359
  %v5450 = vrsqrt.pop %v5360
  %v5451 = vrsqrt.pop %v5361
  %v5452 = vrsqrt.pop %v5362
  %v5453 = vrsqrt.pop %v5363
  %v5454 = vrsqrt.pop %v5364
  %v5455 = vrsqrt.pop %v5365
  %v5456 = vrsqrt.pop %v5366
  %v5457 = vrsqrt.pop %v5367
  %v5458 = vrsqrt.pop %v5368
  %v5459 = vrsqrt.pop %v5369
  %v5460 = vrsqrt.pop %v5370
  %v5461 = vrsqrt.pop %v5371
  %v5462 = vrsqrt.pop %v5372
  %v5463 = vrsqrt.pop %v5373
  %v5464 = vrsqrt.pop %v5374
  %v5465 = vrsqrt.pop %v5375
  %v5466 = vrsqrt.pop %v5376
  %v5467 = vrsqrt.pop %v5377
  %v5468 = vrsqrt.pop %v5378
  %v5469 = vrsqrt.pop %v5379
  %v5470 = vrsqrt.pop %v5380
  %v5471 = vrsqrt.pop %v5381
  %v5472 = vrsqrt.pop %v5382
  %v5473 = vrsqrt.pop %v5383
  %v5474 = vrsqrt.pop %v5384
  %v5475 = vrsqrt.pop %v5385
  %v5476 = vrsqrt.pop %v5386
  %v5477 = vrsqrt.pop %v5387
  %v5478 = vrsqrt.pop %v5388
  %v5479 = vrsqrt.pop %v5389
  %v5480 = vrsqrt.pop %v5390
  %v5481 = vrsqrt.pop %v5391
  %v5482 = vrsqrt.pop %v5392
  %v5483 = vrsqrt.pop %v5393
  %v5484 = vrsqrt.pop %v5394
  %v5485 = vrsqrt.pop %v5395
  %v5486 = vrsqrt.pop %v5396
  %v5487 = vrsqrt.pop %v5397
  %v5488 = vrsqrt.pop %v5398
  %v5489 = vrsqrt.pop %v5399
  %v5490 = vrsqrt.pop %v5400
  %v5491 = vrsqrt.pop %v5401
  %v5492 = vrsqrt.pop %v5402
  %v5493 = vrsqrt.pop %v5403
  %v5494 = vrsqrt.pop %v5404
  %v5495 = vrsqrt.pop %v5405
  %v5496 = vrsqrt.pop %v5406
  %v5497 = vrsqrt.pop %v5407
  %v5498 = vrsqrt.pop %v5408
  %v5499 = vrsqrt.pop %v5409
  %v5500 = vrsqrt.pop %v5410
  %v5501 = vrsqrt.pop %v5411
  %v5502 = vrsqrt.pop %v5412
  %v5503 = vrsqrt.pop %v5413
  %v5504 = vrsqrt.pop %v5414
  %v5505 = vrsqrt.pop %v5415
  %v5506 = vrsqrt.pop %v5416
  %v5507 = vrsqrt.pop %v5417
  %v5508 = vrsqrt.pop %v5418
  %v5509 = vrsqrt.pop %v5419
  %v5510 = vrsqrt.pop %v5420
  %v5511 = vrsqrt.pop %v5421
  %v5512 = vrsqrt.pop %v5422
  %v5513 = vrsqrt.pop %v5423
  %v5514 = vrsqrt.pop %v5424
  %v5515 = vrsqrt.pop %v5425
  %v5516 = vrsqrt.pop %v5426
  %v5517 = vrsqrt.pop %v5427
  %v5518 = vrsqrt.pop %v5428
  %v5519 = vmul.f32 %v5249, %v5429
  %v5520 = vmul.f32 %v5250, %v5430
  %v5521 = vmul.f32 %v5251, %v5431
  %v5522 = vmul.f32 %v5252, %v5432
  %v5523 = vmul.f32 %v5253, %v5433
  %v5524 = vmul.f32 %v5254, %v5434
  %v5525 = vmul.f32 %v5255, %v5435
  %v5526 = vmul.f32 %v5256, %v5436
  %v5527 = vmul.f32 %v5257, %v5437
  %v5528 = vmul.f32 %v5258, %v5438
  %v5529 = vmul.f32 %v5259, %v5439
  %v5530 = vmul.f32 %v5260, %v5440
  %v5531 = vmul.f32 %v5261, %v5441
  %v5532 = vmul.f32 %v5262, %v5442
  %v5533 = vmul.f32 %v5263, %v5443
  %v5534 = vmul.f32 %v5264, %v5444
  %v5535 = vmul.f32 %v5265, %v5445
  %v5536 = vmul.f32 %v5266, %v5446
  %v5537 = vmul.f32 %v5267, %v5447
  %v5538 = vmul.f32 %v5268, %v5448
  %v5539 = vmul.f32 %v5269, %v5449
  %v5540 = vmul.f32 %v5270, %v5450
  %v5541 = vmul.f32 %v5271, %v5451
  %v5542 = vmul.f32 %v5272, %v5452
  %v5543 = vmul.f32 %v5273, %v5453
  %v5544 = vmul.f32 %v5274, %v5454
  %v5545 = vmul.f32 %v5275, %v5455
  %v5546 = vmul.f32 %v5276, %v5456
  %v5547 = vmul.f32 %v5277, %v5457
  %v5548 = vmul.f32 %v5278, %v5458
  %v5549 = vmul.f32 %v5279, %v5459
  %v5550 = vmul.f32 %v5280, %v5460
  %v5551 = vmul.f32 %v5281, %v5461
  %v5552 = vmul.f32 %v5282, %v5462
  %v5553 = vmul.f32 %v5283, %v5463
  %v5554 = vmul.f32 %v5284, %v5464
  %v5555 = vmul.f32 %v5285, %v5465
  %v5556 = vmul.f32 %v5286, %v5466
  %v5557 = vmul.f32 %v5287, %v5467
  %v5558 = vmul.f32 %v5288, %v5468
  %v5559 = vmul.f32 %v5289, %v5469
  %v5560 = vmul.f32 %v5290, %v5470
  %v5561 = vmul.f32 %v5291, %v5471
  %v5562 = vmul.f32 %v5292, %v5472
  %v5563 = vmul.f32 %v5293, %v5473
  %v5564 = vmul.f32 %v5294, %v5474
  %v5565 = vmul.f32 %v5295, %v5475
  %v5566 = vmul.f32 %v5296, %v5476
  %v5567 = vmul.f32 %v5297, %v5477
  %v5568 = vmul.f32 %v5298, %v5478
  %v5569 = vmul.f32 %v5299, %v5479
  %v5570 = vmul.f32 %v5300, %v5480
  %v5571 = vmul.f32 %v5301, %v5481
  %v5572 = vmul.f32 %v5302, %v5482
  %v5573 = vmul.f32 %v5303, %v5483
  %v5574 = vmul.f32 %v5304, %v5484
  %v5575 = vmul.f32 %v5305, %v5485
  %v5576 = vmul.f32 %v5306, %v5486
  %v5577 = vmul.f32 %v5307, %v5487
  %v5578 = vmul.f32 %v5308, %v5488
  %v5579 = vmul.f32 %v5309, %v5489
  %v5580 = vmul.f32 %v5310, %v5490
  %v5581 = vmul.f32 %v5311, %v5491
  %v5582 = vmul.f32 %v5312, %v5492
  %v5583 = vmul.f32 %v5313, %v5493
  %v5584 = vmul.f32 %v5314, %v5494
  %v5585 = vmul.f32 %v5315, %v5495
  %v5586 = vmul.f32 %v5316, %v5496
  %v5587 = vmul.f32 %v5317, %v5497
  %v5588 = vmul.f32 %v5318, %v5498
  %v5589 = vmul.f32 %v5319, %v5499
  %v5590 = vmul.f32 %v5320, %v5500
  %v5591 = vmul.f32 %v5321, %v5501
  %v5592 = vmul.f32 %v5322, %v5502
  %v5593 = vmul.f32 %v5323, %v5503
  %v5594 = vmul.f32 %v5324, %v5504
  %v5595 = vmul.f32 %v5325, %v5505
  %v5596 = vmul.f32 %v5326, %v5506
  %v5597 = vmul.f32 %v5327, %v5507
  %v5598 = vmul.f32 %v5328, %v5508
  %v5599 = vmul.f32 %v5329, %v5509
  %v5600 = vmul.f32 %v5330, %v5510
  %v5601 = vmul.f32 %v5331, %v5511
  %v5602 = vmul.f32 %v5332, %v5512
  %v5603 = vmul.f32 %v5333, %v5513
  %v5604 = vmul.f32 %v5334, %v5514
  %v5605 = vmul.f32 %v5335, %v5515
  %v5606 = vmul.f32 %v5336, %v5516
  %v5607 = vmul.f32 %v5337, %v5517
  %v5608 = vmul.f32 %v5338, %v5518
  %5610 = vset.pattern.permute.xlu0 0
  %5611 = vperm.xlu0 %5610, %v5519
  %v5612 = vpop.permute.xlu0 %5611
  %5615 = vset.pattern.permute.xlu0 0
  %5616 = vperm.xlu0 %5615, %v5520
  %v5617 = vpop.permute.xlu0 %5616
  %5620 = vset.pattern.permute.xlu0 0
  %5621 = vperm.xlu0 %5620, %v5521
  %v5622 = vpop.permute.xlu0 %5621
  %5625 = vset.pattern.permute.xlu0 0
  %5626 = vperm.xlu0 %5625, %v5522
  %v5627 = vpop.permute.xlu0 %5626
  %5630 = vset.pattern.permute.xlu0 0
  %5631 = vperm.xlu0 %5630, %v5523
  %v5632 = vpop.permute.xlu0 %5631
  %5635 = vset.pattern.permute.xlu0 0
  %5636 = vperm.xlu0 %5635, %v5524
  %v5637 = vpop.permute.xlu0 %5636
  %5640 = vset.pattern.permute.xlu0 0
  %5641 = vperm.xlu0 %5640, %v5525
  %v5642 = vpop.permute.xlu0 %5641
  %5645 = vset.pattern.permute.xlu0 0
  %5646 = vperm.xlu0 %5645, %v5526
  %v5647 = vpop.permute.xlu0 %5646
  %5650 = vset.pattern.permute.xlu0 0
  %5651 = vperm.xlu0 %5650, %v5527
  %v5652 = vpop.permute.xlu0 %5651
  %5655 = vset.pattern.permute.xlu0 0
  %5656 = vperm.xlu0 %5655, %v5528
  %v5657 = vpop.permute.xlu0 %5656
  %5660 = vset.pattern.permute.xlu0 0
  %5661 = vperm.xlu0 %5660, %v5529
  %v5662 = vpop.permute.xlu0 %5661
  %5665 = vset.pattern.permute.xlu0 0
  %5666 = vperm.xlu0 %5665, %v5530
  %v5667 = vpop.permute.xlu0 %5666
  %5670 = vset.pattern.permute.xlu0 0
  %5671 = vperm.xlu0 %5670, %v5531
  %v5672 = vpop.permute.xlu0 %5671
  %5675 = vset.pattern.permute.xlu0 0
  %5676 = vperm.xlu0 %5675, %v5532
  %v5677 = vpop.permute.xlu0 %5676
  %5680 = vset.pattern.permute.xlu0 0
  %5681 = vperm.xlu0 %5680, %v5533
  %v5682 = vpop.permute.xlu0 %5681
  %5685 = vset.pattern.permute.xlu0 0
  %5686 = vperm.xlu0 %5685, %v5534
  %v5687 = vpop.permute.xlu0 %5686
  %5690 = vset.pattern.permute.xlu0 0
  %5691 = vperm.xlu0 %5690, %v5535
  %v5692 = vpop.permute.xlu0 %5691
  %5695 = vset.pattern.permute.xlu0 0
  %5696 = vperm.xlu0 %5695, %v5536
  %v5697 = vpop.permute.xlu0 %5696
  %5700 = vset.pattern.permute.xlu0 0
  %5701 = vperm.xlu0 %5700, %v5537
  %v5702 = vpop.permute.xlu0 %5701
  %5705 = vset.pattern.permute.xlu0 0
  %5706 = vperm.xlu0 %5705, %v5538
  %v5707 = vpop.permute.xlu0 %5706
  %5710 = vset.pattern.permute.xlu0 0
  %5711 = vperm.xlu0 %5710, %v5539
  %v5712 = vpop.permute.xlu0 %5711
  %5715 = vset.pattern.permute.xlu0 0
  %5716 = vperm.xlu0 %5715, %v5540
  %v5717 = vpop.permute.xlu0 %5716
  %5720 = vset.pattern.permute.xlu0 0
  %5721 = vperm.xlu0 %5720, %v5541
  %v5722 = vpop.permute.xlu0 %5721
  %5725 = vset.pattern.permute.xlu0 0
  %5726 = vperm.xlu0 %5725, %v5542
  %v5727 = vpop.permute.xlu0 %5726
  %5730 = vset.pattern.permute.xlu0 0
  %5731 = vperm.xlu0 %5730, %v5543
  %v5732 = vpop.permute.xlu0 %5731
  %5735 = vset.pattern.permute.xlu0 0
  %5736 = vperm.xlu0 %5735, %v5544
  %v5737 = vpop.permute.xlu0 %5736
  %5740 = vset.pattern.permute.xlu0 0
  %5741 = vperm.xlu0 %5740, %v5545
  %v5742 = vpop.permute.xlu0 %5741
  %5745 = vset.pattern.permute.xlu0 0
  %5746 = vperm.xlu0 %5745, %v5546
  %v5747 = vpop.permute.xlu0 %5746
  %5750 = vset.pattern.permute.xlu0 0
  %5751 = vperm.xlu0 %5750, %v5547
  %v5752 = vpop.permute.xlu0 %5751
  %5755 = vset.pattern.permute.xlu0 0
  %5756 = vperm.xlu0 %5755, %v5548
  %v5757 = vpop.permute.xlu0 %5756
  %5760 = vset.pattern.permute.xlu0 0
  %5761 = vperm.xlu0 %5760, %v5549
  %v5762 = vpop.permute.xlu0 %5761
  %5765 = vset.pattern.permute.xlu0 0
  %5766 = vperm.xlu0 %5765, %v5550
  %v5767 = vpop.permute.xlu0 %5766
  %5770 = vset.pattern.permute.xlu0 0
  %5771 = vperm.xlu0 %5770, %v5551
  %v5772 = vpop.permute.xlu0 %5771
  %5775 = vset.pattern.permute.xlu0 0
  %5776 = vperm.xlu0 %5775, %v5552
  %v5777 = vpop.permute.xlu0 %5776
  %5780 = vset.pattern.permute.xlu0 0
  %5781 = vperm.xlu0 %5780, %v5553
  %v5782 = vpop.permute.xlu0 %5781
  %5785 = vset.pattern.permute.xlu0 0
  %5786 = vperm.xlu0 %5785, %v5554
  %v5787 = vpop.permute.xlu0 %5786
  %5790 = vset.pattern.permute.xlu0 0
  %5791 = vperm.xlu0 %5790, %v5555
  %v5792 = vpop.permute.xlu0 %5791
  %5795 = vset.pattern.permute.xlu0 0
  %5796 = vperm.xlu0 %5795, %v5556
  %v5797 = vpop.permute.xlu0 %5796
  %5800 = vset.pattern.permute.xlu0 0
  %5801 = vperm.xlu0 %5800, %v5557
  %v5802 = vpop.permute.xlu0 %5801
  %5805 = vset.pattern.permute.xlu0 0
  %5806 = vperm.xlu0 %5805, %v5558
  %v5807 = vpop.permute.xlu0 %5806
  %5810 = vset.pattern.permute.xlu0 0
  %5811 = vperm.xlu0 %5810, %v5559
  %v5812 = vpop.permute.xlu0 %5811
  %5815 = vset.pattern.permute.xlu0 0
  %5816 = vperm.xlu0 %5815, %v5560
  %v5817 = vpop.permute.xlu0 %5816
  %5820 = vset.pattern.permute.xlu0 0
  %5821 = vperm.xlu0 %5820, %v5561
  %v5822 = vpop.permute.xlu0 %5821
  %5825 = vset.pattern.permute.xlu0 0
  %5826 = vperm.xlu0 %5825, %v5562
  %v5827 = vpop.permute.xlu0 %5826
  %5830 = vset.pattern.permute.xlu0 0
  %5831 = vperm.xlu0 %5830, %v5563
  %v5832 = vpop.permute.xlu0 %5831
  %5835 = vset.pattern.permute.xlu0 0
  %5836 = vperm.xlu0 %5835, %v5564
  %v5837 = vpop.permute.xlu0 %5836
  %5840 = vset.pattern.permute.xlu0 0
  %5841 = vperm.xlu0 %5840, %v5565
  %v5842 = vpop.permute.xlu0 %5841
  %5845 = vset.pattern.permute.xlu0 0
  %5846 = vperm.xlu0 %5845, %v5566
  %v5847 = vpop.permute.xlu0 %5846
  %5850 = vset.pattern.permute.xlu0 0
  %5851 = vperm.xlu0 %5850, %v5567
  %v5852 = vpop.permute.xlu0 %5851
  %5855 = vset.pattern.permute.xlu0 0
  %5856 = vperm.xlu0 %5855, %v5568
  %v5857 = vpop.permute.xlu0 %5856
  %5860 = vset.pattern.permute.xlu0 0
  %5861 = vperm.xlu0 %5860, %v5569
  %v5862 = vpop.permute.xlu0 %5861
  %5865 = vset.pattern.permute.xlu0 0
  %5866 = vperm.xlu0 %5865, %v5570
  %v5867 = vpop.permute.xlu0 %5866
  %5870 = vset.pattern.permute.xlu0 0
  %5871 = vperm.xlu0 %5870, %v5571
  %v5872 = vpop.permute.xlu0 %5871
  %5875 = vset.pattern.permute.xlu0 0
  %5876 = vperm.xlu0 %5875, %v5572
  %v5877 = vpop.permute.xlu0 %5876
  %5880 = vset.pattern.permute.xlu0 0
  %5881 = vperm.xlu0 %5880, %v5573
  %v5882 = vpop.permute.xlu0 %5881
  %5885 = vset.pattern.permute.xlu0 0
  %5886 = vperm.xlu0 %5885, %v5574
  %v5887 = vpop.permute.xlu0 %5886
  %5890 = vset.pattern.permute.xlu0 0
  %5891 = vperm.xlu0 %5890, %v5575
  %v5892 = vpop.permute.xlu0 %5891
  %5895 = vset.pattern.permute.xlu0 0
  %5896 = vperm.xlu0 %5895, %v5576
  %v5897 = vpop.permute.xlu0 %5896
  %5900 = vset.pattern.permute.xlu0 0
  %5901 = vperm.xlu0 %5900, %v5577
  %v5902 = vpop.permute.xlu0 %5901
  %5905 = vset.pattern.permute.xlu0 0
  %5906 = vperm.xlu0 %5905, %v5578
  %v5907 = vpop.permute.xlu0 %5906
  %5910 = vset.pattern.permute.xlu0 0
  %5911 = vperm.xlu0 %5910, %v5579
  %v5912 = vpop.permute.xlu0 %5911
  %5915 = vset.pattern.permute.xlu0 0
  %5916 = vperm.xlu0 %5915, %v5580
  %v5917 = vpop.permute.xlu0 %5916
  %5920 = vset.pattern.permute.xlu0 0
  %5921 = vperm.xlu0 %5920, %v5581
  %v5922 = vpop.permute.xlu0 %5921
  %5925 = vset.pattern.permute.xlu0 0
  %5926 = vperm.xlu0 %5925, %v5582
  %v5927 = vpop.permute.xlu0 %5926
  %5930 = vset.pattern.permute.xlu0 0
  %5931 = vperm.xlu0 %5930, %v5583
  %v5932 = vpop.permute.xlu0 %5931
  %5935 = vset.pattern.permute.xlu0 0
  %5936 = vperm.xlu0 %5935, %v5584
  %v5937 = vpop.permute.xlu0 %5936
  %5940 = vset.pattern.permute.xlu0 0
  %5941 = vperm.xlu0 %5940, %v5585
  %v5942 = vpop.permute.xlu0 %5941
  %5945 = vset.pattern.permute.xlu0 0
  %5946 = vperm.xlu0 %5945, %v5586
  %v5947 = vpop.permute.xlu0 %5946
  %5950 = vset.pattern.permute.xlu0 0
  %5951 = vperm.xlu0 %5950, %v5587
  %v5952 = vpop.permute.xlu0 %5951
  %5955 = vset.pattern.permute.xlu0 0
  %5956 = vperm.xlu0 %5955, %v5588
  %v5957 = vpop.permute.xlu0 %5956
  %5960 = vset.pattern.permute.xlu0 0
  %5961 = vperm.xlu0 %5960, %v5589
  %v5962 = vpop.permute.xlu0 %5961
  %5965 = vset.pattern.permute.xlu0 0
  %5966 = vperm.xlu0 %5965, %v5590
  %v5967 = vpop.permute.xlu0 %5966
  %5970 = vset.pattern.permute.xlu0 0
  %5971 = vperm.xlu0 %5970, %v5591
  %v5972 = vpop.permute.xlu0 %5971
  %5975 = vset.pattern.permute.xlu0 0
  %5976 = vperm.xlu0 %5975, %v5592
  %v5977 = vpop.permute.xlu0 %5976
  %5980 = vset.pattern.permute.xlu0 0
  %5981 = vperm.xlu0 %5980, %v5593
  %v5982 = vpop.permute.xlu0 %5981
  %5985 = vset.pattern.permute.xlu0 0
  %5986 = vperm.xlu0 %5985, %v5594
  %v5987 = vpop.permute.xlu0 %5986
  %5990 = vset.pattern.permute.xlu0 0
  %5991 = vperm.xlu0 %5990, %v5595
  %v5992 = vpop.permute.xlu0 %5991
  %5995 = vset.pattern.permute.xlu0 0
  %5996 = vperm.xlu0 %5995, %v5596
  %v5997 = vpop.permute.xlu0 %5996
  %6000 = vset.pattern.permute.xlu0 0
  %6001 = vperm.xlu0 %6000, %v5597
  %v6002 = vpop.permute.xlu0 %6001
  %6005 = vset.pattern.permute.xlu0 0
  %6006 = vperm.xlu0 %6005, %v5598
  %v6007 = vpop.permute.xlu0 %6006
  %6010 = vset.pattern.permute.xlu0 0
  %6011 = vperm.xlu0 %6010, %v5599
  %v6012 = vpop.permute.xlu0 %6011
  %6015 = vset.pattern.permute.xlu0 0
  %6016 = vperm.xlu0 %6015, %v5600
  %v6017 = vpop.permute.xlu0 %6016
  %6020 = vset.pattern.permute.xlu0 0
  %6021 = vperm.xlu0 %6020, %v5601
  %v6022 = vpop.permute.xlu0 %6021
  %6025 = vset.pattern.permute.xlu0 0
  %6026 = vperm.xlu0 %6025, %v5602
  %v6027 = vpop.permute.xlu0 %6026
  %6030 = vset.pattern.permute.xlu0 0
  %6031 = vperm.xlu0 %6030, %v5603
  %v6032 = vpop.permute.xlu0 %6031
  %6035 = vset.pattern.permute.xlu0 0
  %6036 = vperm.xlu0 %6035, %v5604
  %v6037 = vpop.permute.xlu0 %6036
  %6040 = vset.pattern.permute.xlu0 0
  %6041 = vperm.xlu0 %6040, %v5605
  %v6042 = vpop.permute.xlu0 %6041
  %6045 = vset.pattern.permute.xlu0 0
  %6046 = vperm.xlu0 %6045, %v5606
  %v6047 = vpop.permute.xlu0 %6046
  %6050 = vset.pattern.permute.xlu0 0
  %6051 = vperm.xlu0 %6050, %v5607
  %v6052 = vpop.permute.xlu0 %6051
  %6055 = vset.pattern.permute.xlu0 0
  %6056 = vperm.xlu0 %6055, %v5608
  %v6057 = vpop.permute.xlu0 %6056
  %v6059 = vmul.f32 %v4439, %v5612
  %v6060 = vmul.f32 %v4440, %v5612
  %v6061 = vmul.f32 %v4441, %v5617
  %v6062 = vmul.f32 %v4442, %v5617
  %v6063 = vmul.f32 %v4443, %v5622
  %v6064 = vmul.f32 %v4444, %v5622
  %v6065 = vmul.f32 %v4445, %v5627
  %v6066 = vmul.f32 %v4446, %v5627
  %v6067 = vmul.f32 %v4447, %v5632
  %v6068 = vmul.f32 %v4448, %v5632
  %v6069 = vmul.f32 %v4449, %v5637
  %v6070 = vmul.f32 %v4450, %v5637
  %v6071 = vmul.f32 %v4451, %v5642
  %v6072 = vmul.f32 %v4452, %v5642
  %v6073 = vmul.f32 %v4453, %v5647
  %v6074 = vmul.f32 %v4454, %v5647
  %v6075 = vmul.f32 %v4455, %v5652
  %v6076 = vmul.f32 %v4456, %v5652
  %v6077 = vmul.f32 %v4457, %v5657
  %v6078 = vmul.f32 %v4458, %v5657
  %v6079 = vmul.f32 %v4459, %v5662
  %v6080 = vmul.f32 %v4460, %v5662
  %v6081 = vmul.f32 %v4461, %v5667
  %v6082 = vmul.f32 %v4462, %v5667
  %v6083 = vmul.f32 %v4463, %v5672
  %v6084 = vmul.f32 %v4464, %v5672
  %v6085 = vmul.f32 %v4465, %v5677
  %v6086 = vmul.f32 %v4466, %v5677
  %v6087 = vmul.f32 %v4467, %v5682
  %v6088 = vmul.f32 %v4468, %v5682
  %v6089 = vmul.f32 %v4469, %v5687
  %v6090 = vmul.f32 %v4470, %v5687
  %v6091 = vmul.f32 %v4471, %v5692
  %v6092 = vmul.f32 %v4472, %v5692
  %v6093 = vmul.f32 %v4473, %v5697
  %v6094 = vmul.f32 %v4474, %v5697
  %v6095 = vmul.f32 %v4475, %v5702
  %v6096 = vmul.f32 %v4476, %v5702
  %v6097 = vmul.f32 %v4477, %v5707
  %v6098 = vmul.f32 %v4478, %v5707
  %v6099 = vmul.f32 %v4479, %v5712
  %v6100 = vmul.f32 %v4480, %v5712
  %v6101 = vmul.f32 %v4481, %v5717
  %v6102 = vmul.f32 %v4482, %v5717
  %v6103 = vmul.f32 %v4483, %v5722
  %v6104 = vmul.f32 %v4484, %v5722
  %v6105 = vmul.f32 %v4485, %v5727
  %v6106 = vmul.f32 %v4486, %v5727
  %v6107 = vmul.f32 %v4487, %v5732
  %v6108 = vmul.f32 %v4488, %v5732
  %v6109 = vmul.f32 %v4489, %v5737
  %v6110 = vmul.f32 %v4490, %v5737
  %v6111 = vmul.f32 %v4491, %v5742
  %v6112 = vmul.f32 %v4492, %v5742
  %v6113 = vmul.f32 %v4493, %v5747
  %v6114 = vmul.f32 %v4494, %v5747
  %v6115 = vmul.f32 %v4495, %v5752
  %v6116 = vmul.f32 %v4496, %v5752
  %v6117 = vmul.f32 %v4497, %v5757
  %v6118 = vmul.f32 %v4498, %v5757
  %v6119 = vmul.f32 %v4499, %v5762
  %v6120 = vmul.f32 %v4500, %v5762
  %v6121 = vmul.f32 %v4501, %v5767
  %v6122 = vmul.f32 %v4502, %v5767
  %v6123 = vmul.f32 %v4503, %v5772
  %v6124 = vmul.f32 %v4504, %v5772
  %v6125 = vmul.f32 %v4505, %v5777
  %v6126 = vmul.f32 %v4506, %v5777
  %v6127 = vmul.f32 %v4507, %v5782
  %v6128 = vmul.f32 %v4508, %v5782
  %v6129 = vmul.f32 %v4509, %v5787
  %v6130 = vmul.f32 %v4510, %v5787
  %v6131 = vmul.f32 %v4511, %v5792
  %v6132 = vmul.f32 %v4512, %v5792
  %v6133 = vmul.f32 %v4513, %v5797
  %v6134 = vmul.f32 %v4514, %v5797
  %v6135 = vmul.f32 %v4515, %v5802
  %v6136 = vmul.f32 %v4516, %v5802
  %v6137 = vmul.f32 %v4517, %v5807
  %v6138 = vmul.f32 %v4518, %v5807
  %v6139 = vmul.f32 %v4519, %v5812
  %v6140 = vmul.f32 %v4520, %v5812
  %v6141 = vmul.f32 %v4521, %v5817
  %v6142 = vmul.f32 %v4522, %v5817
  %v6143 = vmul.f32 %v4523, %v5822
  %v6144 = vmul.f32 %v4524, %v5822
  %v6145 = vmul.f32 %v4525, %v5827
  %v6146 = vmul.f32 %v4526, %v5827
  %v6147 = vmul.f32 %v4527, %v5832
  %v6148 = vmul.f32 %v4528, %v5832
  %v6149 = vmul.f32 %v4529, %v5837
  %v6150 = vmul.f32 %v4530, %v5837
  %v6151 = vmul.f32 %v4531, %v5842
  %v6152 = vmul.f32 %v4532, %v5842
  %v6153 = vmul.f32 %v4533, %v5847
  %v6154 = vmul.f32 %v4534, %v5847
  %v6155 = vmul.f32 %v4535, %v5852
  %v6156 = vmul.f32 %v4536, %v5852
  %v6157 = vmul.f32 %v4537, %v5857
  %v6158 = vmul.f32 %v4538, %v5857
  %v6159 = vmul.f32 %v4539, %v5862
  %v6160 = vmul.f32 %v4540, %v5862
  %v6161 = vmul.f32 %v4541, %v5867
  %v6162 = vmul.f32 %v4542, %v5867
  %v6163 = vmul.f32 %v4543, %v5872
  %v6164 = vmul.f32 %v4544, %v5872
  %v6165 = vmul.f32 %v4545, %v5877
  %v6166 = vmul.f32 %v4546, %v5877
  %v6167 = vmul.f32 %v4547, %v5882
  %v6168 = vmul.f32 %v4548, %v5882
  %v6169 = vmul.f32 %v4549, %v5887
  %v6170 = vmul.f32 %v4550, %v5887
  %v6171 = vmul.f32 %v4551, %v5892
  %v6172 = vmul.f32 %v4552, %v5892
  %v6173 = vmul.f32 %v4553, %v5897
  %v6174 = vmul.f32 %v4554, %v5897
  %v6175 = vmul.f32 %v4555, %v5902
  %v6176 = vmul.f32 %v4556, %v5902
  %v6177 = vmul.f32 %v4557, %v5907
  %v6178 = vmul.f32 %v4558, %v5907
  %v6179 = vmul.f32 %v4559, %v5912
  %v6180 = vmul.f32 %v4560, %v5912
  %v6181 = vmul.f32 %v4561, %v5917
  %v6182 = vmul.f32 %v4562, %v5917
  %v6183 = vmul.f32 %v4563, %v5922
  %v6184 = vmul.f32 %v4564, %v5922
  %v6185 = vmul.f32 %v4565, %v5927
  %v6186 = vmul.f32 %v4566, %v5927
  %v6187 = vmul.f32 %v4567, %v5932
  %v6188 = vmul.f32 %v4568, %v5932
  %v6189 = vmul.f32 %v4569, %v5937
  %v6190 = vmul.f32 %v4570, %v5937
  %v6191 = vmul.f32 %v4571, %v5942
  %v6192 = vmul.f32 %v4572, %v5942
  %v6193 = vmul.f32 %v4573, %v5947
  %v6194 = vmul.f32 %v4574, %v5947
  %v6195 = vmul.f32 %v4575, %v5952
  %v6196 = vmul.f32 %v4576, %v5952
  %v6197 = vmul.f32 %v4577, %v5957
  %v6198 = vmul.f32 %v4578, %v5957
  %v6199 = vmul.f32 %v4579, %v5962
  %v6200 = vmul.f32 %v4580, %v5962
  %v6201 = vmul.f32 %v4581, %v5967
  %v6202 = vmul.f32 %v4582, %v5967
  %v6203 = vmul.f32 %v4583, %v5972
  %v6204 = vmul.f32 %v4584, %v5972
  %v6205 = vmul.f32 %v4585, %v5977
  %v6206 = vmul.f32 %v4586, %v5977
  %v6207 = vmul.f32 %v4587, %v5982
  %v6208 = vmul.f32 %v4588, %v5982
  %v6209 = vmul.f32 %v4589, %v5987
  %v6210 = vmul.f32 %v4590, %v5987
  %v6211 = vmul.f32 %v4591, %v5992
  %v6212 = vmul.f32 %v4592, %v5992
  %v6213 = vmul.f32 %v4593, %v5997
  %v6214 = vmul.f32 %v4594, %v5997
  %v6215 = vmul.f32 %v4595, %v6002
  %v6216 = vmul.f32 %v4596, %v6002
  %v6217 = vmul.f32 %v4597, %v6007
  %v6218 = vmul.f32 %v4598, %v6007
  %v6219 = vmul.f32 %v4599, %v6012
  %v6220 = vmul.f32 %v4600, %v6012
  %v6221 = vmul.f32 %v4601, %v6017
  %v6222 = vmul.f32 %v4602, %v6017
  %v6223 = vmul.f32 %v4603, %v6022
  %v6224 = vmul.f32 %v4604, %v6022
  %v6225 = vmul.f32 %v4605, %v6027
  %v6226 = vmul.f32 %v4606, %v6027
  %v6227 = vmul.f32 %v4607, %v6032
  %v6228 = vmul.f32 %v4608, %v6032
  %v6229 = vmul.f32 %v4609, %v6037
  %v6230 = vmul.f32 %v4610, %v6037
  %v6231 = vmul.f32 %v4611, %v6042
  %v6232 = vmul.f32 %v4612, %v6042
  %v6233 = vmul.f32 %v4613, %v6047
  %v6234 = vmul.f32 %v4614, %v6047
  %v6235 = vmul.f32 %v4615, %v6052
  %v6236 = vmul.f32 %v4616, %v6052
  %v6237 = vmul.f32 %v4617, %v6057
  %v6238 = vmul.f32 %v4618, %v6057
  %6240 = vset.pattern.permute.xlu0 1
  %6241 = vperm.xlu0 %6240, %v5249
  %v6242 = vpop.permute.xlu0 %6241
  %6245 = vset.pattern.permute.xlu0 1
  %6246 = vperm.xlu0 %6245, %v5250
  %v6247 = vpop.permute.xlu0 %6246
  %6250 = vset.pattern.permute.xlu0 1
  %6251 = vperm.xlu0 %6250, %v5251
  %v6252 = vpop.permute.xlu0 %6251
  %6255 = vset.pattern.permute.xlu0 1
  %6256 = vperm.xlu0 %6255, %v5252
  %v6257 = vpop.permute.xlu0 %6256
  %6260 = vset.pattern.permute.xlu0 1
  %6261 = vperm.xlu0 %6260, %v5253
  %v6262 = vpop.permute.xlu0 %6261
  %6265 = vset.pattern.permute.xlu0 1
  %6266 = vperm.xlu0 %6265, %v5254
  %v6267 = vpop.permute.xlu0 %6266
  %6270 = vset.pattern.permute.xlu0 1
  %6271 = vperm.xlu0 %6270, %v5255
  %v6272 = vpop.permute.xlu0 %6271
  %6275 = vset.pattern.permute.xlu0 1
  %6276 = vperm.xlu0 %6275, %v5256
  %v6277 = vpop.permute.xlu0 %6276
  %6280 = vset.pattern.permute.xlu0 1
  %6281 = vperm.xlu0 %6280, %v5257
  %v6282 = vpop.permute.xlu0 %6281
  %6285 = vset.pattern.permute.xlu0 1
  %6286 = vperm.xlu0 %6285, %v5258
  %v6287 = vpop.permute.xlu0 %6286
  %6290 = vset.pattern.permute.xlu0 1
  %6291 = vperm.xlu0 %6290, %v5259
  %v6292 = vpop.permute.xlu0 %6291
  %6295 = vset.pattern.permute.xlu0 1
  %6296 = vperm.xlu0 %6295, %v5260
  %v6297 = vpop.permute.xlu0 %6296
  %6300 = vset.pattern.permute.xlu0 1
  %6301 = vperm.xlu0 %6300, %v5261
  %v6302 = vpop.permute.xlu0 %6301
  %6305 = vset.pattern.permute.xlu0 1
  %6306 = vperm.xlu0 %6305, %v5262
  %v6307 = vpop.permute.xlu0 %6306
  %6310 = vset.pattern.permute.xlu0 1
  %6311 = vperm.xlu0 %6310, %v5263
  %v6312 = vpop.permute.xlu0 %6311
  %6315 = vset.pattern.permute.xlu0 1
  %6316 = vperm.xlu0 %6315, %v5264
  %v6317 = vpop.permute.xlu0 %6316
  %6320 = vset.pattern.permute.xlu0 1
  %6321 = vperm.xlu0 %6320, %v5265
  %v6322 = vpop.permute.xlu0 %6321
  %6325 = vset.pattern.permute.xlu0 1
  %6326 = vperm.xlu0 %6325, %v5266
  %v6327 = vpop.permute.xlu0 %6326
  %6330 = vset.pattern.permute.xlu0 1
  %6331 = vperm.xlu0 %6330, %v5267
  %v6332 = vpop.permute.xlu0 %6331
  %6335 = vset.pattern.permute.xlu0 1
  %6336 = vperm.xlu0 %6335, %v5268
  %v6337 = vpop.permute.xlu0 %6336
  %6340 = vset.pattern.permute.xlu0 1
  %6341 = vperm.xlu0 %6340, %v5269
  %v6342 = vpop.permute.xlu0 %6341
  %6345 = vset.pattern.permute.xlu0 1
  %6346 = vperm.xlu0 %6345, %v5270
  %v6347 = vpop.permute.xlu0 %6346
  %6350 = vset.pattern.permute.xlu0 1
  %6351 = vperm.xlu0 %6350, %v5271
  %v6352 = vpop.permute.xlu0 %6351
  %6355 = vset.pattern.permute.xlu0 1
  %6356 = vperm.xlu0 %6355, %v5272
  %v6357 = vpop.permute.xlu0 %6356
  %6360 = vset.pattern.permute.xlu0 1
  %6361 = vperm.xlu0 %6360, %v5273
  %v6362 = vpop.permute.xlu0 %6361
  %6365 = vset.pattern.permute.xlu0 1
  %6366 = vperm.xlu0 %6365, %v5274
  %v6367 = vpop.permute.xlu0 %6366
  %6370 = vset.pattern.permute.xlu0 1
  %6371 = vperm.xlu0 %6370, %v5275
  %v6372 = vpop.permute.xlu0 %6371
  %6375 = vset.pattern.permute.xlu0 1
  %6376 = vperm.xlu0 %6375, %v5276
  %v6377 = vpop.permute.xlu0 %6376
  %6380 = vset.pattern.permute.xlu0 1
  %6381 = vperm.xlu0 %6380, %v5277
  %v6382 = vpop.permute.xlu0 %6381
  %6385 = vset.pattern.permute.xlu0 1
  %6386 = vperm.xlu0 %6385, %v5278
  %v6387 = vpop.permute.xlu0 %6386
  %6390 = vset.pattern.permute.xlu0 1
  %6391 = vperm.xlu0 %6390, %v5279
  %v6392 = vpop.permute.xlu0 %6391
  %6395 = vset.pattern.permute.xlu0 1
  %6396 = vperm.xlu0 %6395, %v5280
  %v6397 = vpop.permute.xlu0 %6396
  %6400 = vset.pattern.permute.xlu0 1
  %6401 = vperm.xlu0 %6400, %v5281
  %v6402 = vpop.permute.xlu0 %6401
  %6405 = vset.pattern.permute.xlu0 1
  %6406 = vperm.xlu0 %6405, %v5282
  %v6407 = vpop.permute.xlu0 %6406
  %6410 = vset.pattern.permute.xlu0 1
  %6411 = vperm.xlu0 %6410, %v5283
  %v6412 = vpop.permute.xlu0 %6411
  %6415 = vset.pattern.permute.xlu0 1
  %6416 = vperm.xlu0 %6415, %v5284
  %v6417 = vpop.permute.xlu0 %6416
  %6420 = vset.pattern.permute.xlu0 1
  %6421 = vperm.xlu0 %6420, %v5285
  %v6422 = vpop.permute.xlu0 %6421
  %6425 = vset.pattern.permute.xlu0 1
  %6426 = vperm.xlu0 %6425, %v5286
  %v6427 = vpop.permute.xlu0 %6426
  %6430 = vset.pattern.permute.xlu0 1
  %6431 = vperm.xlu0 %6430, %v5287
  %v6432 = vpop.permute.xlu0 %6431
  %6435 = vset.pattern.permute.xlu0 1
  %6436 = vperm.xlu0 %6435, %v5288
  %v6437 = vpop.permute.xlu0 %6436
  %6440 = vset.pattern.permute.xlu0 1
  %6441 = vperm.xlu0 %6440, %v5289
  %v6442 = vpop.permute.xlu0 %6441
  %6445 = vset.pattern.permute.xlu0 1
  %6446 = vperm.xlu0 %6445, %v5290
  %v6447 = vpop.permute.xlu0 %6446
  %6450 = vset.pattern.permute.xlu0 1
  %6451 = vperm.xlu0 %6450, %v5291
  %v6452 = vpop.permute.xlu0 %6451
  %6455 = vset.pattern.permute.xlu0 1
  %6456 = vperm.xlu0 %6455, %v5292
  %v6457 = vpop.permute.xlu0 %6456
  %6460 = vset.pattern.permute.xlu0 1
  %6461 = vperm.xlu0 %6460, %v5293
  %v6462 = vpop.permute.xlu0 %6461
  %6465 = vset.pattern.permute.xlu0 1
  %6466 = vperm.xlu0 %6465, %v5294
  %v6467 = vpop.permute.xlu0 %6466
  %6470 = vset.pattern.permute.xlu0 1
  %6471 = vperm.xlu0 %6470, %v5295
  %v6472 = vpop.permute.xlu0 %6471
  %6475 = vset.pattern.permute.xlu0 1
  %6476 = vperm.xlu0 %6475, %v5296
  %v6477 = vpop.permute.xlu0 %6476
  %6480 = vset.pattern.permute.xlu0 1
  %6481 = vperm.xlu0 %6480, %v5297
  %v6482 = vpop.permute.xlu0 %6481
  %6485 = vset.pattern.permute.xlu0 1
  %6486 = vperm.xlu0 %6485, %v5298
  %v6487 = vpop.permute.xlu0 %6486
  %6490 = vset.pattern.permute.xlu0 1
  %6491 = vperm.xlu0 %6490, %v5299
  %v6492 = vpop.permute.xlu0 %6491
  %6495 = vset.pattern.permute.xlu0 1
  %6496 = vperm.xlu0 %6495, %v5300
  %v6497 = vpop.permute.xlu0 %6496
  %6500 = vset.pattern.permute.xlu0 1
  %6501 = vperm.xlu0 %6500, %v5301
  %v6502 = vpop.permute.xlu0 %6501
  %6505 = vset.pattern.permute.xlu0 1
  %6506 = vperm.xlu0 %6505, %v5302
  %v6507 = vpop.permute.xlu0 %6506
  %6510 = vset.pattern.permute.xlu0 1
  %6511 = vperm.xlu0 %6510, %v5303
  %v6512 = vpop.permute.xlu0 %6511
  %6515 = vset.pattern.permute.xlu0 1
  %6516 = vperm.xlu0 %6515, %v5304
  %v6517 = vpop.permute.xlu0 %6516
  %6520 = vset.pattern.permute.xlu0 1
  %6521 = vperm.xlu0 %6520, %v5305
  %v6522 = vpop.permute.xlu0 %6521
  %6525 = vset.pattern.permute.xlu0 1
  %6526 = vperm.xlu0 %6525, %v5306
  %v6527 = vpop.permute.xlu0 %6526
  %6530 = vset.pattern.permute.xlu0 1
  %6531 = vperm.xlu0 %6530, %v5307
  %v6532 = vpop.permute.xlu0 %6531
  %6535 = vset.pattern.permute.xlu0 1
  %6536 = vperm.xlu0 %6535, %v5308
  %v6537 = vpop.permute.xlu0 %6536
  %6540 = vset.pattern.permute.xlu0 1
  %6541 = vperm.xlu0 %6540, %v5309
  %v6542 = vpop.permute.xlu0 %6541
  %6545 = vset.pattern.permute.xlu0 1
  %6546 = vperm.xlu0 %6545, %v5310
  %v6547 = vpop.permute.xlu0 %6546
  %6550 = vset.pattern.permute.xlu0 1
  %6551 = vperm.xlu0 %6550, %v5311
  %v6552 = vpop.permute.xlu0 %6551
  %6555 = vset.pattern.permute.xlu0 1
  %6556 = vperm.xlu0 %6555, %v5312
  %v6557 = vpop.permute.xlu0 %6556
  %6560 = vset.pattern.permute.xlu0 1
  %6561 = vperm.xlu0 %6560, %v5313
  %v6562 = vpop.permute.xlu0 %6561
  %6565 = vset.pattern.permute.xlu0 1
  %6566 = vperm.xlu0 %6565, %v5314
  %v6567 = vpop.permute.xlu0 %6566
  %6570 = vset.pattern.permute.xlu0 1
  %6571 = vperm.xlu0 %6570, %v5315
  %v6572 = vpop.permute.xlu0 %6571
  %6575 = vset.pattern.permute.xlu0 1
  %6576 = vperm.xlu0 %6575, %v5316
  %v6577 = vpop.permute.xlu0 %6576
  %6580 = vset.pattern.permute.xlu0 1
  %6581 = vperm.xlu0 %6580, %v5317
  %v6582 = vpop.permute.xlu0 %6581
  %6585 = vset.pattern.permute.xlu0 1
  %6586 = vperm.xlu0 %6585, %v5318
  %v6587 = vpop.permute.xlu0 %6586
  %6590 = vset.pattern.permute.xlu0 1
  %6591 = vperm.xlu0 %6590, %v5319
  %v6592 = vpop.permute.xlu0 %6591
  %6595 = vset.pattern.permute.xlu0 1
  %6596 = vperm.xlu0 %6595, %v5320
  %v6597 = vpop.permute.xlu0 %6596
  %6600 = vset.pattern.permute.xlu0 1
  %6601 = vperm.xlu0 %6600, %v5321
  %v6602 = vpop.permute.xlu0 %6601
  %6605 = vset.pattern.permute.xlu0 1
  %6606 = vperm.xlu0 %6605, %v5322
  %v6607 = vpop.permute.xlu0 %6606
  %6610 = vset.pattern.permute.xlu0 1
  %6611 = vperm.xlu0 %6610, %v5323
  %v6612 = vpop.permute.xlu0 %6611
  %6615 = vset.pattern.permute.xlu0 1
  %6616 = vperm.xlu0 %6615, %v5324
  %v6617 = vpop.permute.xlu0 %6616
  %6620 = vset.pattern.permute.xlu0 1
  %6621 = vperm.xlu0 %6620, %v5325
  %v6622 = vpop.permute.xlu0 %6621
  %6625 = vset.pattern.permute.xlu0 1
  %6626 = vperm.xlu0 %6625, %v5326
  %v6627 = vpop.permute.xlu0 %6626
  %6630 = vset.pattern.permute.xlu0 1
  %6631 = vperm.xlu0 %6630, %v5327
  %v6632 = vpop.permute.xlu0 %6631
  %6635 = vset.pattern.permute.xlu0 1
  %6636 = vperm.xlu0 %6635, %v5328
  %v6637 = vpop.permute.xlu0 %6636
  %6640 = vset.pattern.permute.xlu0 1
  %6641 = vperm.xlu0 %6640, %v5329
  %v6642 = vpop.permute.xlu0 %6641
  %6645 = vset.pattern.permute.xlu0 1
  %6646 = vperm.xlu0 %6645, %v5330
  %v6647 = vpop.permute.xlu0 %6646
  %6650 = vset.pattern.permute.xlu0 1
  %6651 = vperm.xlu0 %6650, %v5331
  %v6652 = vpop.permute.xlu0 %6651
  %6655 = vset.pattern.permute.xlu0 1
  %6656 = vperm.xlu0 %6655, %v5332
  %v6657 = vpop.permute.xlu0 %6656
  %6660 = vset.pattern.permute.xlu0 1
  %6661 = vperm.xlu0 %6660, %v5333
  %v6662 = vpop.permute.xlu0 %6661
  %6665 = vset.pattern.permute.xlu0 1
  %6666 = vperm.xlu0 %6665, %v5334
  %v6667 = vpop.permute.xlu0 %6666
  %6670 = vset.pattern.permute.xlu0 1
  %6671 = vperm.xlu0 %6670, %v5335
  %v6672 = vpop.permute.xlu0 %6671
  %6675 = vset.pattern.permute.xlu0 1
  %6676 = vperm.xlu0 %6675, %v5336
  %v6677 = vpop.permute.xlu0 %6676
  %6680 = vset.pattern.permute.xlu0 1
  %6681 = vperm.xlu0 %6680, %v5337
  %v6682 = vpop.permute.xlu0 %6681
  %6685 = vset.pattern.permute.xlu0 1
  %6686 = vperm.xlu0 %6685, %v5338
  %v6687 = vpop.permute.xlu0 %6686
  %v6689 = vadd.f32 %v6059, %v6242
  %v6690 = vadd.f32 %v6060, %v6242
  %v6691 = vadd.f32 %v6061, %v6247
  %v6692 = vadd.f32 %v6062, %v6247
  %v6693 = vadd.f32 %v6063, %v6252
  %v6694 = vadd.f32 %v6064, %v6252
  %v6695 = vadd.f32 %v6065, %v6257
  %v6696 = vadd.f32 %v6066, %v6257
  %v6697 = vadd.f32 %v6067, %v6262
  %v6698 = vadd.f32 %v6068, %v6262
  %v6699 = vadd.f32 %v6069, %v6267
  %v6700 = vadd.f32 %v6070, %v6267
  %v6701 = vadd.f32 %v6071, %v6272
  %v6702 = vadd.f32 %v6072, %v6272
  %v6703 = vadd.f32 %v6073, %v6277
  %v6704 = vadd.f32 %v6074, %v6277
  %v6705 = vadd.f32 %v6075, %v6282
  %v6706 = vadd.f32 %v6076, %v6282
  %v6707 = vadd.f32 %v6077, %v6287
  %v6708 = vadd.f32 %v6078, %v6287
  %v6709 = vadd.f32 %v6079, %v6292
  %v6710 = vadd.f32 %v6080, %v6292
  %v6711 = vadd.f32 %v6081, %v6297
  %v6712 = vadd.f32 %v6082, %v6297
  %v6713 = vadd.f32 %v6083, %v6302
  %v6714 = vadd.f32 %v6084, %v6302
  %v6715 = vadd.f32 %v6085, %v6307
  %v6716 = vadd.f32 %v6086, %v6307
  %v6717 = vadd.f32 %v6087, %v6312
  %v6718 = vadd.f32 %v6088, %v6312
  %v6719 = vadd.f32 %v6089, %v6317
  %v6720 = vadd.f32 %v6090, %v6317
  %v6721 = vadd.f32 %v6091, %v6322
  %v6722 = vadd.f32 %v6092, %v6322
  %v6723 = vadd.f32 %v6093, %v6327
  %v6724 = vadd.f32 %v6094, %v6327
  %v6725 = vadd.f32 %v6095, %v6332
  %v6726 = vadd.f32 %v6096, %v6332
  %v6727 = vadd.f32 %v6097, %v6337
  %v6728 = vadd.f32 %v6098, %v6337
  %v6729 = vadd.f32 %v6099, %v6342
  %v6730 = vadd.f32 %v6100, %v6342
  %v6731 = vadd.f32 %v6101, %v6347
  %v6732 = vadd.f32 %v6102, %v6347
  %v6733 = vadd.f32 %v6103, %v6352
  %v6734 = vadd.f32 %v6104, %v6352
  %v6735 = vadd.f32 %v6105, %v6357
  %v6736 = vadd.f32 %v6106, %v6357
  %v6737 = vadd.f32 %v6107, %v6362
  %v6738 = vadd.f32 %v6108, %v6362
  %v6739 = vadd.f32 %v6109, %v6367
  %v6740 = vadd.f32 %v6110, %v6367
  %v6741 = vadd.f32 %v6111, %v6372
  %v6742 = vadd.f32 %v6112, %v6372
  %v6743 = vadd.f32 %v6113, %v6377
  %v6744 = vadd.f32 %v6114, %v6377
  %v6745 = vadd.f32 %v6115, %v6382
  %v6746 = vadd.f32 %v6116, %v6382
  %v6747 = vadd.f32 %v6117, %v6387
  %v6748 = vadd.f32 %v6118, %v6387
  %v6749 = vadd.f32 %v6119, %v6392
  %v6750 = vadd.f32 %v6120, %v6392
  %v6751 = vadd.f32 %v6121, %v6397
  %v6752 = vadd.f32 %v6122, %v6397
  %v6753 = vadd.f32 %v6123, %v6402
  %v6754 = vadd.f32 %v6124, %v6402
  %v6755 = vadd.f32 %v6125, %v6407
  %v6756 = vadd.f32 %v6126, %v6407
  %v6757 = vadd.f32 %v6127, %v6412
  %v6758 = vadd.f32 %v6128, %v6412
  %v6759 = vadd.f32 %v6129, %v6417
  %v6760 = vadd.f32 %v6130, %v6417
  %v6761 = vadd.f32 %v6131, %v6422
  %v6762 = vadd.f32 %v6132, %v6422
  %v6763 = vadd.f32 %v6133, %v6427
  %v6764 = vadd.f32 %v6134, %v6427
  %v6765 = vadd.f32 %v6135, %v6432
  %v6766 = vadd.f32 %v6136, %v6432
  %v6767 = vadd.f32 %v6137, %v6437
  %v6768 = vadd.f32 %v6138, %v6437
  %v6769 = vadd.f32 %v6139, %v6442
  %v6770 = vadd.f32 %v6140, %v6442
  %v6771 = vadd.f32 %v6141, %v6447
  %v6772 = vadd.f32 %v6142, %v6447
  %v6773 = vadd.f32 %v6143, %v6452
  %v6774 = vadd.f32 %v6144, %v6452
  %v6775 = vadd.f32 %v6145, %v6457
  %v6776 = vadd.f32 %v6146, %v6457
  %v6777 = vadd.f32 %v6147, %v6462
  %v6778 = vadd.f32 %v6148, %v6462
  %v6779 = vadd.f32 %v6149, %v6467
  %v6780 = vadd.f32 %v6150, %v6467
  %v6781 = vadd.f32 %v6151, %v6472
  %v6782 = vadd.f32 %v6152, %v6472
  %v6783 = vadd.f32 %v6153, %v6477
  %v6784 = vadd.f32 %v6154, %v6477
  %v6785 = vadd.f32 %v6155, %v6482
  %v6786 = vadd.f32 %v6156, %v6482
  %v6787 = vadd.f32 %v6157, %v6487
  %v6788 = vadd.f32 %v6158, %v6487
  %v6789 = vadd.f32 %v6159, %v6492
  %v6790 = vadd.f32 %v6160, %v6492
  %v6791 = vadd.f32 %v6161, %v6497
  %v6792 = vadd.f32 %v6162, %v6497
  %v6793 = vadd.f32 %v6163, %v6502
  %v6794 = vadd.f32 %v6164, %v6502
  %v6795 = vadd.f32 %v6165, %v6507
  %v6796 = vadd.f32 %v6166, %v6507
  %v6797 = vadd.f32 %v6167, %v6512
  %v6798 = vadd.f32 %v6168, %v6512
  %v6799 = vadd.f32 %v6169, %v6517
  %v6800 = vadd.f32 %v6170, %v6517
  %v6801 = vadd.f32 %v6171, %v6522
  %v6802 = vadd.f32 %v6172, %v6522
  %v6803 = vadd.f32 %v6173, %v6527
  %v6804 = vadd.f32 %v6174, %v6527
  %v6805 = vadd.f32 %v6175, %v6532
  %v6806 = vadd.f32 %v6176, %v6532
  %v6807 = vadd.f32 %v6177, %v6537
  %v6808 = vadd.f32 %v6178, %v6537
  %v6809 = vadd.f32 %v6179, %v6542
  %v6810 = vadd.f32 %v6180, %v6542
  %v6811 = vadd.f32 %v6181, %v6547
  %v6812 = vadd.f32 %v6182, %v6547
  %v6813 = vadd.f32 %v6183, %v6552
  %v6814 = vadd.f32 %v6184, %v6552
  %v6815 = vadd.f32 %v6185, %v6557
  %v6816 = vadd.f32 %v6186, %v6557
  %v6817 = vadd.f32 %v6187, %v6562
  %v6818 = vadd.f32 %v6188, %v6562
  %v6819 = vadd.f32 %v6189, %v6567
  %v6820 = vadd.f32 %v6190, %v6567
  %v6821 = vadd.f32 %v6191, %v6572
  %v6822 = vadd.f32 %v6192, %v6572
  %v6823 = vadd.f32 %v6193, %v6577
  %v6824 = vadd.f32 %v6194, %v6577
  %v6825 = vadd.f32 %v6195, %v6582
  %v6826 = vadd.f32 %v6196, %v6582
  %v6827 = vadd.f32 %v6197, %v6587
  %v6828 = vadd.f32 %v6198, %v6587
  %v6829 = vadd.f32 %v6199, %v6592
  %v6830 = vadd.f32 %v6200, %v6592
  %v6831 = vadd.f32 %v6201, %v6597
  %v6832 = vadd.f32 %v6202, %v6597
  %v6833 = vadd.f32 %v6203, %v6602
  %v6834 = vadd.f32 %v6204, %v6602
  %v6835 = vadd.f32 %v6205, %v6607
  %v6836 = vadd.f32 %v6206, %v6607
  %v6837 = vadd.f32 %v6207, %v6612
  %v6838 = vadd.f32 %v6208, %v6612
  %v6839 = vadd.f32 %v6209, %v6617
  %v6840 = vadd.f32 %v6210, %v6617
  %v6841 = vadd.f32 %v6211, %v6622
  %v6842 = vadd.f32 %v6212, %v6622
  %v6843 = vadd.f32 %v6213, %v6627
  %v6844 = vadd.f32 %v6214, %v6627
  %v6845 = vadd.f32 %v6215, %v6632
  %v6846 = vadd.f32 %v6216, %v6632
  %v6847 = vadd.f32 %v6217, %v6637
  %v6848 = vadd.f32 %v6218, %v6637
  %v6849 = vadd.f32 %v6219, %v6642
  %v6850 = vadd.f32 %v6220, %v6642
  %v6851 = vadd.f32 %v6221, %v6647
  %v6852 = vadd.f32 %v6222, %v6647
  %v6853 = vadd.f32 %v6223, %v6652
  %v6854 = vadd.f32 %v6224, %v6652
  %v6855 = vadd.f32 %v6225, %v6657
  %v6856 = vadd.f32 %v6226, %v6657
  %v6857 = vadd.f32 %v6227, %v6662
  %v6858 = vadd.f32 %v6228, %v6662
  %v6859 = vadd.f32 %v6229, %v6667
  %v6860 = vadd.f32 %v6230, %v6667
  %v6861 = vadd.f32 %v6231, %v6672
  %v6862 = vadd.f32 %v6232, %v6672
  %v6863 = vadd.f32 %v6233, %v6677
  %v6864 = vadd.f32 %v6234, %v6677
  %v6865 = vadd.f32 %v6235, %v6682
  %v6866 = vadd.f32 %v6236, %v6682
  %v6867 = vadd.f32 %v6237, %v6687
  %v6868 = vadd.f32 %v6238, %v6687
  %6869 = vst [vmem:[%s4] sm:$0xff] %v6689
  %6870 = vst.msk [vmem:[%s4 + $0x8] sm:$0xff] %vm3988, %v6690
  %6871 = vst [vmem:[%s4 + $0x10] sm:$0xff] %v6691
  %6872 = vst.msk [vmem:[%s4 + $0x18] sm:$0xff] %vm3988, %v6692
  %6873 = vst [vmem:[%s4 + $0x20] sm:$0xff] %v6693
  %6874 = vst.msk [vmem:[%s4 + $0x28] sm:$0xff] %vm3988, %v6694
  %6875 = vst [vmem:[%s4 + $0x30] sm:$0xff] %v6695
  %6876 = vst.msk [vmem:[%s4 + $0x38] sm:$0xff] %vm3988, %v6696
  %6877 = vst [vmem:[%s4 + $0x40] sm:$0xff] %v6697
  %6878 = vst.msk [vmem:[%s4 + $0x48] sm:$0xff] %vm3988, %v6698
  %6879 = vst [vmem:[%s4 + $0x50] sm:$0xff] %v6699
  %6880 = vst.msk [vmem:[%s4 + $0x58] sm:$0xff] %vm3988, %v6700
  %6881 = vst [vmem:[%s4 + $0x60] sm:$0xff] %v6701
  %6882 = vst.msk [vmem:[%s4 + $0x68] sm:$0xff] %vm3988, %v6702
  %6883 = vst [vmem:[%s4 + $0x70] sm:$0xff] %v6703
  %6884 = vst.msk [vmem:[%s4 + $0x78] sm:$0xff] %vm3988, %v6704
  %6885 = vst [vmem:[%s4 + $0x80] sm:$0xff] %v6705
  %6886 = vst.msk [vmem:[%s4 + $0x88] sm:$0xff] %vm3988, %v6706
  %6887 = vst [vmem:[%s4 + $0x90] sm:$0xff] %v6707
  %6888 = vst.msk [vmem:[%s4 + $0x98] sm:$0xff] %vm3988, %v6708
  %6889 = vst [vmem:[%s4 + $0xa0] sm:$0xff] %v6709
  %6890 = vst.msk [vmem:[%s4 + $0xa8] sm:$0xff] %vm3988, %v6710
  %6891 = vst [vmem:[%s4 + $0xb0] sm:$0xff] %v6711
  %6892 = vst.msk [vmem:[%s4 + $0xb8] sm:$0xff] %vm3988, %v6712
  %6893 = vst [vmem:[%s4 + $0xc0] sm:$0xff] %v6713
  %6894 = vst.msk [vmem:[%s4 + $0xc8] sm:$0xff] %vm3988, %v6714
  %6895 = vst [vmem:[%s4 + $0xd0] sm:$0xff] %v6715
  %6896 = vst.msk [vmem:[%s4 + $0xd8] sm:$0xff] %vm3988, %v6716
  %6897 = vst [vmem:[%s4 + $0xe0] sm:$0xff] %v6717
  %6898 = vst.msk [vmem:[%s4 + $0xe8] sm:$0xff] %vm3988, %v6718
  %6899 = vst [vmem:[%s4 + $0xf0] sm:$0xff] %v6719
  %6900 = vst.msk [vmem:[%s4 + $0xf8] sm:$0xff] %vm3988, %v6720
  %6901 = vst [vmem:[%s4 + $0x100] sm:$0xff] %v6721
  %6902 = vst.msk [vmem:[%s4 + $0x108] sm:$0xff] %vm3988, %v6722
  %6903 = vst [vmem:[%s4 + $0x110] sm:$0xff] %v6723
  %6904 = vst.msk [vmem:[%s4 + $0x118] sm:$0xff] %vm3988, %v6724
  %6905 = vst [vmem:[%s4 + $0x120] sm:$0xff] %v6725
  %6906 = vst.msk [vmem:[%s4 + $0x128] sm:$0xff] %vm3988, %v6726
  %6907 = vst [vmem:[%s4 + $0x130] sm:$0xff] %v6727
  %6908 = vst.msk [vmem:[%s4 + $0x138] sm:$0xff] %vm3988, %v6728
  %6909 = vst [vmem:[%s4 + $0x140] sm:$0xff] %v6729
  %6910 = vst.msk [vmem:[%s4 + $0x148] sm:$0xff] %vm3988, %v6730
  %6911 = vst [vmem:[%s4 + $0x150] sm:$0xff] %v6731
  %6912 = vst.msk [vmem:[%s4 + $0x158] sm:$0xff] %vm3988, %v6732
  %6913 = vst [vmem:[%s4 + $0x160] sm:$0xff] %v6733
  %6914 = vst.msk [vmem:[%s4 + $0x168] sm:$0xff] %vm3988, %v6734
  %6915 = vst [vmem:[%s4 + $0x170] sm:$0xff] %v6735
  %6916 = vst.msk [vmem:[%s4 + $0x178] sm:$0xff] %vm3988, %v6736
  %6917 = vst [vmem:[%s4 + $0x180] sm:$0xff] %v6737
  %6918 = vst.msk [vmem:[%s4 + $0x188] sm:$0xff] %vm3988, %v6738
  %6919 = vst [vmem:[%s4 + $0x190] sm:$0xff] %v6739
  %6920 = vst.msk [vmem:[%s4 + $0x198] sm:$0xff] %vm3988, %v6740
  %6921 = vst [vmem:[%s4 + $0x1a0] sm:$0xff] %v6741
  %6922 = vst.msk [vmem:[%s4 + $0x1a8] sm:$0xff] %vm3988, %v6742
  %6923 = vst [vmem:[%s4 + $0x1b0] sm:$0xff] %v6743
  %6924 = vst.msk [vmem:[%s4 + $0x1b8] sm:$0xff] %vm3988, %v6744
  %6925 = vst [vmem:[%s4 + $0x1c0] sm:$0xff] %v6745
  %6926 = vst.msk [vmem:[%s4 + $0x1c8] sm:$0xff] %vm3988, %v6746
  %6927 = vst [vmem:[%s4 + $0x1d0] sm:$0xff] %v6747
  %6928 = vst.msk [vmem:[%s4 + $0x1d8] sm:$0xff] %vm3988, %v6748
  %6929 = vst [vmem:[%s4 + $0x1e0] sm:$0xff] %v6749
  %6930 = vst.msk [vmem:[%s4 + $0x1e8] sm:$0xff] %vm3988, %v6750
  %6931 = vst [vmem:[%s4 + $0x1f0] sm:$0xff] %v6751
  %6932 = vst.msk [vmem:[%s4 + $0x1f8] sm:$0xff] %vm3988, %v6752
  %6933 = vst [vmem:[%s4 + $0x200] sm:$0xff] %v6753
  %6934 = vst.msk [vmem:[%s4 + $0x208] sm:$0xff] %vm3988, %v6754
  %6935 = vst [vmem:[%s4 + $0x210] sm:$0xff] %v6755
  %6936 = vst.msk [vmem:[%s4 + $0x218] sm:$0xff] %vm3988, %v6756
  %6937 = vst [vmem:[%s4 + $0x220] sm:$0xff] %v6757
  %6938 = vst.msk [vmem:[%s4 + $0x228] sm:$0xff] %vm3988, %v6758
  %6939 = vst [vmem:[%s4 + $0x230] sm:$0xff] %v6759
  %6940 = vst.msk [vmem:[%s4 + $0x238] sm:$0xff] %vm3988, %v6760
  %6941 = vst [vmem:[%s4 + $0x240] sm:$0xff] %v6761
  %6942 = vst.msk [vmem:[%s4 + $0x248] sm:$0xff] %vm3988, %v6762
  %6943 = vst [vmem:[%s4 + $0x250] sm:$0xff] %v6763
  %6944 = vst.msk [vmem:[%s4 + $0x258] sm:$0xff] %vm3988, %v6764
  %6945 = vst [vmem:[%s4 + $0x260] sm:$0xff] %v6765
  %6946 = vst.msk [vmem:[%s4 + $0x268] sm:$0xff] %vm3988, %v6766
  %6947 = vst [vmem:[%s4 + $0x270] sm:$0xff] %v6767
  %6948 = vst.msk [vmem:[%s4 + $0x278] sm:$0xff] %vm3988, %v6768
  %6949 = vst [vmem:[%s4 + $0x280] sm:$0xff] %v6769
  %6950 = vst.msk [vmem:[%s4 + $0x288] sm:$0xff] %vm3988, %v6770
  %6951 = vst [vmem:[%s4 + $0x290] sm:$0xff] %v6771
  %6952 = vst.msk [vmem:[%s4 + $0x298] sm:$0xff] %vm3988, %v6772
  %6953 = vst [vmem:[%s4 + $0x2a0] sm:$0xff] %v6773
  %6954 = vst.msk [vmem:[%s4 + $0x2a8] sm:$0xff] %vm3988, %v6774
  %6955 = vst [vmem:[%s4 + $0x2b0] sm:$0xff] %v6775
  %6956 = vst.msk [vmem:[%s4 + $0x2b8] sm:$0xff] %vm3988, %v6776
  %6957 = vst [vmem:[%s4 + $0x2c0] sm:$0xff] %v6777
  %6958 = vst.msk [vmem:[%s4 + $0x2c8] sm:$0xff] %vm3988, %v6778
  %6959 = vst [vmem:[%s4 + $0x2d0] sm:$0xff] %v6779
  %6960 = vst.msk [vmem:[%s4 + $0x2d8] sm:$0xff] %vm3988, %v6780
  %6961 = vst [vmem:[%s4 + $0x2e0] sm:$0xff] %v6781
  %6962 = vst.msk [vmem:[%s4 + $0x2e8] sm:$0xff] %vm3988, %v6782
  %6963 = vst [vmem:[%s4 + $0x2f0] sm:$0xff] %v6783
  %6964 = vst.msk [vmem:[%s4 + $0x2f8] sm:$0xff] %vm3988, %v6784
  %6965 = vst [vmem:[%s4 + $0x300] sm:$0xff] %v6785
  %6966 = vst.msk [vmem:[%s4 + $0x308] sm:$0xff] %vm3988, %v6786
  %6967 = vst [vmem:[%s4 + $0x310] sm:$0xff] %v6787
  %6968 = vst.msk [vmem:[%s4 + $0x318] sm:$0xff] %vm3988, %v6788
  %6969 = vst [vmem:[%s4 + $0x320] sm:$0xff] %v6789
  %6970 = vst.msk [vmem:[%s4 + $0x328] sm:$0xff] %vm3988, %v6790
  %6971 = vst [vmem:[%s4 + $0x330] sm:$0xff] %v6791
  %6972 = vst.msk [vmem:[%s4 + $0x338] sm:$0xff] %vm3988, %v6792
  %6973 = vst [vmem:[%s4 + $0x340] sm:$0xff] %v6793
  %6974 = vst.msk [vmem:[%s4 + $0x348] sm:$0xff] %vm3988, %v6794
  %6975 = vst [vmem:[%s4 + $0x350] sm:$0xff] %v6795
  %6976 = vst.msk [vmem:[%s4 + $0x358] sm:$0xff] %vm3988, %v6796
  %6977 = vst [vmem:[%s4 + $0x360] sm:$0xff] %v6797
  %6978 = vst.msk [vmem:[%s4 + $0x368] sm:$0xff] %vm3988, %v6798
  %6979 = vst [vmem:[%s4 + $0x370] sm:$0xff] %v6799
  %6980 = vst.msk [vmem:[%s4 + $0x378] sm:$0xff] %vm3988, %v6800
  %6981 = vst [vmem:[%s4 + $0x380] sm:$0xff] %v6801
  %6982 = vst.msk [vmem:[%s4 + $0x388] sm:$0xff] %vm3988, %v6802
  %6983 = vst [vmem:[%s4 + $0x390] sm:$0xff] %v6803
  %6984 = vst.msk [vmem:[%s4 + $0x398] sm:$0xff] %vm3988, %v6804
  %6985 = vst [vmem:[%s4 + $0x3a0] sm:$0xff] %v6805
  %6986 = vst.msk [vmem:[%s4 + $0x3a8] sm:$0xff] %vm3988, %v6806
  %6987 = vst [vmem:[%s4 + $0x3b0] sm:$0xff] %v6807
  %6988 = vst.msk [vmem:[%s4 + $0x3b8] sm:$0xff] %vm3988, %v6808
  %6989 = vst [vmem:[%s4 + $0x3c0] sm:$0xff] %v6809
  %6990 = vst.msk [vmem:[%s4 + $0x3c8] sm:$0xff] %vm3988, %v6810
  %6991 = vst [vmem:[%s4 + $0x3d0] sm:$0xff] %v6811
  %6992 = vst.msk [vmem:[%s4 + $0x3d8] sm:$0xff] %vm3988, %v6812
  %6993 = vst [vmem:[%s4 + $0x3e0] sm:$0xff] %v6813
  %6994 = vst.msk [vmem:[%s4 + $0x3e8] sm:$0xff] %vm3988, %v6814
  %6995 = vst [vmem:[%s4 + $0x3f0] sm:$0xff] %v6815
  %6996 = vst.msk [vmem:[%s4 + $0x3f8] sm:$0xff] %vm3988, %v6816
  %6997 = vst [vmem:[%s4 + $0x400] sm:$0xff] %v6817
  %6998 = vst.msk [vmem:[%s4 + $0x408] sm:$0xff] %vm3988, %v6818
  %6999 = vst [vmem:[%s4 + $0x410] sm:$0xff] %v6819
  %7000 = vst.msk [vmem:[%s4 + $0x418] sm:$0xff] %vm3988, %v6820
  %7001 = vst [vmem:[%s4 + $0x420] sm:$0xff] %v6821
  %7002 = vst.msk [vmem:[%s4 + $0x428] sm:$0xff] %vm3988, %v6822
  %7003 = vst [vmem:[%s4 + $0x430] sm:$0xff] %v6823
  %7004 = vst.msk [vmem:[%s4 + $0x438] sm:$0xff] %vm3988, %v6824
  %7005 = vst [vmem:[%s4 + $0x440] sm:$0xff] %v6825
  %7006 = vst.msk [vmem:[%s4 + $0x448] sm:$0xff] %vm3988, %v6826
  %7007 = vst [vmem:[%s4 + $0x450] sm:$0xff] %v6827
  %7008 = vst.msk [vmem:[%s4 + $0x458] sm:$0xff] %vm3988, %v6828
  %7009 = vst [vmem:[%s4 + $0x460] sm:$0xff] %v6829
  %7010 = vst.msk [vmem:[%s4 + $0x468] sm:$0xff] %vm3988, %v6830
  %7011 = vst [vmem:[%s4 + $0x470] sm:$0xff] %v6831
  %7012 = vst.msk [vmem:[%s4 + $0x478] sm:$0xff] %vm3988, %v6832
  %7013 = vst [vmem:[%s4 + $0x480] sm:$0xff] %v6833
  %7014 = vst.msk [vmem:[%s4 + $0x488] sm:$0xff] %vm3988, %v6834
  %7015 = vst [vmem:[%s4 + $0x490] sm:$0xff] %v6835
  %7016 = vst.msk [vmem:[%s4 + $0x498] sm:$0xff] %vm3988, %v6836
  %7017 = vst [vmem:[%s4 + $0x4a0] sm:$0xff] %v6837
  %7018 = vst.msk [vmem:[%s4 + $0x4a8] sm:$0xff] %vm3988, %v6838
  %7019 = vst [vmem:[%s4 + $0x4b0] sm:$0xff] %v6839
  %7020 = vst.msk [vmem:[%s4 + $0x4b8] sm:$0xff] %vm3988, %v6840
  %7021 = vst [vmem:[%s4 + $0x4c0] sm:$0xff] %v6841
  %7022 = vst.msk [vmem:[%s4 + $0x4c8] sm:$0xff] %vm3988, %v6842
  %7023 = vst [vmem:[%s4 + $0x4d0] sm:$0xff] %v6843
  %7024 = vst.msk [vmem:[%s4 + $0x4d8] sm:$0xff] %vm3988, %v6844
  %7025 = vst [vmem:[%s4 + $0x4e0] sm:$0xff] %v6845
  %7026 = vst.msk [vmem:[%s4 + $0x4e8] sm:$0xff] %vm3988, %v6846
  %7027 = vst [vmem:[%s4 + $0x4f0] sm:$0xff] %v6847
  %7028 = vst.msk [vmem:[%s4 + $0x4f8] sm:$0xff] %vm3988, %v6848
  %7029 = vst [vmem:[%s4 + $0x500] sm:$0xff] %v6849
  %7030 = vst.msk [vmem:[%s4 + $0x508] sm:$0xff] %vm3988, %v6850
  %7031 = vst [vmem:[%s4 + $0x510] sm:$0xff] %v6851
  %7032 = vst.msk [vmem:[%s4 + $0x518] sm:$0xff] %vm3988, %v6852
  %7033 = vst [vmem:[%s4 + $0x520] sm:$0xff] %v6853
  %7034 = vst.msk [vmem:[%s4 + $0x528] sm:$0xff] %vm3988, %v6854
  %7035 = vst [vmem:[%s4 + $0x530] sm:$0xff] %v6855
  %7036 = vst.msk [vmem:[%s4 + $0x538] sm:$0xff] %vm3988, %v6856
  %7037 = vst [vmem:[%s4 + $0x540] sm:$0xff] %v6857
  %7038 = vst.msk [vmem:[%s4 + $0x548] sm:$0xff] %vm3988, %v6858
  %7039 = vst [vmem:[%s4 + $0x550] sm:$0xff] %v6859
  %7040 = vst.msk [vmem:[%s4 + $0x558] sm:$0xff] %vm3988, %v6860
  %7041 = vst [vmem:[%s4 + $0x560] sm:$0xff] %v6861
  %7042 = vst.msk [vmem:[%s4 + $0x568] sm:$0xff] %vm3988, %v6862
  %7043 = vst [vmem:[%s4 + $0x570] sm:$0xff] %v6863
  %7044 = vst.msk [vmem:[%s4 + $0x578] sm:$0xff] %vm3988, %v6864
  %7045 = vst [vmem:[%s4 + $0x580] sm:$0xff] %v6865
  %7046 = vst.msk [vmem:[%s4 + $0x588] sm:$0xff] %vm3988, %v6866
  %7047 = vst [vmem:[%s4 + $0x590] sm:$0xff] %v6867
  %7048 = vst.msk [vmem:[%s4 + $0x598] sm:$0xff] %vm3988, %v6868
  // Predicated region
  $region18: #{_fused_impl.1} parent=0 // pred_check
    _
  $region19: #{_fused_impl.1} parent=0 // pred_check_branch
    %7050 = sbr.rel (0) target = $region21
  $region20: #{_fused_impl.1} parent=0 // pred_region
    _
  $region21: #{_fused_impl.1} parent=0 // pred_fallthru
    _
  // Predicated region
  $region22: #{_fused_impl.1} parent=0 // pred_check
    _
  $region23: #{_fused_impl.1} parent=0 // pred_check_branch
    %7052 = sbr.rel (0) target = $region25
  $region24: #{_fused_impl.1} parent=0 // pred_region
    _
  $region25: #{_fused_impl.1} parent=0 // pred_fallthru
    _

</llo_original>
